<compile_context>
chip_gen: v6e
topology: v6e:2x2x1
jax: 0.10.0
libtpu: 0.0.40
codegen_flags: <defaults>
</compile_context>

<pallas_src>
import functools

import jax
import jax.numpy as jnp
import numpy as np
from jax.experimental import pallas as pl
from jax.experimental.pallas import tpu as pltpu

HIDDEN_DIM = 128
NUM_LAYERS = 2          # hard-wired: the two stacked LSTM cells are unrolled
HEAD_WIDTH = 128        # lane-dense fused fc1/fc2 head (output_dim + 1 <= 128)


def _lstm_wavefront_kernel(x_ref, wih1_ref, b1_ref, wstep_ref, b2_ref,
                           whead_ref, bhead_ref, y_ref, xw1_ref):
    """Single-call kernel: hoisted input projection + wavefront-fused recurrence."""
    H = HIDDEN_DIM
    Bp = y_ref.shape[0]                  # padded batch (multiple of 8)
    T = x_ref.shape[0] // Bp

    # --- Hoisted layer-1 input projection (big-M matmul, off the serial path),
    #     stored to VMEM scratch so it is not a giant live SSA value. ----------
    xw1_ref[...] = (jnp.dot(x_ref[...], wih1_ref[...],
                            preferred_element_type=jnp.float32) + b1_ref[...])

    wstep = wstep_ref[...]               # (2H, 8H) bf16: [[whh1, wih2],[0, whh2]]
    whead = whead_ref[...]
    # Broadcasts hoisted out of the loop (JAX does not CSE broadcast_in_dim).
    b2 = jnp.broadcast_to(b2_ref[...], (Bp, 4 * H))
    bhead = jnp.broadcast_to(bhead_ref[...], (Bp, HEAD_WIDTH))

    def gates(pre):                      # PyTorch gate order: i, f, g, o
        i = jax.nn.sigmoid(pre[:, 0 * H:1 * H])
        f = jax.nn.sigmoid(pre[:, 1 * H:2 * H])
        g = jnp.tanh(pre[:, 2 * H:3 * H])
        o = jax.nn.sigmoid(pre[:, 3 * H:4 * H])
        return i, f, g, o

    # --- Prologue: layer-1 at t = 0 (h1_init = 0 -> recurrent half is zero). --
    i1, f1, g1g, o1 = gates(xw1_ref[0:Bp, :])
    c1 = i1 * g1g
    h1_bf = (o1 * jnp.tanh(c1)).astype(wstep.dtype)      # single bf16 cast/step

    c2 = jnp.zeros((Bp, H), jnp.float32)
    h2_bf = jnp.zeros((Bp, H), wstep.dtype)

    # --- Wavefront loop: one (Bp, 2H) x (2H, 8H) matmul per step. ------------
    # Fully-unrolled static loop (T small & fixed): no grid/loop overhead and
    # full LLO scheduler visibility; slices are 8-sublane / 128-lane aligned.
    for t in range(T):
        hcat = jnp.concatenate([h1_bf, h2_bf], axis=1)   # [h1(t) | h2(t-1)]
        g_both = jnp.dot(hcat, wstep, preferred_element_type=jnp.float32)

        # layer-2 at step t (cols 4H:8H)
        i2, f2, g2g, o2 = gates(g_both[:, 4 * H:] + b2)
        c2 = f2 * c2 + i2 * g2g
        h2_bf = (o2 * jnp.tanh(c2)).astype(wstep.dtype)

        # layer-1 at step t+1 (cols 0:4H) -- skipped after the last step
        if t < T - 1:
            g1 = xw1_ref[(t + 1) * Bp:(t + 2) * Bp, :] + g_both[:, :4 * H]
            i1, f1, g1g, o1 = gates(g1)
            c1 = f1 * c1 + i1 * g1g
            h1_bf = (o1 * jnp.tanh(c1)).astype(wstep.dtype)

    # --- Fused fc1/fc2 heads: one lane-dense (Bp,H)x(H,128) dot, unmasked
    #     (8,128) store; wrapper slices y_a / y_t. -----------------------------
    y_ref[...] = (jnp.dot(h2_bf, whead, preferred_element_type=jnp.float32)
                  + bhead)


def pack_params(params):
    """One-time parameter repacking (hoisted off the inference path).

    Builds the wavefront block weight W_step = [[whh1, wih2],[0, whh2]] and the
    fused, zero-padded lane-dense fc1/fc2 head, and casts matmul operands to
    bf16.  Weights are expected pre-transposed ((D,4H)/(H,4H), x @ W layout)
    and the two nn.LSTM biases pre-summed; loading a real PyTorch checkpoint
    requires transposing weight_ih/weight_hh and summing bias_ih + bias_hh.
    """
    H = HIDDEN_DIM
    out_dim = params["wfc1"].shape[1]
    assert out_dim + 1 <= HEAD_WIDTH

    wstep = jnp.zeros((2 * H, 8 * H), jnp.float32)
    wstep = wstep.at[:H, :4 * H].set(params["whh1"])
    wstep = wstep.at[:H, 4 * H:].set(params["wih2"])
    wstep = wstep.at[H:, 4 * H:].set(params["whh2"])

    whead = jnp.zeros((H, HEAD_WIDTH), jnp.float32)
    whead = whead.at[:, :out_dim].set(params["wfc1"])
    whead = whead.at[:, out_dim:out_dim + 1].set(params["wfc2"])
    bhead = jnp.zeros((1, HEAD_WIDTH), jnp.float32)
    bhead = bhead.at[:, :out_dim].set(params["bfc1"])
    bhead = bhead.at[:, out_dim:out_dim + 1].set(params["bfc2"])

    packed = {
        "wih1": params["wih1"].astype(jnp.bfloat16),    # (D, 4H)
        "b1":   params["b1"].astype(jnp.float32),       # (1, 4H)
        "wstep": wstep.astype(jnp.bfloat16),            # (2H, 8H)
        "b2":   params["b2"].astype(jnp.float32),       # (1, 4H)
        "whead": whead.astype(jnp.bfloat16),            # (H, 128)
        "bhead": bhead,                                 # (1, 128) f32
    }
    return packed, out_dim


@functools.partial(jax.jit, static_argnames=("out_dim",))
def lstm_model_forward(x, packed, out_dim):
    """x: (B, T, input_dim) float32, batch_first like the PyTorch module."""
    B, T, D = x.shape
    H = HIDDEN_DIM
    Bp = ((B + 7) // 8) * 8              # sublane-aligned batch

    # Layout plumbing: (B,T,D) -> (T, Bp, D) -> (T*Bp, D) bf16.
    x_tbd = jnp.transpose(x, (1, 0, 2))
    x_tbd = jnp.pad(x_tbd, ((0, 0), (0, Bp - B), (0, 0)))
    x_flat = x_tbd.reshape(T * Bp, D).astype(jnp.bfloat16)

    vmem = pl.BlockSpec(memory_space=pltpu.MemorySpace.VMEM)
    y = pl.pallas_call(
        _lstm_wavefront_kernel,
        out_shape=jax.ShapeDtypeStruct((Bp, HEAD_WIDTH), jnp.float32),
        in_specs=[vmem] * 7,
        out_specs=vmem,
        scratch_shapes=[pltpu.VMEM((T * Bp, 4 * H), jnp.float32)],
    )(x_flat, packed["wih1"], packed["b1"], packed["wstep"],
      packed["b2"], packed["whead"], packed["bhead"])

    y_a = y[:B, :out_dim]
    y_t = y[:B, out_dim:out_dim + 1]
    return y_a, y_t


def init_params(key, input_dim, hidden_dim, output_dim):
    """Deterministic synthetic init, PyTorch-style U(-1/sqrt(H), 1/sqrt(H))."""
    s = 1.0 / np.sqrt(hidden_dim)
    ks = jax.random.split(key, 14)
    u = lambda k, shape: jax.random.uniform(k, shape, jnp.float32, -s, s)
    return {
        "wih1": u(ks[0], (input_dim, 4 * hidden_dim)),
        "whh1": u(ks[1], (hidden_dim, 4 * hidden_dim)),
        "b1":   u(ks[2], (1, 4 * hidden_dim)) + u(ks[3], (1, 4 * hidden_dim)),
        "wih2": u(ks[4], (hidden_dim, 4 * hidden_dim)),
        "whh2": u(ks[5], (hidden_dim, 4 * hidden_dim)),
        "b2":   u(ks[6], (1, 4 * hidden_dim)) + u(ks[7], (1, 4 * hidden_dim)),
        "wfc1": u(ks[8], (hidden_dim, output_dim)),
        "bfc1": u(ks[9], (1, output_dim)),
        "wfc2": u(ks[10], (hidden_dim, 1)),
        "bfc2": u(ks[11], (1, 1)),
    }


def reference_forward(x, params):
    """Pure-JAX reference LSTM (same bf16-operand / f32-accumulate precision)."""
    B = x.shape[0]
    H = HIDDEN_DIM
    bf = lambda a: a.astype(jnp.bfloat16)
    dot = lambda a, b: jnp.dot(bf(a), bf(b), preferred_element_type=jnp.float32)

    def cell(x_t, h, c, wih, whh, b):
        gates = dot(x_t, wih) + dot(h, whh) + b
        i = jax.nn.sigmoid(gates[:, 0 * H:1 * H])
        f = jax.nn.sigmoid(gates[:, 1 * H:2 * H])
        g = jnp.tanh(gates[:, 2 * H:3 * H])
        o = jax.nn.sigmoid(gates[:, 3 * H:4 * H])
        c_new = f * c + i * g
        return o * jnp.tanh(c_new), c_new

    def step(carry, x_t):
        h1, c1, h2, c2 = carry
        h1, c1 = cell(x_t, h1, c1, params["wih1"], params["whh1"], params["b1"])
        h2, c2 = cell(h1, h2, c2, params["wih2"], params["whh2"], params["b2"])
        return (h1, c1, h2, c2), None

    z = jnp.zeros((B, H), jnp.float32)
    (h1, c1, h2, c2), _ = jax.lax.scan(step, (z, z, z, z),
                                       jnp.transpose(x, (1, 0, 2)))
    y_a = dot(h2, params["wfc1"]) + params["bfc1"]
    y_t = dot(h2, params["wfc2"]) + params["bfc2"]
    return y_a, y_t


if __name__ == "__main__":
    # Small shapes consistent with the module: input_dim = len(chars)+5,
    # output_dim = len(target_chars), hidden_dim = 128, num_layers = 2.
    B, T = 2, 8
    input_dim = 21        # e.g. 16 chars + 5 extra features
    output_dim = 16       # len(target_chars)

    key = jax.random.PRNGKey(0)
    k_x, k_p = jax.random.split(key)
    x = jax.random.normal(k_x, (B, T, input_dim), jnp.float32)
    params = init_params(k_p, input_dim, HIDDEN_DIM, output_dim)

    packed, out_dim = pack_params(params)          # one-time weight repacking
    y_a, y_t = lstm_model_forward(x, packed, out_dim)
    jax.block_until_ready((y_a, y_t))

    ra, rt = reference_forward(x, params)
    np.testing.assert_allclose(np.asarray(y_a), np.asarray(ra),
                               rtol=3e-3, atol=3e-3)
    np.testing.assert_allclose(np.asarray(y_t), np.asarray(rt),
                               rtol=3e-3, atol=3e-3)

    assert y_a.shape == (B, output_dim) and y_t.shape == (B, 1)
    print("KERNEL_OK")
</pallas_src>

<mosaic_0001>
module attributes {stable_mosaic.version = 11 : i64} {
  func.func @_lstm_wavefront_kernel(%arg0: memref<64x21xbf16, #tpu.memory_space<vmem>>, %arg1: memref<21x512xbf16, #tpu.memory_space<vmem>>, %arg2: memref<1x512xf32, #tpu.memory_space<vmem>>, %arg3: memref<256x1024xbf16, #tpu.memory_space<vmem>>, %arg4: memref<1x512xf32, #tpu.memory_space<vmem>>, %arg5: memref<128x128xbf16, #tpu.memory_space<vmem>>, %arg6: memref<1x128xf32, #tpu.memory_space<vmem>>, %arg7: memref<8x128xf32, #tpu.memory_space<vmem>>, %arg8: memref<64x512xf32, #tpu.memory_space<vmem>>) attributes {dimension_semantics = [], scalar_prefetch = 0 : i64, scratch_operands = 1 : i64, tpu.core_type = #tpu.core_type<tc>} {
    %c0 = arith.constant 0 : index
    %c0_0 = arith.constant 0 : index
    %0 = vector.load %arg0[%c0, %c0_0] : memref<64x21xbf16, #tpu.memory_space<vmem>>, vector<64x21xbf16>
    %c0_1 = arith.constant 0 : index
    %c0_2 = arith.constant 0 : index
    %1 = vector.load %arg1[%c0_1, %c0_2] : memref<21x512xbf16, #tpu.memory_space<vmem>>, vector<21x512xbf16>
    %cst = arith.constant dense<0.000000e+00> : vector<64x512xf32>
    %2 = tpu.matmul %0, %1, %cst {dimension_numbers = #tpu.dot_dimension_numbers<[1], [0], [0], [1], [0, 0, 1, 1], [], []>} : vector<64x21xbf16>, vector<21x512xbf16>, vector<64x512xf32> -> vector<64x512xf32>
    %c0_3 = arith.constant 0 : index
    %c0_4 = arith.constant 0 : index
    %3 = vector.load %arg2[%c0_3, %c0_4] : memref<1x512xf32, #tpu.memory_space<vmem>>, vector<1x512xf32>
    %4 = vector.broadcast %3 : vector<1x512xf32> to vector<64x512xf32>
    %5 = arith.addf %2, %4 : vector<64x512xf32>
    %c0_5 = arith.constant 0 : index
    %c0_6 = arith.constant 0 : index
    %6 = vector.load %arg8[%c0_5, %c0_6] : memref<64x512xf32, #tpu.memory_space<vmem>>, vector<64x512xf32>
    tpu.vector_store %arg8[%c0_5, %c0_6], %5 {strides = array<i32>} : memref<64x512xf32, #tpu.memory_space<vmem>>, vector<64x512xf32>,
    %c0_7 = arith.constant 0 : index
    %c0_8 = arith.constant 0 : index
    %7 = vector.load %arg3[%c0_7, %c0_8] : memref<256x1024xbf16, #tpu.memory_space<vmem>>, vector<256x1024xbf16>
    %c0_9 = arith.constant 0 : index
    %c0_10 = arith.constant 0 : index
    %8 = vector.load %arg5[%c0_9, %c0_10] : memref<128x128xbf16, #tpu.memory_space<vmem>>, vector<128x128xbf16>
    %c0_11 = arith.constant 0 : index
    %c0_12 = arith.constant 0 : index
    %9 = vector.load %arg4[%c0_11, %c0_12] : memref<1x512xf32, #tpu.memory_space<vmem>>, vector<1x512xf32>
    %10 = vector.shape_cast %9 : vector<1x512xf32> to vector<1x512xf32>
    %11 = vector.broadcast %10 : vector<1x512xf32> to vector<8x512xf32>
    %c0_13 = arith.constant 0 : index
    %c0_14 = arith.constant 0 : index
    %12 = vector.load %arg6[%c0_13, %c0_14] : memref<1x128xf32, #tpu.memory_space<vmem>>, vector<1x128xf32>
    %13 = vector.shape_cast %12 : vector<1x128xf32> to vector<1x128xf32>
    %14 = vector.broadcast %13 : vector<1x128xf32> to vector<8x128xf32>
    %c0_15 = arith.constant 0 : index
    %c0_16 = arith.constant 0 : index
    %15 = vector.load %arg8[%c0_15, %c0_16] : memref<64x512xf32, #tpu.memory_space<vmem>>, vector<8x512xf32>
    %16 = vector.extract_strided_slice %15 {offsets = [0, 0], sizes = [8, 128], strides = [1, 1]} : vector<8x512xf32> to vector<8x128xf32>
    %17 = arith.negf %16 : vector<8x128xf32>
    %18 = math.exp %17 : vector<8x128xf32>
    %cst_17 = arith.constant 1.000000e+00 : f32
    %19 = vector.broadcast %cst_17 : f32 to vector<8x128xf32>
    %20 = arith.addf %19, %18 : vector<8x128xf32>
    %21 = arith.divf %19, %20 : vector<8x128xf32>
    %22 = vector.extract_strided_slice %15 {offsets = [0, 256], sizes = [8, 128], strides = [1, 1]} : vector<8x512xf32> to vector<8x128xf32>
    %23 = math.tanh %22 : vector<8x128xf32>
    %24 = vector.extract_strided_slice %15 {offsets = [0, 384], sizes = [8, 128], strides = [1, 1]} : vector<8x512xf32> to vector<8x128xf32>
    %25 = arith.negf %24 : vector<8x128xf32>
    %26 = math.exp %25 : vector<8x128xf32>
    %cst_18 = arith.constant 1.000000e+00 : f32
    %27 = vector.broadcast %cst_18 : f32 to vector<8x128xf32>
    %28 = arith.addf %27, %26 : vector<8x128xf32>
    %29 = arith.divf %27, %28 : vector<8x128xf32>
    %30 = arith.mulf %21, %23 : vector<8x128xf32>
    %31 = math.tanh %30 : vector<8x128xf32>
    %32 = arith.mulf %29, %31 : vector<8x128xf32>
    %33 = arith.truncf %32 : vector<8x128xf32> to vector<8x128xbf16>
    %cst_19 = arith.constant 0.000000e+00 : f32
    %34 = vector.broadcast %cst_19 : f32 to vector<8x128xf32>
    %cst_20 = arith.constant 0.000000e+00 : bf16
    %35 = vector.broadcast %cst_20 : bf16 to vector<8x128xbf16>
    %36 = tpu.concatenate %33, %35 in 1 : vector<8x128xbf16>, vector<8x128xbf16> -> vector<8x256xbf16>
    %cst_21 = arith.constant dense<0.000000e+00> : vector<8x1024xf32>
    %37 = tpu.matmul %36, %7, %cst_21 {dimension_numbers = #tpu.dot_dimension_numbers<[1], [0], [0], [1], [0, 0, 1, 1], [], []>} : vector<8x256xbf16>, vector<256x1024xbf16>, vector<8x1024xf32> -> vector<8x1024xf32>
    %38 = vector.extract_strided_slice %37 {offsets = [0, 512], sizes = [8, 512], strides = [1, 1]} : vector<8x1024xf32> to vector<8x512xf32>
    %39 = arith.addf %38, %11 : vector<8x512xf32>
    %40 = vector.extract_strided_slice %39 {offsets = [0, 0], sizes = [8, 128], strides = [1, 1]} : vector<8x512xf32> to vector<8x128xf32>
    %41 = arith.negf %40 : vector<8x128xf32>
    %42 = math.exp %41 : vector<8x128xf32>
    %cst_22 = arith.constant 1.000000e+00 : f32
    %43 = vector.broadcast %cst_22 : f32 to vector<8x128xf32>
    %44 = arith.addf %43, %42 : vector<8x128xf32>
    %45 = arith.divf %43, %44 : vector<8x128xf32>
    %46 = vector.extract_strided_slice %39 {offsets = [0, 128], sizes = [8, 128], strides = [1, 1]} : vector<8x512xf32> to vector<8x128xf32>
    %47 = arith.negf %46 : vector<8x128xf32>
    %48 = math.exp %47 : vector<8x128xf32>
    %cst_23 = arith.constant 1.000000e+00 : f32
    %49 = vector.broadcast %cst_23 : f32 to vector<8x128xf32>
    %50 = arith.addf %49, %48 : vector<8x128xf32>
    %51 = arith.divf %49, %50 : vector<8x128xf32>
    %52 = vector.extract_strided_slice %39 {offsets = [0, 256], sizes = [8, 128], strides = [1, 1]} : vector<8x512xf32> to vector<8x128xf32>
    %53 = math.tanh %52 : vector<8x128xf32>
    %54 = vector.extract_strided_slice %39 {offsets = [0, 384], sizes = [8, 128], strides = [1, 1]} : vector<8x512xf32> to vector<8x128xf32>
    %55 = arith.negf %54 : vector<8x128xf32>
    %56 = math.exp %55 : vector<8x128xf32>
    %cst_24 = arith.constant 1.000000e+00 : f32
    %57 = vector.broadcast %cst_24 : f32 to vector<8x128xf32>
    %58 = arith.addf %57, %56 : vector<8x128xf32>
    %59 = arith.divf %57, %58 : vector<8x128xf32>
    %60 = arith.mulf %51, %34 : vector<8x128xf32>
    %61 = arith.mulf %45, %53 : vector<8x128xf32>
    %62 = arith.addf %60, %61 : vector<8x128xf32>
    %63 = math.tanh %62 : vector<8x128xf32>
    %64 = arith.mulf %59, %63 : vector<8x128xf32>
    %65 = arith.truncf %64 : vector<8x128xf32> to vector<8x128xbf16>
    %c8 = arith.constant 8 : index
    %c0_25 = arith.constant 0 : index
    %66 = vector.load %arg8[%c8, %c0_25] : memref<64x512xf32, #tpu.memory_space<vmem>>, vector<8x512xf32>
    %67 = vector.extract_strided_slice %37 {offsets = [0, 0], sizes = [8, 512], strides = [1, 1]} : vector<8x1024xf32> to vector<8x512xf32>
    %68 = arith.addf %66, %67 : vector<8x512xf32>
    %69 = vector.extract_strided_slice %68 {offsets = [0, 0], sizes = [8, 128], strides = [1, 1]} : vector<8x512xf32> to vector<8x128xf32>
    %70 = arith.negf %69 : vector<8x128xf32>
    %71 = math.exp %70 : vector<8x128xf32>
    %cst_26 = arith.constant 1.000000e+00 : f32
    %72 = vector.broadcast %cst_26 : f32 to vector<8x128xf32>
    %73 = arith.addf %72, %71 : vector<8x128xf32>
    %74 = arith.divf %72, %73 : vector<8x128xf32>
    %75 = vector.extract_strided_slice %68 {offsets = [0, 128], sizes = [8, 128], strides = [1, 1]} : vector<8x512xf32> to vector<8x128xf32>
    %76 = arith.negf %75 : vector<8x128xf32>
    %77 = math.exp %76 : vector<8x128xf32>
    %cst_27 = arith.constant 1.000000e+00 : f32
    %78 = vector.broadcast %cst_27 : f32 to vector<8x128xf32>
    %79 = arith.addf %78, %77 : vector<8x128xf32>
    %80 = arith.divf %78, %79 : vector<8x128xf32>
    %81 = vector.extract_strided_slice %68 {offsets = [0, 256], sizes = [8, 128], strides = [1, 1]} : vector<8x512xf32> to vector<8x128xf32>
    %82 = math.tanh %81 : vector<8x128xf32>
    %83 = vector.extract_strided_slice %68 {offsets = [0, 384], sizes = [8, 128], strides = [1, 1]} : vector<8x512xf32> to vector<8x128xf32>
    %84 = arith.negf %83 : vector<8x128xf32>
    %85 = math.exp %84 : vector<8x128xf32>
    %cst_28 = arith.constant 1.000000e+00 : f32
    %86 = vector.broadcast %cst_28 : f32 to vector<8x128xf32>
    %87 = arith.addf %86, %85 : vector<8x128xf32>
    %88 = arith.divf %86, %87 : vector<8x128xf32>
    %89 = arith.mulf %80, %30 : vector<8x128xf32>
    %90 = arith.mulf %74, %82 : vector<8x128xf32>
    %91 = arith.addf %89, %90 : vector<8x128xf32>
    %92 = math.tanh %91 : vector<8x128xf32>
    %93 = arith.mulf %88, %92 : vector<8x128xf32>
    %94 = arith.truncf %93 : vector<8x128xf32> to vector<8x128xbf16>
    %95 = tpu.concatenate %94, %65 in 1 : vector<8x128xbf16>, vector<8x128xbf16> -> vector<8x256xbf16>
    %cst_29 = arith.constant dense<0.000000e+00> : vector<8x1024xf32>
    %96 = tpu.matmul %95, %7, %cst_29 {dimension_numbers = #tpu.dot_dimension_numbers<[1], [0], [0], [1], [0, 0, 1, 1], [], []>} : vector<8x256xbf16>, vector<256x1024xbf16>, vector<8x1024xf32> -> vector<8x1024xf32>
    %97 = vector.extract_strided_slice %96 {offsets = [0, 512], sizes = [8, 512], strides = [1, 1]} : vector<8x1024xf32> to vector<8x512xf32>
    %98 = arith.addf %97, %11 : vector<8x512xf32>
    %99 = vector.extract_strided_slice %98 {offsets = [0, 0], sizes = [8, 128], strides = [1, 1]} : vector<8x512xf32> to vector<8x128xf32>
    %100 = arith.negf %99 : vector<8x128xf32>
    %101 = math.exp %100 : vector<8x128xf32>
    %cst_30 = arith.constant 1.000000e+00 : f32
    %102 = vector.broadcast %cst_30 : f32 to vector<8x128xf32>
    %103 = arith.addf %102, %101 : vector<8x128xf32>
    %104 = arith.divf %102, %103 : vector<8x128xf32>
    %105 = vector.extract_strided_slice %98 {offsets = [0, 128], sizes = [8, 128], strides = [1, 1]} : vector<8x512xf32> to vector<8x128xf32>
    %106 = arith.negf %105 : vector<8x128xf32>
    %107 = math.exp %106 : vector<8x128xf32>
    %cst_31 = arith.constant 1.000000e+00 : f32
    %108 = vector.broadcast %cst_31 : f32 to vector<8x128xf32>
    %109 = arith.addf %108, %107 : vector<8x128xf32>
    %110 = arith.divf %108, %109 : vector<8x128xf32>
    %111 = vector.extract_strided_slice %98 {offsets = [0, 256], sizes = [8, 128], strides = [1, 1]} : vector<8x512xf32> to vector<8x128xf32>
    %112 = math.tanh %111 : vector<8x128xf32>
    %113 = vector.extract_strided_slice %98 {offsets = [0, 384], sizes = [8, 128], strides = [1, 1]} : vector<8x512xf32> to vector<8x128xf32>
    %114 = arith.negf %113 : vector<8x128xf32>
    %115 = math.exp %114 : vector<8x128xf32>
    %cst_32 = arith.constant 1.000000e+00 : f32
    %116 = vector.broadcast %cst_32 : f32 to vector<8x128xf32>
    %117 = arith.addf %116, %115 : vector<8x128xf32>
    %118 = arith.divf %116, %117 : vector<8x128xf32>
    %119 = arith.mulf %110, %62 : vector<8x128xf32>
    %120 = arith.mulf %104, %112 : vector<8x128xf32>
    %121 = arith.addf %119, %120 : vector<8x128xf32>
    %122 = math.tanh %121 : vector<8x128xf32>
    %123 = arith.mulf %118, %122 : vector<8x128xf32>
    %124 = arith.truncf %123 : vector<8x128xf32> to vector<8x128xbf16>
    %c16 = arith.constant 16 : index
    %c0_33 = arith.constant 0 : index
    %125 = vector.load %arg8[%c16, %c0_33] : memref<64x512xf32, #tpu.memory_space<vmem>>, vector<8x512xf32>
    %126 = vector.extract_strided_slice %96 {offsets = [0, 0], sizes = [8, 512], strides = [1, 1]} : vector<8x1024xf32> to vector<8x512xf32>
    %127 = arith.addf %125, %126 : vector<8x512xf32>
    %128 = vector.extract_strided_slice %127 {offsets = [0, 0], sizes = [8, 128], strides = [1, 1]} : vector<8x512xf32> to vector<8x128xf32>
    %129 = arith.negf %128 : vector<8x128xf32>
    %130 = math.exp %129 : vector<8x128xf32>
    %cst_34 = arith.constant 1.000000e+00 : f32
    %131 = vector.broadcast %cst_34 : f32 to vector<8x128xf32>
    %132 = arith.addf %131, %130 : vector<8x128xf32>
    %133 = arith.divf %131, %132 : vector<8x128xf32>
    %134 = vector.extract_strided_slice %127 {offsets = [0, 128], sizes = [8, 128], strides = [1, 1]} : vector<8x512xf32> to vector<8x128xf32>
    %135 = arith.negf %134 : vector<8x128xf32>
    %136 = math.exp %135 : vector<8x128xf32>
    %cst_35 = arith.constant 1.000000e+00 : f32
    %137 = vector.broadcast %cst_35 : f32 to vector<8x128xf32>
    %138 = arith.addf %137, %136 : vector<8x128xf32>
    %139 = arith.divf %137, %138 : vector<8x128xf32>
    %140 = vector.extract_strided_slice %127 {offsets = [0, 256], sizes = [8, 128], strides = [1, 1]} : vector<8x512xf32> to vector<8x128xf32>
    %141 = math.tanh %140 : vector<8x128xf32>
    %142 = vector.extract_strided_slice %127 {offsets = [0, 384], sizes = [8, 128], strides = [1, 1]} : vector<8x512xf32> to vector<8x128xf32>
    %143 = arith.negf %142 : vector<8x128xf32>
    %144 = math.exp %143 : vector<8x128xf32>
    %cst_36 = arith.constant 1.000000e+00 : f32
    %145 = vector.broadcast %cst_36 : f32 to vector<8x128xf32>
    %146 = arith.addf %145, %144 : vector<8x128xf32>
    %147 = arith.divf %145, %146 : vector<8x128xf32>
    %148 = arith.mulf %139, %91 : vector<8x128xf32>
    %149 = arith.mulf %133, %141 : vector<8x128xf32>
    %150 = arith.addf %148, %149 : vector<8x128xf32>
    %151 = math.tanh %150 : vector<8x128xf32>
    %152 = arith.mulf %147, %151 : vector<8x128xf32>
    %153 = arith.truncf %152 : vector<8x128xf32> to vector<8x128xbf16>
    %154 = tpu.concatenate %153, %124 in 1 : vector<8x128xbf16>, vector<8x128xbf16> -> vector<8x256xbf16>
    %cst_37 = arith.constant dense<0.000000e+00> : vector<8x1024xf32>
    %155 = tpu.matmul %154, %7, %cst_37 {dimension_numbers = #tpu.dot_dimension_numbers<[1], [0], [0], [1], [0, 0, 1, 1], [], []>} : vector<8x256xbf16>, vector<256x1024xbf16>, vector<8x1024xf32> -> vector<8x1024xf32>
    %156 = vector.extract_strided_slice %155 {offsets = [0, 512], sizes = [8, 512], strides = [1, 1]} : vector<8x1024xf32> to vector<8x512xf32>
    %157 = arith.addf %156, %11 : vector<8x512xf32>
    %158 = vector.extract_strided_slice %157 {offsets = [0, 0], sizes = [8, 128], strides = [1, 1]} : vector<8x512xf32> to vector<8x128xf32>
    %159 = arith.negf %158 : vector<8x128xf32>
    %160 = math.exp %159 : vector<8x128xf32>
    %cst_38 = arith.constant 1.000000e+00 : f32
    %161 = vector.broadcast %cst_38 : f32 to vector<8x128xf32>
    %162 = arith.addf %161, %160 : vector<8x128xf32>
    %163 = arith.divf %161, %162 : vector<8x128xf32>
    %164 = vector.extract_strided_slice %157 {offsets = [0, 128], sizes = [8, 128], strides = [1, 1]} : vector<8x512xf32> to vector<8x128xf32>
    %165 = arith.negf %164 : vector<8x128xf32>
    %166 = math.exp %165 : vector<8x128xf32>
    %cst_39 = arith.constant 1.000000e+00 : f32
    %167 = vector.broadcast %cst_39 : f32 to vector<8x128xf32>
    %168 = arith.addf %167, %166 : vector<8x128xf32>
    %169 = arith.divf %167, %168 : vector<8x128xf32>
    %170 = vector.extract_strided_slice %157 {offsets = [0, 256], sizes = [8, 128], strides = [1, 1]} : vector<8x512xf32> to vector<8x128xf32>
    %171 = math.tanh %170 : vector<8x128xf32>
    %172 = vector.extract_strided_slice %157 {offsets = [0, 384], sizes = [8, 128], strides = [1, 1]} : vector<8x512xf32> to vector<8x128xf32>
    %173 = arith.negf %172 : vector<8x128xf32>
    %174 = math.exp %173 : vector<8x128xf32>
    %cst_40 = arith.constant 1.000000e+00 : f32
    %175 = vector.broadcast %cst_40 : f32 to vector<8x128xf32>
    %176 = arith.addf %175, %174 : vector<8x128xf32>
    %177 = arith.divf %175, %176 : vector<8x128xf32>
    %178 = arith.mulf %169, %121 : vector<8x128xf32>
    %179 = arith.mulf %163, %171 : vector<8x128xf32>
    %180 = arith.addf %178, %179 : vector<8x128xf32>
    %181 = math.tanh %180 : vector<8x128xf32>
    %182 = arith.mulf %177, %181 : vector<8x128xf32>
    %183 = arith.truncf %182 : vector<8x128xf32> to vector<8x128xbf16>
    %c24 = arith.constant 24 : index
    %c0_41 = arith.constant 0 : index
    %184 = vector.load %arg8[%c24, %c0_41] : memref<64x512xf32, #tpu.memory_space<vmem>>, vector<8x512xf32>
    %185 = vector.extract_strided_slice %155 {offsets = [0, 0], sizes = [8, 512], strides = [1, 1]} : vector<8x1024xf32> to vector<8x512xf32>
    %186 = arith.addf %184, %185 : vector<8x512xf32>
    %187 = vector.extract_strided_slice %186 {offsets = [0, 0], sizes = [8, 128], strides = [1, 1]} : vector<8x512xf32> to vector<8x128xf32>
    %188 = arith.negf %187 : vector<8x128xf32>
    %189 = math.exp %188 : vector<8x128xf32>
    %cst_42 = arith.constant 1.000000e+00 : f32
    %190 = vector.broadcast %cst_42 : f32 to vector<8x128xf32>
    %191 = arith.addf %190, %189 : vector<8x128xf32>
    %192 = arith.divf %190, %191 : vector<8x128xf32>
    %193 = vector.extract_strided_slice %186 {offsets = [0, 128], sizes = [8, 128], strides = [1, 1]} : vector<8x512xf32> to vector<8x128xf32>
    %194 = arith.negf %193 : vector<8x128xf32>
    %195 = math.exp %194 : vector<8x128xf32>
    %cst_43 = arith.constant 1.000000e+00 : f32
    %196 = vector.broadcast %cst_43 : f32 to vector<8x128xf32>
    %197 = arith.addf %196, %195 : vector<8x128xf32>
    %198 = arith.divf %196, %197 : vector<8x128xf32>
    %199 = vector.extract_strided_slice %186 {offsets = [0, 256], sizes = [8, 128], strides = [1, 1]} : vector<8x512xf32> to vector<8x128xf32>
    %200 = math.tanh %199 : vector<8x128xf32>
    %201 = vector.extract_strided_slice %186 {offsets = [0, 384], sizes = [8, 128], strides = [1, 1]} : vector<8x512xf32> to vector<8x128xf32>
    %202 = arith.negf %201 : vector<8x128xf32>
    %203 = math.exp %202 : vector<8x128xf32>
    %cst_44 = arith.constant 1.000000e+00 : f32
    %204 = vector.broadcast %cst_44 : f32 to vector<8x128xf32>
    %205 = arith.addf %204, %203 : vector<8x128xf32>
    %206 = arith.divf %204, %205 : vector<8x128xf32>
    %207 = arith.mulf %198, %150 : vector<8x128xf32>
    %208 = arith.mulf %192, %200 : vector<8x128xf32>
    %209 = arith.addf %207, %208 : vector<8x128xf32>
    %210 = math.tanh %209 : vector<8x128xf32>
    %211 = arith.mulf %206, %210 : vector<8x128xf32>
    %212 = arith.truncf %211 : vector<8x128xf32> to vector<8x128xbf16>
    %213 = tpu.concatenate %212, %183 in 1 : vector<8x128xbf16>, vector<8x128xbf16> -> vector<8x256xbf16>
    %cst_45 = arith.constant dense<0.000000e+00> : vector<8x1024xf32>
    %214 = tpu.matmul %213, %7, %cst_45 {dimension_numbers = #tpu.dot_dimension_numbers<[1], [0], [0], [1], [0, 0, 1, 1], [], []>} : vector<8x256xbf16>, vector<256x1024xbf16>, vector<8x1024xf32> -> vector<8x1024xf32>
    %215 = vector.extract_strided_slice %214 {offsets = [0, 512], sizes = [8, 512], strides = [1, 1]} : vector<8x1024xf32> to vector<8x512xf32>
    %216 = arith.addf %215, %11 : vector<8x512xf32>
    %217 = vector.extract_strided_slice %216 {offsets = [0, 0], sizes = [8, 128], strides = [1, 1]} : vector<8x512xf32> to vector<8x128xf32>
    %218 = arith.negf %217 : vector<8x128xf32>
    %219 = math.exp %218 : vector<8x128xf32>
    %cst_46 = arith.constant 1.000000e+00 : f32
    %220 = vector.broadcast %cst_46 : f32 to vector<8x128xf32>
    %221 = arith.addf %220, %219 : vector<8x128xf32>
    %222 = arith.divf %220, %221 : vector<8x128xf32>
    %223 = vector.extract_strided_slice %216 {offsets = [0, 128], sizes = [8, 128], strides = [1, 1]} : vector<8x512xf32> to vector<8x128xf32>
    %224 = arith.negf %223 : vector<8x128xf32>
    %225 = math.exp %224 : vector<8x128xf32>
    %cst_47 = arith.constant 1.000000e+00 : f32
    %226 = vector.broadcast %cst_47 : f32 to vector<8x128xf32>
    %227 = arith.addf %226, %225 : vector<8x128xf32>
    %228 = arith.divf %226, %227 : vector<8x128xf32>
    %229 = vector.extract_strided_slice %216 {offsets = [0, 256], sizes = [8, 128], strides = [1, 1]} : vector<8x512xf32> to vector<8x128xf32>
    %230 = math.tanh %229 : vector<8x128xf32>
    %231 = vector.extract_strided_slice %216 {offsets = [0, 384], sizes = [8, 128], strides = [1, 1]} : vector<8x512xf32> to vector<8x128xf32>
    %232 = arith.negf %231 : vector<8x128xf32>
    %233 = math.exp %232 : vector<8x128xf32>
    %cst_48 = arith.constant 1.000000e+00 : f32
    %234 = vector.broadcast %cst_48 : f32 to vector<8x128xf32>
    %235 = arith.addf %234, %233 : vector<8x128xf32>
    %236 = arith.divf %234, %235 : vector<8x128xf32>
    %237 = arith.mulf %228, %180 : vector<8x128xf32>
    %238 = arith.mulf %222, %230 : vector<8x128xf32>
    %239 = arith.addf %237, %238 : vector<8x128xf32>
    %240 = math.tanh %239 : vector<8x128xf32>
    %241 = arith.mulf %236, %240 : vector<8x128xf32>
    %242 = arith.truncf %241 : vector<8x128xf32> to vector<8x128xbf16>
    %c32 = arith.constant 32 : index
    %c0_49 = arith.constant 0 : index
    %243 = vector.load %arg8[%c32, %c0_49] : memref<64x512xf32, #tpu.memory_space<vmem>>, vector<8x512xf32>
    %244 = vector.extract_strided_slice %214 {offsets = [0, 0], sizes = [8, 512], strides = [1, 1]} : vector<8x1024xf32> to vector<8x512xf32>
    %245 = arith.addf %243, %244 : vector<8x512xf32>
    %246 = vector.extract_strided_slice %245 {offsets = [0, 0], sizes = [8, 128], strides = [1, 1]} : vector<8x512xf32> to vector<8x128xf32>
    %247 = arith.negf %246 : vector<8x128xf32>
    %248 = math.exp %247 : vector<8x128xf32>
    %cst_50 = arith.constant 1.000000e+00 : f32
    %249 = vector.broadcast %cst_50 : f32 to vector<8x128xf32>
    %250 = arith.addf %249, %248 : vector<8x128xf32>
    %251 = arith.divf %249, %250 : vector<8x128xf32>
    %252 = vector.extract_strided_slice %245 {offsets = [0, 128], sizes = [8, 128], strides = [1, 1]} : vector<8x512xf32> to vector<8x128xf32>
    %253 = arith.negf %252 : vector<8x128xf32>
    %254 = math.exp %253 : vector<8x128xf32>
    %cst_51 = arith.constant 1.000000e+00 : f32
    %255 = vector.broadcast %cst_51 : f32 to vector<8x128xf32>
    %256 = arith.addf %255, %254 : vector<8x128xf32>
    %257 = arith.divf %255, %256 : vector<8x128xf32>
    %258 = vector.extract_strided_slice %245 {offsets = [0, 256], sizes = [8, 128], strides = [1, 1]} : vector<8x512xf32> to vector<8x128xf32>
    %259 = math.tanh %258 : vector<8x128xf32>
    %260 = vector.extract_strided_slice %245 {offsets = [0, 384], sizes = [8, 128], strides = [1, 1]} : vector<8x512xf32> to vector<8x128xf32>
    %261 = arith.negf %260 : vector<8x128xf32>
    %262 = math.exp %261 : vector<8x128xf32>
    %cst_52 = arith.constant 1.000000e+00 : f32
    %263 = vector.broadcast %cst_52 : f32 to vector<8x128xf32>
    %264 = arith.addf %263, %262 : vector<8x128xf32>
    %265 = arith.divf %263, %264 : vector<8x128xf32>
    %266 = arith.mulf %257, %209 : vector<8x128xf32>
    %267 = arith.mulf %251, %259 : vector<8x128xf32>
    %268 = arith.addf %266, %267 : vector<8x128xf32>
    %269 = math.tanh %268 : vector<8x128xf32>
    %270 = arith.mulf %265, %269 : vector<8x128xf32>
    %271 = arith.truncf %270 : vector<8x128xf32> to vector<8x128xbf16>
    %272 = tpu.concatenate %271, %242 in 1 : vector<8x128xbf16>, vector<8x128xbf16> -> vector<8x256xbf16>
    %cst_53 = arith.constant dense<0.000000e+00> : vector<8x1024xf32>
    %273 = tpu.matmul %272, %7, %cst_53 {dimension_numbers = #tpu.dot_dimension_numbers<[1], [0], [0], [1], [0, 0, 1, 1], [], []>} : vector<8x256xbf16>, vector<256x1024xbf16>, vector<8x1024xf32> -> vector<8x1024xf32>
    %274 = vector.extract_strided_slice %273 {offsets = [0, 512], sizes = [8, 512], strides = [1, 1]} : vector<8x1024xf32> to vector<8x512xf32>
    %275 = arith.addf %274, %11 : vector<8x512xf32>
    %276 = vector.extract_strided_slice %275 {offsets = [0, 0], sizes = [8, 128], strides = [1, 1]} : vector<8x512xf32> to vector<8x128xf32>
    %277 = arith.negf %276 : vector<8x128xf32>
    %278 = math.exp %277 : vector<8x128xf32>
    %cst_54 = arith.constant 1.000000e+00 : f32
    %279 = vector.broadcast %cst_54 : f32 to vector<8x128xf32>
    %280 = arith.addf %279, %278 : vector<8x128xf32>
    %281 = arith.divf %279, %280 : vector<8x128xf32>
    %282 = vector.extract_strided_slice %275 {offsets = [0, 128], sizes = [8, 128], strides = [1, 1]} : vector<8x512xf32> to vector<8x128xf32>
    %283 = arith.negf %282 : vector<8x128xf32>
    %284 = math.exp %283 : vector<8x128xf32>
    %cst_55 = arith.constant 1.000000e+00 : f32
    %285 = vector.broadcast %cst_55 : f32 to vector<8x128xf32>
    %286 = arith.addf %285, %284 : vector<8x128xf32>
    %287 = arith.divf %285, %286 : vector<8x128xf32>
    %288 = vector.extract_strided_slice %275 {offsets = [0, 256], sizes = [8, 128], strides = [1, 1]} : vector<8x512xf32> to vector<8x128xf32>
    %289 = math.tanh %288 : vector<8x128xf32>
    %290 = vector.extract_strided_slice %275 {offsets = [0, 384], sizes = [8, 128], strides = [1, 1]} : vector<8x512xf32> to vector<8x128xf32>
    %291 = arith.negf %290 : vector<8x128xf32>
    %292 = math.exp %291 : vector<8x128xf32>
    %cst_56 = arith.constant 1.000000e+00 : f32
    %293 = vector.broadcast %cst_56 : f32 to vector<8x128xf32>
    %294 = arith.addf %293, %292 : vector<8x128xf32>
    %295 = arith.divf %293, %294 : vector<8x128xf32>
    %296 = arith.mulf %287, %239 : vector<8x128xf32>
    %297 = arith.mulf %281, %289 : vector<8x128xf32>
    %298 = arith.addf %296, %297 : vector<8x128xf32>
    %299 = math.tanh %298 : vector<8x128xf32>
    %300 = arith.mulf %295, %299 : vector<8x128xf32>
    %301 = arith.truncf %300 : vector<8x128xf32> to vector<8x128xbf16>
    %c40 = arith.constant 40 : index
    %c0_57 = arith.constant 0 : index
    %302 = vector.load %arg8[%c40, %c0_57] : memref<64x512xf32, #tpu.memory_space<vmem>>, vector<8x512xf32>
    %303 = vector.extract_strided_slice %273 {offsets = [0, 0], sizes = [8, 512], strides = [1, 1]} : vector<8x1024xf32> to vector<8x512xf32>
    %304 = arith.addf %302, %303 : vector<8x512xf32>
    %305 = vector.extract_strided_slice %304 {offsets = [0, 0], sizes = [8, 128], strides = [1, 1]} : vector<8x512xf32> to vector<8x128xf32>
    %306 = arith.negf %305 : vector<8x128xf32>
    %307 = math.exp %306 : vector<8x128xf32>
    %cst_58 = arith.constant 1.000000e+00 : f32
    %308 = vector.broadcast %cst_58 : f32 to vector<8x128xf32>
    %309 = arith.addf %308, %307 : vector<8x128xf32>
    %310 = arith.divf %308, %309 : vector<8x128xf32>
    %311 = vector.extract_strided_slice %304 {offsets = [0, 128], sizes = [8, 128], strides = [1, 1]} : vector<8x512xf32> to vector<8x128xf32>
    %312 = arith.negf %311 : vector<8x128xf32>
    %313 = math.exp %312 : vector<8x128xf32>
    %cst_59 = arith.constant 1.000000e+00 : f32
    %314 = vector.broadcast %cst_59 : f32 to vector<8x128xf32>
    %315 = arith.addf %314, %313 : vector<8x128xf32>
    %316 = arith.divf %314, %315 : vector<8x128xf32>
    %317 = vector.extract_strided_slice %304 {offsets = [0, 256], sizes = [8, 128], strides = [1, 1]} : vector<8x512xf32> to vector<8x128xf32>
    %318 = math.tanh %317 : vector<8x128xf32>
    %319 = vector.extract_strided_slice %304 {offsets = [0, 384], sizes = [8, 128], strides = [1, 1]} : vector<8x512xf32> to vector<8x128xf32>
    %320 = arith.negf %319 : vector<8x128xf32>
    %321 = math.exp %320 : vector<8x128xf32>
    %cst_60 = arith.constant 1.000000e+00 : f32
    %322 = vector.broadcast %cst_60 : f32 to vector<8x128xf32>
    %323 = arith.addf %322, %321 : vector<8x128xf32>
    %324 = arith.divf %322, %323 : vector<8x128xf32>
    %325 = arith.mulf %316, %268 : vector<8x128xf32>
    %326 = arith.mulf %310, %318 : vector<8x128xf32>
    %327 = arith.addf %325, %326 : vector<8x128xf32>
    %328 = math.tanh %327 : vector<8x128xf32>
    %329 = arith.mulf %324, %328 : vector<8x128xf32>
    %330 = arith.truncf %329 : vector<8x128xf32> to vector<8x128xbf16>
    %331 = tpu.concatenate %330, %301 in 1 : vector<8x128xbf16>, vector<8x128xbf16> -> vector<8x256xbf16>
    %cst_61 = arith.constant dense<0.000000e+00> : vector<8x1024xf32>
    %332 = tpu.matmul %331, %7, %cst_61 {dimension_numbers = #tpu.dot_dimension_numbers<[1], [0], [0], [1], [0, 0, 1, 1], [], []>} : vector<8x256xbf16>, vector<256x1024xbf16>, vector<8x1024xf32> -> vector<8x1024xf32>
    %333 = vector.extract_strided_slice %332 {offsets = [0, 512], sizes = [8, 512], strides = [1, 1]} : vector<8x1024xf32> to vector<8x512xf32>
    %334 = arith.addf %333, %11 : vector<8x512xf32>
    %335 = vector.extract_strided_slice %334 {offsets = [0, 0], sizes = [8, 128], strides = [1, 1]} : vector<8x512xf32> to vector<8x128xf32>
    %336 = arith.negf %335 : vector<8x128xf32>
    %337 = math.exp %336 : vector<8x128xf32>
    %cst_62 = arith.constant 1.000000e+00 : f32
    %338 = vector.broadcast %cst_62 : f32 to vector<8x128xf32>
    %339 = arith.addf %338, %337 : vector<8x128xf32>
    %340 = arith.divf %338, %339 : vector<8x128xf32>
    %341 = vector.extract_strided_slice %334 {offsets = [0, 128], sizes = [8, 128], strides = [1, 1]} : vector<8x512xf32> to vector<8x128xf32>
    %342 = arith.negf %341 : vector<8x128xf32>
    %343 = math.exp %342 : vector<8x128xf32>
    %cst_63 = arith.constant 1.000000e+00 : f32
    %344 = vector.broadcast %cst_63 : f32 to vector<8x128xf32>
    %345 = arith.addf %344, %343 : vector<8x128xf32>
    %346 = arith.divf %344, %345 : vector<8x128xf32>
    %347 = vector.extract_strided_slice %334 {offsets = [0, 256], sizes = [8, 128], strides = [1, 1]} : vector<8x512xf32> to vector<8x128xf32>
    %348 = math.tanh %347 : vector<8x128xf32>
    %349 = vector.extract_strided_slice %334 {offsets = [0, 384], sizes = [8, 128], strides = [1, 1]} : vector<8x512xf32> to vector<8x128xf32>
    %350 = arith.negf %349 : vector<8x128xf32>
    %351 = math.exp %350 : vector<8x128xf32>
    %cst_64 = arith.constant 1.000000e+00 : f32
    %352 = vector.broadcast %cst_64 : f32 to vector<8x128xf32>
    %353 = arith.addf %352, %351 : vector<8x128xf32>
    %354 = arith.divf %352, %353 : vector<8x128xf32>
    %355 = arith.mulf %346, %298 : vector<8x128xf32>
    %356 = arith.mulf %340, %348 : vector<8x128xf32>
    %357 = arith.addf %355, %356 : vector<8x128xf32>
    %358 = math.tanh %357 : vector<8x128xf32>
    %359 = arith.mulf %354, %358 : vector<8x128xf32>
    %360 = arith.truncf %359 : vector<8x128xf32> to vector<8x128xbf16>
    %c48 = arith.constant 48 : index
    %c0_65 = arith.constant 0 : index
    %361 = vector.load %arg8[%c48, %c0_65] : memref<64x512xf32, #tpu.memory_space<vmem>>, vector<8x512xf32>
    %362 = vector.extract_strided_slice %332 {offsets = [0, 0], sizes = [8, 512], strides = [1, 1]} : vector<8x1024xf32> to vector<8x512xf32>
    %363 = arith.addf %361, %362 : vector<8x512xf32>
    %364 = vector.extract_strided_slice %363 {offsets = [0, 0], sizes = [8, 128], strides = [1, 1]} : vector<8x512xf32> to vector<8x128xf32>
    %365 = arith.negf %364 : vector<8x128xf32>
    %366 = math.exp %365 : vector<8x128xf32>
    %cst_66 = arith.constant 1.000000e+00 : f32
    %367 = vector.broadcast %cst_66 : f32 to vector<8x128xf32>
    %368 = arith.addf %367, %366 : vector<8x128xf32>
    %369 = arith.divf %367, %368 : vector<8x128xf32>
    %370 = vector.extract_strided_slice %363 {offsets = [0, 128], sizes = [8, 128], strides = [1, 1]} : vector<8x512xf32> to vector<8x128xf32>
    %371 = arith.negf %370 : vector<8x128xf32>
    %372 = math.exp %371 : vector<8x128xf32>
    %cst_67 = arith.constant 1.000000e+00 : f32
    %373 = vector.broadcast %cst_67 : f32 to vector<8x128xf32>
    %374 = arith.addf %373, %372 : vector<8x128xf32>
    %375 = arith.divf %373, %374 : vector<8x128xf32>
    %376 = vector.extract_strided_slice %363 {offsets = [0, 256], sizes = [8, 128], strides = [1, 1]} : vector<8x512xf32> to vector<8x128xf32>
    %377 = math.tanh %376 : vector<8x128xf32>
    %378 = vector.extract_strided_slice %363 {offsets = [0, 384], sizes = [8, 128], strides = [1, 1]} : vector<8x512xf32> to vector<8x128xf32>
    %379 = arith.negf %378 : vector<8x128xf32>
    %380 = math.exp %379 : vector<8x128xf32>
    %cst_68 = arith.constant 1.000000e+00 : f32
    %381 = vector.broadcast %cst_68 : f32 to vector<8x128xf32>
    %382 = arith.addf %381, %380 : vector<8x128xf32>
    %383 = arith.divf %381, %382 : vector<8x128xf32>
    %384 = arith.mulf %375, %327 : vector<8x128xf32>
    %385 = arith.mulf %369, %377 : vector<8x128xf32>
    %386 = arith.addf %384, %385 : vector<8x128xf32>
    %387 = math.tanh %386 : vector<8x128xf32>
    %388 = arith.mulf %383, %387 : vector<8x128xf32>
    %389 = arith.truncf %388 : vector<8x128xf32> to vector<8x128xbf16>
    %390 = tpu.concatenate %389, %360 in 1 : vector<8x128xbf16>, vector<8x128xbf16> -> vector<8x256xbf16>
    %cst_69 = arith.constant dense<0.000000e+00> : vector<8x1024xf32>
    %391 = tpu.matmul %390, %7, %cst_69 {dimension_numbers = #tpu.dot_dimension_numbers<[1], [0], [0], [1], [0, 0, 1, 1], [], []>} : vector<8x256xbf16>, vector<256x1024xbf16>, vector<8x1024xf32> -> vector<8x1024xf32>
    %392 = vector.extract_strided_slice %391 {offsets = [0, 512], sizes = [8, 512], strides = [1, 1]} : vector<8x1024xf32> to vector<8x512xf32>
    %393 = arith.addf %392, %11 : vector<8x512xf32>
    %394 = vector.extract_strided_slice %393 {offsets = [0, 0], sizes = [8, 128], strides = [1, 1]} : vector<8x512xf32> to vector<8x128xf32>
    %395 = arith.negf %394 : vector<8x128xf32>
    %396 = math.exp %395 : vector<8x128xf32>
    %cst_70 = arith.constant 1.000000e+00 : f32
    %397 = vector.broadcast %cst_70 : f32 to vector<8x128xf32>
    %398 = arith.addf %397, %396 : vector<8x128xf32>
    %399 = arith.divf %397, %398 : vector<8x128xf32>
    %400 = vector.extract_strided_slice %393 {offsets = [0, 128], sizes = [8, 128], strides = [1, 1]} : vector<8x512xf32> to vector<8x128xf32>
    %401 = arith.negf %400 : vector<8x128xf32>
    %402 = math.exp %401 : vector<8x128xf32>
    %cst_71 = arith.constant 1.000000e+00 : f32
    %403 = vector.broadcast %cst_71 : f32 to vector<8x128xf32>
    %404 = arith.addf %403, %402 : vector<8x128xf32>
    %405 = arith.divf %403, %404 : vector<8x128xf32>
    %406 = vector.extract_strided_slice %393 {offsets = [0, 256], sizes = [8, 128], strides = [1, 1]} : vector<8x512xf32> to vector<8x128xf32>
    %407 = math.tanh %406 : vector<8x128xf32>
    %408 = vector.extract_strided_slice %393 {offsets = [0, 384], sizes = [8, 128], strides = [1, 1]} : vector<8x512xf32> to vector<8x128xf32>
    %409 = arith.negf %408 : vector<8x128xf32>
    %410 = math.exp %409 : vector<8x128xf32>
    %cst_72 = arith.constant 1.000000e+00 : f32
    %411 = vector.broadcast %cst_72 : f32 to vector<8x128xf32>
    %412 = arith.addf %411, %410 : vector<8x128xf32>
    %413 = arith.divf %411, %412 : vector<8x128xf32>
    %414 = arith.mulf %405, %357 : vector<8x128xf32>
    %415 = arith.mulf %399, %407 : vector<8x128xf32>
    %416 = arith.addf %414, %415 : vector<8x128xf32>
    %417 = math.tanh %416 : vector<8x128xf32>
    %418 = arith.mulf %413, %417 : vector<8x128xf32>
    %419 = arith.truncf %418 : vector<8x128xf32> to vector<8x128xbf16>
    %c56 = arith.constant 56 : index
    %c0_73 = arith.constant 0 : index
    %420 = vector.load %arg8[%c56, %c0_73] : memref<64x512xf32, #tpu.memory_space<vmem>>, vector<8x512xf32>
    %421 = vector.extract_strided_slice %391 {offsets = [0, 0], sizes = [8, 512], strides = [1, 1]} : vector<8x1024xf32> to vector<8x512xf32>
    %422 = arith.addf %420, %421 : vector<8x512xf32>
    %423 = vector.extract_strided_slice %422 {offsets = [0, 0], sizes = [8, 128], strides = [1, 1]} : vector<8x512xf32> to vector<8x128xf32>
    %424 = arith.negf %423 : vector<8x128xf32>
    %425 = math.exp %424 : vector<8x128xf32>
    %cst_74 = arith.constant 1.000000e+00 : f32
    %426 = vector.broadcast %cst_74 : f32 to vector<8x128xf32>
    %427 = arith.addf %426, %425 : vector<8x128xf32>
    %428 = arith.divf %426, %427 : vector<8x128xf32>
    %429 = vector.extract_strided_slice %422 {offsets = [0, 128], sizes = [8, 128], strides = [1, 1]} : vector<8x512xf32> to vector<8x128xf32>
    %430 = arith.negf %429 : vector<8x128xf32>
    %431 = math.exp %430 : vector<8x128xf32>
    %cst_75 = arith.constant 1.000000e+00 : f32
    %432 = vector.broadcast %cst_75 : f32 to vector<8x128xf32>
    %433 = arith.addf %432, %431 : vector<8x128xf32>
    %434 = arith.divf %432, %433 : vector<8x128xf32>
    %435 = vector.extract_strided_slice %422 {offsets = [0, 256], sizes = [8, 128], strides = [1, 1]} : vector<8x512xf32> to vector<8x128xf32>
    %436 = math.tanh %435 : vector<8x128xf32>
    %437 = vector.extract_strided_slice %422 {offsets = [0, 384], sizes = [8, 128], strides = [1, 1]} : vector<8x512xf32> to vector<8x128xf32>
    %438 = arith.negf %437 : vector<8x128xf32>
    %439 = math.exp %438 : vector<8x128xf32>
    %cst_76 = arith.constant 1.000000e+00 : f32
    %440 = vector.broadcast %cst_76 : f32 to vector<8x128xf32>
    %441 = arith.addf %440, %439 : vector<8x128xf32>
    %442 = arith.divf %440, %441 : vector<8x128xf32>
    %443 = arith.mulf %434, %386 : vector<8x128xf32>
    %444 = arith.mulf %428, %436 : vector<8x128xf32>
    %445 = arith.addf %443, %444 : vector<8x128xf32>
    %446 = math.tanh %445 : vector<8x128xf32>
    %447 = arith.mulf %442, %446 : vector<8x128xf32>
    %448 = arith.truncf %447 : vector<8x128xf32> to vector<8x128xbf16>
    %449 = tpu.concatenate %448, %419 in 1 : vector<8x128xbf16>, vector<8x128xbf16> -> vector<8x256xbf16>
    %cst_77 = arith.constant dense<0.000000e+00> : vector<8x1024xf32>
    %450 = tpu.matmul %449, %7, %cst_77 {dimension_numbers = #tpu.dot_dimension_numbers<[1], [0], [0], [1], [0, 0, 1, 1], [], []>} : vector<8x256xbf16>, vector<256x1024xbf16>, vector<8x1024xf32> -> vector<8x1024xf32>
    %451 = vector.extract_strided_slice %450 {offsets = [0, 512], sizes = [8, 512], strides = [1, 1]} : vector<8x1024xf32> to vector<8x512xf32>
    %452 = arith.addf %451, %11 : vector<8x512xf32>
    %453 = vector.extract_strided_slice %452 {offsets = [0, 0], sizes = [8, 128], strides = [1, 1]} : vector<8x512xf32> to vector<8x128xf32>
    %454 = arith.negf %453 : vector<8x128xf32>
    %455 = math.exp %454 : vector<8x128xf32>
    %cst_78 = arith.constant 1.000000e+00 : f32
    %456 = vector.broadcast %cst_78 : f32 to vector<8x128xf32>
    %457 = arith.addf %456, %455 : vector<8x128xf32>
    %458 = arith.divf %456, %457 : vector<8x128xf32>
    %459 = vector.extract_strided_slice %452 {offsets = [0, 128], sizes = [8, 128], strides = [1, 1]} : vector<8x512xf32> to vector<8x128xf32>
    %460 = arith.negf %459 : vector<8x128xf32>
    %461 = math.exp %460 : vector<8x128xf32>
    %cst_79 = arith.constant 1.000000e+00 : f32
    %462 = vector.broadcast %cst_79 : f32 to vector<8x128xf32>
    %463 = arith.addf %462, %461 : vector<8x128xf32>
    %464 = arith.divf %462, %463 : vector<8x128xf32>
    %465 = vector.extract_strided_slice %452 {offsets = [0, 256], sizes = [8, 128], strides = [1, 1]} : vector<8x512xf32> to vector<8x128xf32>
    %466 = math.tanh %465 : vector<8x128xf32>
    %467 = vector.extract_strided_slice %452 {offsets = [0, 384], sizes = [8, 128], strides = [1, 1]} : vector<8x512xf32> to vector<8x128xf32>
    %468 = arith.negf %467 : vector<8x128xf32>
    %469 = math.exp %468 : vector<8x128xf32>
    %cst_80 = arith.constant 1.000000e+00 : f32
    %470 = vector.broadcast %cst_80 : f32 to vector<8x128xf32>
    %471 = arith.addf %470, %469 : vector<8x128xf32>
    %472 = arith.divf %470, %471 : vector<8x128xf32>
    %473 = arith.mulf %464, %416 : vector<8x128xf32>
    %474 = arith.mulf %458, %466 : vector<8x128xf32>
    %475 = arith.addf %473, %474 : vector<8x128xf32>
    %476 = math.tanh %475 : vector<8x128xf32>
    %477 = arith.mulf %472, %476 : vector<8x128xf32>
    %478 = arith.truncf %477 : vector<8x128xf32> to vector<8x128xbf16>
    %cst_81 = arith.constant dense<0.000000e+00> : vector<8x128xf32>
    %479 = tpu.matmul %478, %8, %cst_81 {dimension_numbers = #tpu.dot_dimension_numbers<[1], [0], [0], [1], [0, 0, 1, 1], [], []>} : vector<8x128xbf16>, vector<128x128xbf16>, vector<8x128xf32> -> vector<8x128xf32>
    %480 = arith.addf %479, %14 : vector<8x128xf32>
    %c0_82 = arith.constant 0 : index
    %c0_83 = arith.constant 0 : index
    %481 = vector.load %arg7[%c0_82, %c0_83] : memref<8x128xf32, #tpu.memory_space<vmem>>, vector<8x128xf32>
    tpu.vector_store %arg7[%c0_82, %c0_83], %480 {strides = array<i32>} : memref<8x128xf32, #tpu.memory_space<vmem>>, vector<8x128xf32>,
    return
  }
}

</mosaic_0001>

<llo_original>
// kernel: lstm_model_forward.1
$region0: #{lstm_model_forward.1}
  #allocation0 [shape = 'u32[]', space=smem, size = 0x4, offset = 0x4, fixed_abs, tag = 'smem constant byte address 0x4 - core index']
  #allocation1 [shape = 'u32[144,128]{1,0:T(1,128)}', space=vmem, size = 0x12000, scoped, tag = 'internal scratch']
  #allocation2 [shape = 'f32[64,512]{1,0:T(8,128)}', space=vmem, size = 0x20000, scoped, tag = 'scratch operand']
  %s0 = inlined_call_operand.vmem [shape: bf16[64,21], index: 0, kind: input, shape index: {}]
  %s1 = inlined_call_operand.hbm [shape: bf16[21,512], index: 1, kind: input, shape index: {}]
  %s2 = inlined_call_operand.vmem [shape: f32[1,512], index: 2, kind: input, shape index: {}]
  %s3 = inlined_call_operand.hbm [shape: bf16[256,1024], index: 3, kind: input, shape index: {}]
  %s4 = inlined_call_operand.vmem [shape: f32[1,512], index: 4, kind: input, shape index: {}]
  %s5 = inlined_call_operand.vmem [shape: bf16[128,128], index: 5, kind: input, shape index: {}]
  %s6 = inlined_call_operand.vmem [shape: f32[1,128], index: 6, kind: input, shape index: {}]
  %s7 = inlined_call_operand.vmem [shape: f32[8,128], index: 7, kind: output, shape index: {}]
  %s8 = sld [smem:[#allocation0]]
  $region46: #{lstm_model_forward.1} parent=0
    _
  %s10 = ssub.s32 1, %s8
  %s11 = scalar_select 0, %s10, %s8
  $region1: #{lstm_model_forward.1} parent=0
    #allocation3 [shape = 'u8[24576]{0}', space=vmem, size = 0x6000, scoped, tag = 'input window, operand 1, single buffered']
    #allocation4 [shape = 's32[1]{0}', space=sflag, size = 0x4, scoped, tag = 'scoped memory for lstm_model_forward.1']
    #allocation5 [shape = 'u8[524288]{0}', space=vmem, size = 0x80000, scoped, tag = 'input window, operand 3, single buffered']
    #allocation6 [shape = 's32[1]{0}', space=sflag, size = 0x4, scoped, tag = 'scoped memory for lstm_model_forward.1']
    %12 = vsyncpa [#allocation4], 0
    %13 = vsyncpa [#allocation6], 0
    // Predicated region
    $region2: #{lstm_model_forward.1} parent=1 // pred_check
      _
    $region3: #{lstm_model_forward.1} parent=1 // pred_check_branch
      %15 = sbr.rel (0) target = $region5
    $region4: #{lstm_model_forward.1} parent=1 // pred_region
      _
    $region5: #{lstm_model_forward.1} parent=1 // pred_fallthru
      _
    // Predicated region
    $region6: #{lstm_model_forward.1} parent=1 // pred_check
      _
    $region7: #{lstm_model_forward.1} parent=1 // pred_check_branch
      %17 = sbr.rel (0) target = $region9
    $region8: #{lstm_model_forward.1} parent=1 // pred_region
      %s19 = ssub.s32 768, 768
      %20 = vsyncadd [#allocation4], %s19
      %s21 = sshll.u32 [#allocation3], 4
      %s22 = int_to_ptr.vmem [resolvable:$true] %s21
      %27 = dma.hbm_to_vmem [thread:$0]  %s1, 768, %s22, [#allocation4], 256, 256, 16
    $region9: #{lstm_model_forward.1} parent=1 // pred_fallthru
      _
    // Predicated region
    $region10: #{lstm_model_forward.1} parent=1 // pred_check
      _
    $region11: #{lstm_model_forward.1} parent=1 // pred_check_branch
      %29 = sbr.rel (0) target = $region13
    $region12: #{lstm_model_forward.1} parent=1 // pred_region
      _
    $region13: #{lstm_model_forward.1} parent=1 // pred_fallthru
      _
    // Predicated region
    $region14: #{lstm_model_forward.1} parent=1 // pred_check
      _
    $region15: #{lstm_model_forward.1} parent=1 // pred_check_branch
      %31 = sbr.rel (0) target = $region17
    $region16: #{lstm_model_forward.1} parent=1 // pred_region
      %s33 = ssub.s32 16384, 16384
      %34 = vsyncadd [#allocation6], %s33
      %s35 = sshll.u32 [#allocation5], 4
      %s36 = int_to_ptr.vmem [resolvable:$true] %s35
      %41 = dma.hbm_to_vmem [thread:$0]  %s3, 16384, %s36, [#allocation6], 512, 512, 32
    $region17: #{lstm_model_forward.1} parent=1 // pred_fallthru
      _
    // Predicated region
    $region18: #{lstm_model_forward.1} parent=1 // pred_check
      _
    $region19: #{lstm_model_forward.1} parent=1 // pred_check_branch
      %43 = sbr.rel (0) target = $region21
    $region20: #{lstm_model_forward.1} parent=1 // pred_region
      _
    $region21: #{lstm_model_forward.1} parent=1 // pred_fallthru
      _
    // Predicated region
    $region22: #{lstm_model_forward.1} parent=1 // pred_check
      _
    $region23: #{lstm_model_forward.1} parent=1 // pred_check_branch
      %45 = sbr.rel (0) target = $region25
    $region24: #{lstm_model_forward.1} parent=1 // pred_region
      _
    $region25: #{lstm_model_forward.1} parent=1 // pred_fallthru
      _
    // Predicated region
    $region26: #{lstm_model_forward.1} parent=1 // pred_check
      _
    $region27: #{lstm_model_forward.1} parent=1 // pred_check_branch
      %47 = sbr.rel (0) target = $region29
    $region28: #{lstm_model_forward.1} parent=1 // pred_region
      _
    $region29: #{lstm_model_forward.1} parent=1 // pred_fallthru
      _
    // Predicated region
    $region30: #{lstm_model_forward.1} parent=1 // pred_check
      _
    $region31: #{lstm_model_forward.1} parent=1 // pred_check_branch
      %49 = sbr.rel (0) target = $region33
    $region32: #{lstm_model_forward.1} parent=1 // pred_region
      %50 = dma.done [#allocation4], 768
    $region33: #{lstm_model_forward.1} parent=1 // pred_fallthru
      _
    // Predicated region
    $region34: #{lstm_model_forward.1} parent=1 // pred_check
      _
    $region35: #{lstm_model_forward.1} parent=1 // pred_check_branch
      %52 = sbr.rel (0) target = $region37
    $region36: #{lstm_model_forward.1} parent=1 // pred_region
      %53 = dma.done [#allocation6], 16384
    $region37: #{lstm_model_forward.1} parent=1 // pred_fallthru
      _
    %v55 = vld [vmem:[%s0] sm:$0xf]
    %v56 = vld [vmem:[%s0 + $0x4] sm:$0xf]
    %v57 = vld [vmem:[%s0 + $0x8] sm:$0xf]
    %v58 = vld [vmem:[%s0 + $0xc] sm:$0xf]
    %v59 = vld [vmem:[%s0 + $0x10] sm:$0xf]
    %v60 = vld [vmem:[%s0 + $0x14] sm:$0xf]
    %v61 = vld [vmem:[%s0 + $0x18] sm:$0xf]
    %v62 = vld [vmem:[%s0 + $0x1c] sm:$0xf]
    %v63 = vld [vmem:[#allocation3] sm:$0xff]
    %v64 = vld [vmem:[#allocation3 + $0x8] sm:$0xff]
    %v65 = vld [vmem:[#allocation3 + $0x10] sm:$0xff]
    %v66 = vld [vmem:[#allocation3 + $0x18] sm:$0xff]
    %v67 = vld [vmem:[#allocation3 + $0x20] sm:$0x77]
    %v68 = vld [vmem:[#allocation3 + $0x28] sm:$0x77]
    %v69 = vld [vmem:[%s2] sm:$0xf]
    %v71 = vlaneseq
    %v72 = vshrl.u32 %v71, 7
    %v73 = vsub.s32 0, %v72
    %v74 = vrot.slane %v69, %v73
    %v75 = vlaneseq
    %v76 = vshrl.u32 %v75, 7
    %v77 = vsub.s32 1, %v76
    %v78 = vrot.slane %v69, %v77
    %v79 = vlaneseq
    %v80 = vshrl.u32 %v79, 7
    %v81 = vsub.s32 2, %v80
    %v82 = vrot.slane %v69, %v81
    %v83 = vlaneseq
    %v84 = vshrl.u32 %v83, 7
    %v85 = vsub.s32 3, %v84
    %v86 = vrot.slane %v69, %v85
    %v99 = vunpack.c.l.b16 %v55
    %v100 = vunpack.c.l.b16 %v56
    %v101 = vunpack.c.l.b16 %v57
    %v102 = vunpack.c.l.b16 %v58
    %v103 = vunpack.c.l.b16 %v59
    %v104 = vunpack.c.l.b16 %v60
    %v105 = vunpack.c.l.b16 %v61
    %v106 = vunpack.c.l.b16 %v62
    %v107 = vpack.c.b16 %v100, %v99
    %v108 = vpack.c.b16 %v102, %v101
    %v109 = vpack.c.b16 %v104, %v103
    %v110 = vpack.c.b16 %v106, %v105
    %v117 = vunpack.c.l.b16 %v63
    %v118 = vunpack.c.h.b16 %v63
    %v119 = vunpack.c.l.b16 %v64
    %v120 = vunpack.c.h.b16 %v64
    %v121 = vunpack.c.l.b16 %v65
    %v122 = vunpack.c.h.b16 %v65
    %v123 = vunpack.c.l.b16 %v66
    %v124 = vunpack.c.h.b16 %v66
    %v125 = vunpack.c.l.b16 %v67
    %v126 = vunpack.c.h.b16 %v67
    %v127 = vunpack.c.l.b16 %v68
    %v128 = vunpack.c.h.b16 %v68
    %v129 = vpack.c.b16 %v121, %v117
    %v130 = vpack.c.b16 %v122, %v118
    %v131 = vpack.c.b16 %v123, %v119
    %v132 = vpack.c.b16 %v124, %v120
    %v133 = vpack.c.b16 %v125, %v125
    %v134 = vpack.c.b16 %v126, %v126
    %v135 = vpack.c.b16 %v127, %v127
    %v136 = vpack.c.b16 %v128, %v128
    %vm141 = vcmask 171008
    %v143 = vsel %vm141, %v107, 0
    %v146 = vsel %vm141, %v108, 0
    %v149 = vsel %vm141, %v109, 0
    %v152 = vsel %vm141, %v110, 0
    %vm154 = vcmask 1041408
    %vm155 = vcmask 1042432
    %v156 = vsel %vm154, 4294967295, 65535
    %v157 = vsel %vm155, %v156, 0
    %v159 = vand.u32 %v133, %v157
    %v162 = vand.u32 %v134, %v157
    %v165 = vand.u32 %v135, %v157
    %v168 = vand.u32 %v136, %v157
    %170 = vmatprep.subr.bf16.mxu0 0
    %171 = vmatpush1.bf16.msra.mxu0 0
    %172 = vmatprep.subr.bf16.mxu0 0
    %173 = vmatpush1.bf16.msra.mxu0 0
    %174 = vmatprep.subr.bf16.mxu0 0
    %175 = vmatpush1.bf16.msra.mxu0 0
    %176 = vmatprep.subr.bf16.mxu0 0
    %177 = vmatpush1.bf16.msra.mxu0 0
    %178 = vmatprep.subr.bf16.mxu0 0
    %179 = vmatpush1.bf16.msra.mxu0 0
    %180 = vmatprep.subr.bf16.mxu0 0
    %181 = vmatpush1.bf16.msra.mxu0 0
    %182 = vmatprep.subr.bf16.mxu0 %v162
    %183 = vmatpush1.bf16.msra.mxu0 %v159
    %184 = vmatprep.subr.bf16.mxu0 %v130
    %185 = vmatpush1.bf16.msra.mxu0 %v129
    %186 = vmatprep.subr.bf16.mxu0 0
    %187 = vmatpush2.bf16.msra.mxu0 0
    %188 = vmatprep.subr.bf16.mxu0 0
    %189 = vmatpush2.bf16.msra.mxu0 0
    %190 = vmatprep.subr.bf16.mxu0 0
    %191 = vmatpush2.bf16.msra.mxu0 0
    %192 = vmatprep.subr.bf16.mxu0 0
    %193 = vmatpush2.bf16.msra.mxu0 0
    %194 = vmatprep.subr.bf16.mxu0 0
    %195 = vmatpush2.bf16.msra.mxu0 0
    %196 = vmatprep.subr.bf16.mxu0 0
    %197 = vmatpush2.bf16.msra.mxu0 0
    %198 = vmatprep.subr.bf16.mxu0 0
    %199 = vmatpush2.bf16.msra.mxu0 0
    %200 = vmatprep.subr.bf16.mxu0 0
    %201 = vmatpush2.bf16.msra.mxu0 0
    %202 = vmatprep.mubr.bf16.mxu0 0
    %203 = vmatmul.mubr.bf16.gmra.mxu0 %v143
    %v204 = vpop.f32.mrf.mxu0
    %v205 = vadd.f32 %v74, %v204
    %v206 = vpop.f32.mrf.mxu0
    %v207 = vadd.f32 %v78, %v206
    %v208 = vpop.f32.mrf.mxu0
    %v209 = vadd.f32 %v74, %v208
    %v210 = vpop.f32.mrf.mxu0
    %v211 = vadd.f32 %v78, %v210
    %212 = vmatprep.mubr.bf16.mxu0 0
    %213 = vmatmul.mubr.bf16.gmra.mxu0 %v146
    %v214 = vpop.f32.mrf.mxu0
    %v215 = vadd.f32 %v74, %v214
    %v216 = vpop.f32.mrf.mxu0
    %v217 = vadd.f32 %v78, %v216
    %v218 = vpop.f32.mrf.mxu0
    %v219 = vadd.f32 %v74, %v218
    %v220 = vpop.f32.mrf.mxu0
    %v221 = vadd.f32 %v78, %v220
    %222 = vmatprep.mubr.bf16.mxu0 0
    %223 = vmatmul.mubr.bf16.gmra.mxu0 %v149
    %v224 = vpop.f32.mrf.mxu0
    %v225 = vadd.f32 %v74, %v224
    %v226 = vpop.f32.mrf.mxu0
    %v227 = vadd.f32 %v78, %v226
    %v228 = vpop.f32.mrf.mxu0
    %v229 = vadd.f32 %v74, %v228
    %v230 = vpop.f32.mrf.mxu0
    %v231 = vadd.f32 %v78, %v230
    %232 = vmatprep.mubr.bf16.mxu0 0
    %233 = vmatmul.mubr.bf16.gmra.mxu0 %v152
    %v234 = vpop.f32.mrf.mxu0
    %v235 = vadd.f32 %v74, %v234
    %v236 = vpop.f32.mrf.mxu0
    %v237 = vadd.f32 %v78, %v236
    %v238 = vpop.f32.mrf.mxu0
    %v239 = vadd.f32 %v74, %v238
    %v240 = vpop.f32.mrf.mxu0
    %v241 = vadd.f32 %v78, %v240
    %242 = vdwg.mxu0
    %243 = vmatprep.subr.bf16.mxu0 0
    %244 = vmatpush1.bf16.msra.mxu0 0
    %245 = vmatprep.subr.bf16.mxu0 0
    %246 = vmatpush1.bf16.msra.mxu0 0
    %247 = vmatprep.subr.bf16.mxu0 0
    %248 = vmatpush1.bf16.msra.mxu0 0
    %249 = vmatprep.subr.bf16.mxu0 0
    %250 = vmatpush1.bf16.msra.mxu0 0
    %251 = vmatprep.subr.bf16.mxu0 0
    %252 = vmatpush1.bf16.msra.mxu0 0
    %253 = vmatprep.subr.bf16.mxu0 0
    %254 = vmatpush1.bf16.msra.mxu0 0
    %255 = vmatprep.subr.bf16.mxu0 %v168
    %256 = vmatpush1.bf16.msra.mxu0 %v165
    %257 = vmatprep.subr.bf16.mxu0 %v132
    %258 = vmatpush1.bf16.msra.mxu0 %v131
    %259 = vmatprep.subr.bf16.mxu0 0
    %260 = vmatpush2.bf16.msra.mxu0 0
    %261 = vmatprep.subr.bf16.mxu0 0
    %262 = vmatpush2.bf16.msra.mxu0 0
    %263 = vmatprep.subr.bf16.mxu0 0
    %264 = vmatpush2.bf16.msra.mxu0 0
    %265 = vmatprep.subr.bf16.mxu0 0
    %266 = vmatpush2.bf16.msra.mxu0 0
    %267 = vmatprep.subr.bf16.mxu0 0
    %268 = vmatpush2.bf16.msra.mxu0 0
    %269 = vmatprep.subr.bf16.mxu0 0
    %270 = vmatpush2.bf16.msra.mxu0 0
    %271 = vmatprep.subr.bf16.mxu0 0
    %272 = vmatpush2.bf16.msra.mxu0 0
    %273 = vmatprep.subr.bf16.mxu0 0
    %274 = vmatpush2.bf16.msra.mxu0 0
    %275 = vmatprep.mubr.bf16.mxu0 0
    %276 = vmatmul.mubr.bf16.gmra.mxu0 %v143
    %v277 = vpop.f32.mrf.mxu0
    %v278 = vadd.f32 %v82, %v277
    %v279 = vpop.f32.mrf.mxu0
    %v280 = vadd.f32 %v86, %v279
    %v281 = vpop.f32.mrf.mxu0
    %v282 = vadd.f32 %v82, %v281
    %v283 = vpop.f32.mrf.mxu0
    %v284 = vadd.f32 %v86, %v283
    %285 = vmatprep.mubr.bf16.mxu0 0
    %286 = vmatmul.mubr.bf16.gmra.mxu0 %v146
    %v287 = vpop.f32.mrf.mxu0
    %v288 = vadd.f32 %v82, %v287
    %v289 = vpop.f32.mrf.mxu0
    %v290 = vadd.f32 %v86, %v289
    %v291 = vpop.f32.mrf.mxu0
    %v292 = vadd.f32 %v82, %v291
    %v293 = vpop.f32.mrf.mxu0
    %v294 = vadd.f32 %v86, %v293
    %295 = vmatprep.mubr.bf16.mxu0 0
    %296 = vmatmul.mubr.bf16.gmra.mxu0 %v149
    %v297 = vpop.f32.mrf.mxu0
    %v298 = vadd.f32 %v82, %v297
    %v299 = vpop.f32.mrf.mxu0
    %v300 = vadd.f32 %v86, %v299
    %v301 = vpop.f32.mrf.mxu0
    %v302 = vadd.f32 %v82, %v301
    %v303 = vpop.f32.mrf.mxu0
    %v304 = vadd.f32 %v86, %v303
    %305 = vmatprep.mubr.bf16.mxu0 0
    %306 = vmatmul.mubr.bf16.gmra.mxu0 %v152
    %v307 = vpop.f32.mrf.mxu0
    %v308 = vadd.f32 %v82, %v307
    %v309 = vpop.f32.mrf.mxu0
    %v310 = vadd.f32 %v86, %v309
    %v311 = vpop.f32.mrf.mxu0
    %v312 = vadd.f32 %v82, %v311
    %v313 = vpop.f32.mrf.mxu0
    %v314 = vadd.f32 %v86, %v313
    %315 = vdwg.mxu0
    %316 = vst [vmem:[#allocation2] sm:$0xff] %v205
    %317 = vst [vmem:[#allocation2 + $0x8] sm:$0xff] %v207
    %318 = vst [vmem:[#allocation2 + $0x10] sm:$0xff] %v278
    %319 = vst [vmem:[#allocation2 + $0x18] sm:$0xff] %v280
    %320 = vst [vmem:[#allocation2 + $0x20] sm:$0xff] %v209
    %321 = vst [vmem:[#allocation2 + $0x28] sm:$0xff] %v211
    %322 = vst [vmem:[#allocation2 + $0x30] sm:$0xff] %v282
    %323 = vst [vmem:[#allocation2 + $0x38] sm:$0xff] %v284
    %324 = vst [vmem:[#allocation2 + $0x40] sm:$0xff] %v215
    %325 = vst [vmem:[#allocation2 + $0x48] sm:$0xff] %v217
    %326 = vst [vmem:[#allocation2 + $0x50] sm:$0xff] %v288
    %327 = vst [vmem:[#allocation2 + $0x58] sm:$0xff] %v290
    %328 = vst [vmem:[#allocation2 + $0x60] sm:$0xff] %v219
    %329 = vst [vmem:[#allocation2 + $0x68] sm:$0xff] %v221
    %330 = vst [vmem:[#allocation2 + $0x70] sm:$0xff] %v292
    %331 = vst [vmem:[#allocation2 + $0x78] sm:$0xff] %v294
    %332 = vst [vmem:[#allocation2 + $0x80] sm:$0xff] %v225
    %333 = vst [vmem:[#allocation2 + $0x88] sm:$0xff] %v227
    %334 = vst [vmem:[#allocation2 + $0x90] sm:$0xff] %v298
    %335 = vst [vmem:[#allocation2 + $0x98] sm:$0xff] %v300
    %336 = vst [vmem:[#allocation2 + $0xa0] sm:$0xff] %v229
    %337 = vst [vmem:[#allocation2 + $0xa8] sm:$0xff] %v231
    %338 = vst [vmem:[#allocation2 + $0xb0] sm:$0xff] %v302
    %339 = vst [vmem:[#allocation2 + $0xb8] sm:$0xff] %v304
    %340 = vst [vmem:[#allocation2 + $0xc0] sm:$0xff] %v235
    %341 = vst [vmem:[#allocation2 + $0xc8] sm:$0xff] %v237
    %342 = vst [vmem:[#allocation2 + $0xd0] sm:$0xff] %v308
    %343 = vst [vmem:[#allocation2 + $0xd8] sm:$0xff] %v310
    %344 = vst [vmem:[#allocation2 + $0xe0] sm:$0xff] %v239
    %345 = vst [vmem:[#allocation2 + $0xe8] sm:$0xff] %v241
    %346 = vst [vmem:[#allocation2 + $0xf0] sm:$0xff] %v312
    %347 = vst [vmem:[#allocation2 + $0xf8] sm:$0xff] %v314
    %v348 = vld [vmem:[#allocation5] sm:$0xff]
    %v349 = vld [vmem:[#allocation5 + $0x8] sm:$0xff]
    %v350 = vld [vmem:[#allocation5 + $0x10] sm:$0xff]
    %v351 = vld [vmem:[#allocation5 + $0x18] sm:$0xff]
    %v352 = vld [vmem:[#allocation5 + $0x20] sm:$0xff]
    %v353 = vld [vmem:[#allocation5 + $0x28] sm:$0xff]
    %v354 = vld [vmem:[#allocation5 + $0x30] sm:$0xff]
    %v355 = vld [vmem:[#allocation5 + $0x38] sm:$0xff]
    %v356 = vld [vmem:[#allocation5 + $0x40] sm:$0xff]
    %v357 = vld [vmem:[#allocation5 + $0x48] sm:$0xff]
    %v358 = vld [vmem:[#allocation5 + $0x50] sm:$0xff]
    %v359 = vld [vmem:[#allocation5 + $0x58] sm:$0xff]
    %v360 = vld [vmem:[#allocation5 + $0x60] sm:$0xff]
    %v361 = vld [vmem:[#allocation5 + $0x68] sm:$0xff]
    %v362 = vld [vmem:[#allocation5 + $0x70] sm:$0xff]
    %v363 = vld [vmem:[#allocation5 + $0x78] sm:$0xff]
    %v364 = vld [vmem:[#allocation5 + $0x80] sm:$0xff]
    %v365 = vld [vmem:[#allocation5 + $0x88] sm:$0xff]
    %v366 = vld [vmem:[#allocation5 + $0x90] sm:$0xff]
    %v367 = vld [vmem:[#allocation5 + $0x98] sm:$0xff]
    %v368 = vld [vmem:[#allocation5 + $0xa0] sm:$0xff]
    %v369 = vld [vmem:[#allocation5 + $0xa8] sm:$0xff]
    %v370 = vld [vmem:[#allocation5 + $0xb0] sm:$0xff]
    %v371 = vld [vmem:[#allocation5 + $0xb8] sm:$0xff]
    %v372 = vld [vmem:[#allocation5 + $0xc0] sm:$0xff]
    %v373 = vld [vmem:[#allocation5 + $0xc8] sm:$0xff]
    %v374 = vld [vmem:[#allocation5 + $0xd0] sm:$0xff]
    %v375 = vld [vmem:[#allocation5 + $0xd8] sm:$0xff]
    %v376 = vld [vmem:[#allocation5 + $0xe0] sm:$0xff]
    %v377 = vld [vmem:[#allocation5 + $0xe8] sm:$0xff]
    %v378 = vld [vmem:[#allocation5 + $0xf0] sm:$0xff]
    %v379 = vld [vmem:[#allocation5 + $0xf8] sm:$0xff]
    %v380 = vld [vmem:[#allocation5 + $0x100] sm:$0xff]
    %v381 = vld [vmem:[#allocation5 + $0x108] sm:$0xff]
    %v382 = vld [vmem:[#allocation5 + $0x110] sm:$0xff]
    %v383 = vld [vmem:[#allocation5 + $0x118] sm:$0xff]
    %v384 = vld [vmem:[#allocation5 + $0x120] sm:$0xff]
    %v385 = vld [vmem:[#allocation5 + $0x128] sm:$0xff]
    %v386 = vld [vmem:[#allocation5 + $0x130] sm:$0xff]
    %v387 = vld [vmem:[#allocation5 + $0x138] sm:$0xff]
    %v388 = vld [vmem:[#allocation5 + $0x140] sm:$0xff]
    %v389 = vld [vmem:[#allocation5 + $0x148] sm:$0xff]
    %v390 = vld [vmem:[#allocation5 + $0x150] sm:$0xff]
    %v391 = vld [vmem:[#allocation5 + $0x158] sm:$0xff]
    %v392 = vld [vmem:[#allocation5 + $0x160] sm:$0xff]
    %v393 = vld [vmem:[#allocation5 + $0x168] sm:$0xff]
    %v394 = vld [vmem:[#allocation5 + $0x170] sm:$0xff]
    %v395 = vld [vmem:[#allocation5 + $0x178] sm:$0xff]
    %v396 = vld [vmem:[#allocation5 + $0x180] sm:$0xff]
    %v397 = vld [vmem:[#allocation5 + $0x188] sm:$0xff]
    %v398 = vld [vmem:[#allocation5 + $0x190] sm:$0xff]
    %v399 = vld [vmem:[#allocation5 + $0x198] sm:$0xff]
    %v400 = vld [vmem:[#allocation5 + $0x1a0] sm:$0xff]
    %v401 = vld [vmem:[#allocation5 + $0x1a8] sm:$0xff]
    %v402 = vld [vmem:[#allocation5 + $0x1b0] sm:$0xff]
    %v403 = vld [vmem:[#allocation5 + $0x1b8] sm:$0xff]
    %v404 = vld [vmem:[#allocation5 + $0x1c0] sm:$0xff]
    %v405 = vld [vmem:[#allocation5 + $0x1c8] sm:$0xff]
    %v406 = vld [vmem:[#allocation5 + $0x1d0] sm:$0xff]
    %v407 = vld [vmem:[#allocation5 + $0x1d8] sm:$0xff]
    %v408 = vld [vmem:[#allocation5 + $0x1e0] sm:$0xff]
    %v409 = vld [vmem:[#allocation5 + $0x1e8] sm:$0xff]
    %v410 = vld [vmem:[#allocation5 + $0x1f0] sm:$0xff]
    %v411 = vld [vmem:[#allocation5 + $0x1f8] sm:$0xff]
    %v412 = vld [vmem:[#allocation5 + $0x200] sm:$0xff]
    %v413 = vld [vmem:[#allocation5 + $0x208] sm:$0xff]
    %v414 = vld [vmem:[#allocation5 + $0x210] sm:$0xff]
    %v415 = vld [vmem:[#allocation5 + $0x218] sm:$0xff]
    %v416 = vld [vmem:[#allocation5 + $0x220] sm:$0xff]
    %v417 = vld [vmem:[#allocation5 + $0x228] sm:$0xff]
    %v418 = vld [vmem:[#allocation5 + $0x230] sm:$0xff]
    %v419 = vld [vmem:[#allocation5 + $0x238] sm:$0xff]
    %v420 = vld [vmem:[#allocation5 + $0x240] sm:$0xff]
    %v421 = vld [vmem:[#allocation5 + $0x248] sm:$0xff]
    %v422 = vld [vmem:[#allocation5 + $0x250] sm:$0xff]
    %v423 = vld [vmem:[#allocation5 + $0x258] sm:$0xff]
    %v424 = vld [vmem:[#allocation5 + $0x260] sm:$0xff]
    %v425 = vld [vmem:[#allocation5 + $0x268] sm:$0xff]
    %v426 = vld [vmem:[#allocation5 + $0x270] sm:$0xff]
    %v427 = vld [vmem:[#allocation5 + $0x278] sm:$0xff]
    %v428 = vld [vmem:[#allocation5 + $0x280] sm:$0xff]
    %v429 = vld [vmem:[#allocation5 + $0x288] sm:$0xff]
    %v430 = vld [vmem:[#allocation5 + $0x290] sm:$0xff]
    %v431 = vld [vmem:[#allocation5 + $0x298] sm:$0xff]
    %v432 = vld [vmem:[#allocation5 + $0x2a0] sm:$0xff]
    %v433 = vld [vmem:[#allocation5 + $0x2a8] sm:$0xff]
    %v434 = vld [vmem:[#allocation5 + $0x2b0] sm:$0xff]
    %v435 = vld [vmem:[#allocation5 + $0x2b8] sm:$0xff]
    %v436 = vld [vmem:[#allocation5 + $0x2c0] sm:$0xff]
    %v437 = vld [vmem:[#allocation5 + $0x2c8] sm:$0xff]
    %v438 = vld [vmem:[#allocation5 + $0x2d0] sm:$0xff]
    %v439 = vld [vmem:[#allocation5 + $0x2d8] sm:$0xff]
    %v440 = vld [vmem:[#allocation5 + $0x2e0] sm:$0xff]
    %v441 = vld [vmem:[#allocation5 + $0x2e8] sm:$0xff]
    %v442 = vld [vmem:[#allocation5 + $0x2f0] sm:$0xff]
    %v443 = vld [vmem:[#allocation5 + $0x2f8] sm:$0xff]
    %v444 = vld [vmem:[#allocation5 + $0x300] sm:$0xff]
    %v445 = vld [vmem:[#allocation5 + $0x308] sm:$0xff]
    %v446 = vld [vmem:[#allocation5 + $0x310] sm:$0xff]
    %v447 = vld [vmem:[#allocation5 + $0x318] sm:$0xff]
    %v448 = vld [vmem:[#allocation5 + $0x320] sm:$0xff]
    %v449 = vld [vmem:[#allocation5 + $0x328] sm:$0xff]
    %v450 = vld [vmem:[#allocation5 + $0x330] sm:$0xff]
    %v451 = vld [vmem:[#allocation5 + $0x338] sm:$0xff]
    %v452 = vld [vmem:[#allocation5 + $0x340] sm:$0xff]
    %v453 = vld [vmem:[#allocation5 + $0x348] sm:$0xff]
    %v454 = vld [vmem:[#allocation5 + $0x350] sm:$0xff]
    %v455 = vld [vmem:[#allocation5 + $0x358] sm:$0xff]
    %v456 = vld [vmem:[#allocation5 + $0x360] sm:$0xff]
    %v457 = vld [vmem:[#allocation5 + $0x368] sm:$0xff]
    %v458 = vld [vmem:[#allocation5 + $0x370] sm:$0xff]
    %v459 = vld [vmem:[#allocation5 + $0x378] sm:$0xff]
    %v460 = vld [vmem:[#allocation5 + $0x380] sm:$0xff]
    %v461 = vld [vmem:[#allocation5 + $0x388] sm:$0xff]
    %v462 = vld [vmem:[#allocation5 + $0x390] sm:$0xff]
    %v463 = vld [vmem:[#allocation5 + $0x398] sm:$0xff]
    %v464 = vld [vmem:[#allocation5 + $0x3a0] sm:$0xff]
    %v465 = vld [vmem:[#allocation5 + $0x3a8] sm:$0xff]
    %v466 = vld [vmem:[#allocation5 + $0x3b0] sm:$0xff]
    %v467 = vld [vmem:[#allocation5 + $0x3b8] sm:$0xff]
    %v468 = vld [vmem:[#allocation5 + $0x3c0] sm:$0xff]
    %v469 = vld [vmem:[#allocation5 + $0x3c8] sm:$0xff]
    %v470 = vld [vmem:[#allocation5 + $0x3d0] sm:$0xff]
    %v471 = vld [vmem:[#allocation5 + $0x3d8] sm:$0xff]
    %v472 = vld [vmem:[#allocation5 + $0x3e0] sm:$0xff]
    %v473 = vld [vmem:[#allocation5 + $0x3e8] sm:$0xff]
    %v474 = vld [vmem:[#allocation5 + $0x3f0] sm:$0xff]
    %v475 = vld [vmem:[#allocation5 + $0x3f8] sm:$0xff]
    %v476 = vld [vmem:[%s5] sm:$0xf]
    %v477 = vld [vmem:[%s5 + $0x4] sm:$0xf]
    %v478 = vld [vmem:[%s5 + $0x8] sm:$0xf]
    %v479 = vld [vmem:[%s5 + $0xc] sm:$0xf]
    %v480 = vld [vmem:[%s5 + $0x10] sm:$0xf]
    %v481 = vld [vmem:[%s5 + $0x14] sm:$0xf]
    %v482 = vld [vmem:[%s5 + $0x18] sm:$0xf]
    %v483 = vld [vmem:[%s5 + $0x1c] sm:$0xf]
    %v484 = vld [vmem:[%s5 + $0x20] sm:$0xf]
    %v485 = vld [vmem:[%s5 + $0x24] sm:$0xf]
    %v486 = vld [vmem:[%s5 + $0x28] sm:$0xf]
    %v487 = vld [vmem:[%s5 + $0x2c] sm:$0xf]
    %v488 = vld [vmem:[%s5 + $0x30] sm:$0xf]
    %v489 = vld [vmem:[%s5 + $0x34] sm:$0xf]
    %v490 = vld [vmem:[%s5 + $0x38] sm:$0xf]
    %v491 = vld [vmem:[%s5 + $0x3c] sm:$0xf]
    %v492 = vld [vmem:[%s4] sm:$0xf]
    %v494 = vlaneseq
    %v495 = vshrl.u32 %v494, 7
    %v496 = vsub.s32 0, %v495
    %v497 = vrot.slane %v492, %v496
    %v498 = vlaneseq
    %v499 = vshrl.u32 %v498, 7
    %v500 = vsub.s32 1, %v499
    %v501 = vrot.slane %v492, %v500
    %v502 = vlaneseq
    %v503 = vshrl.u32 %v502, 7
    %v504 = vsub.s32 2, %v503
    %v505 = vrot.slane %v492, %v504
    %v506 = vlaneseq
    %v507 = vshrl.u32 %v506, 7
    %v508 = vsub.s32 3, %v507
    %v509 = vrot.slane %v492, %v508
    %v514 = vld [vmem:[%s6] sm:$0x1]
    %v516 = vlaneseq
    %v517 = vshrl.u32 %v516, 7
    %v518 = vsub.s32 0, %v517
    %v519 = vrot.slane %v514, %v518
    %v521 = vld [vmem:[#allocation2] sm:$0xff]
    %v522 = vld [vmem:[#allocation2 + $0x10] sm:$0xff]
    %v523 = vld [vmem:[#allocation2 + $0x18] sm:$0xff]
    %v524 = vxor.u32 %v521, 2147483648
    %v525 = vmul.f32 %v524, 1.442695
    %v526 = vpow.pop %v525
    %v527 = vadd.f32 %v526, 1.0
    %v528 = vrcp.pop %v527
    %v529 = vmul.f32 1.0, %v528
    %v530 = vtanh.pop %v522
    %v531 = vxor.u32 %v523, 2147483648
    %v532 = vmul.f32 %v531, 1.442695
    %v533 = vpow.pop %v532
    %v534 = vadd.f32 %v533, 1.0
    %v535 = vrcp.pop %v534
    %v536 = vmul.f32 1.0, %v535
    %v537 = vmul.f32 %v529, %v530
    %v538 = vtanh.pop %v537
    %v539 = vmul.f32 %v536, %v538
    %v540 = vpack.c.bf16 %v539, %v539
    %v669 = vunpack.c.l.b16 %v348
    %v670 = vunpack.c.h.b16 %v348
    %v671 = vunpack.c.l.b16 %v349
    %v672 = vunpack.c.h.b16 %v349
    %v673 = vunpack.c.l.b16 %v350
    %v674 = vunpack.c.h.b16 %v350
    %v675 = vunpack.c.l.b16 %v351
    %v676 = vunpack.c.h.b16 %v351
    %v677 = vunpack.c.l.b16 %v352
    %v678 = vunpack.c.h.b16 %v352
    %v679 = vunpack.c.l.b16 %v353
    %v680 = vunpack.c.h.b16 %v353
    %v681 = vunpack.c.l.b16 %v354
    %v682 = vunpack.c.h.b16 %v354
    %v683 = vunpack.c.l.b16 %v355
    %v684 = vunpack.c.h.b16 %v355
    %v685 = vunpack.c.l.b16 %v356
    %v686 = vunpack.c.h.b16 %v356
    %v687 = vunpack.c.l.b16 %v357
    %v688 = vunpack.c.h.b16 %v357
    %v689 = vunpack.c.l.b16 %v358
    %v690 = vunpack.c.h.b16 %v358
    %v691 = vunpack.c.l.b16 %v359
    %v692 = vunpack.c.h.b16 %v359
    %v693 = vunpack.c.l.b16 %v360
    %v694 = vunpack.c.h.b16 %v360
    %v695 = vunpack.c.l.b16 %v361
    %v696 = vunpack.c.h.b16 %v361
    %v697 = vunpack.c.l.b16 %v362
    %v698 = vunpack.c.h.b16 %v362
    %v699 = vunpack.c.l.b16 %v363
    %v700 = vunpack.c.h.b16 %v363
    %v701 = vunpack.c.l.b16 %v364
    %v702 = vunpack.c.h.b16 %v364
    %v703 = vunpack.c.l.b16 %v365
    %v704 = vunpack.c.h.b16 %v365
    %v705 = vunpack.c.l.b16 %v366
    %v706 = vunpack.c.h.b16 %v366
    %v707 = vunpack.c.l.b16 %v367
    %v708 = vunpack.c.h.b16 %v367
    %v709 = vunpack.c.l.b16 %v368
    %v710 = vunpack.c.h.b16 %v368
    %v711 = vunpack.c.l.b16 %v369
    %v712 = vunpack.c.h.b16 %v369
    %v713 = vunpack.c.l.b16 %v370
    %v714 = vunpack.c.h.b16 %v370
    %v715 = vunpack.c.l.b16 %v371
    %v716 = vunpack.c.h.b16 %v371
    %v717 = vunpack.c.l.b16 %v372
    %v718 = vunpack.c.h.b16 %v372
    %v719 = vunpack.c.l.b16 %v373
    %v720 = vunpack.c.h.b16 %v373
    %v721 = vunpack.c.l.b16 %v374
    %v722 = vunpack.c.h.b16 %v374
    %v723 = vunpack.c.l.b16 %v375
    %v724 = vunpack.c.h.b16 %v375
    %v725 = vunpack.c.l.b16 %v376
    %v726 = vunpack.c.h.b16 %v376
    %v727 = vunpack.c.l.b16 %v377
    %v728 = vunpack.c.h.b16 %v377
    %v729 = vunpack.c.l.b16 %v378
    %v730 = vunpack.c.h.b16 %v378
    %v731 = vunpack.c.l.b16 %v379
    %v732 = vunpack.c.h.b16 %v379
    %v733 = vunpack.c.l.b16 %v380
    %v734 = vunpack.c.h.b16 %v380
    %v735 = vunpack.c.l.b16 %v381
    %v736 = vunpack.c.h.b16 %v381
    %v737 = vunpack.c.l.b16 %v382
    %v738 = vunpack.c.h.b16 %v382
    %v739 = vunpack.c.l.b16 %v383
    %v740 = vunpack.c.h.b16 %v383
    %v741 = vunpack.c.l.b16 %v384
    %v742 = vunpack.c.h.b16 %v384
    %v743 = vunpack.c.l.b16 %v385
    %v744 = vunpack.c.h.b16 %v385
    %v745 = vunpack.c.l.b16 %v386
    %v746 = vunpack.c.h.b16 %v386
    %v747 = vunpack.c.l.b16 %v387
    %v748 = vunpack.c.h.b16 %v387
    %v749 = vunpack.c.l.b16 %v388
    %v750 = vunpack.c.h.b16 %v388
    %v751 = vunpack.c.l.b16 %v389
    %v752 = vunpack.c.h.b16 %v389
    %v753 = vunpack.c.l.b16 %v390
    %v754 = vunpack.c.h.b16 %v390
    %v755 = vunpack.c.l.b16 %v391
    %v756 = vunpack.c.h.b16 %v391
    %v757 = vunpack.c.l.b16 %v392
    %v758 = vunpack.c.h.b16 %v392
    %v759 = vunpack.c.l.b16 %v393
    %v760 = vunpack.c.h.b16 %v393
    %v761 = vunpack.c.l.b16 %v394
    %v762 = vunpack.c.h.b16 %v394
    %v763 = vunpack.c.l.b16 %v395
    %v764 = vunpack.c.h.b16 %v395
    %v765 = vunpack.c.l.b16 %v396
    %v766 = vunpack.c.h.b16 %v396
    %v767 = vunpack.c.l.b16 %v397
    %v768 = vunpack.c.h.b16 %v397
    %v769 = vunpack.c.l.b16 %v398
    %v770 = vunpack.c.h.b16 %v398
    %v771 = vunpack.c.l.b16 %v399
    %v772 = vunpack.c.h.b16 %v399
    %v773 = vunpack.c.l.b16 %v400
    %v774 = vunpack.c.h.b16 %v400
    %v775 = vunpack.c.l.b16 %v401
    %v776 = vunpack.c.h.b16 %v401
    %v777 = vunpack.c.l.b16 %v402
    %v778 = vunpack.c.h.b16 %v402
    %v779 = vunpack.c.l.b16 %v403
    %v780 = vunpack.c.h.b16 %v403
    %v781 = vunpack.c.l.b16 %v404
    %v782 = vunpack.c.h.b16 %v404
    %v783 = vunpack.c.l.b16 %v405
    %v784 = vunpack.c.h.b16 %v405
    %v785 = vunpack.c.l.b16 %v406
    %v786 = vunpack.c.h.b16 %v406
    %v787 = vunpack.c.l.b16 %v407
    %v788 = vunpack.c.h.b16 %v407
    %v789 = vunpack.c.l.b16 %v408
    %v790 = vunpack.c.h.b16 %v408
    %v791 = vunpack.c.l.b16 %v409
    %v792 = vunpack.c.h.b16 %v409
    %v793 = vunpack.c.l.b16 %v410
    %v794 = vunpack.c.h.b16 %v410
    %v795 = vunpack.c.l.b16 %v411
    %v796 = vunpack.c.h.b16 %v411
    %v797 = vunpack.c.l.b16 %v412
    %v798 = vunpack.c.h.b16 %v412
    %v799 = vunpack.c.l.b16 %v413
    %v800 = vunpack.c.h.b16 %v413
    %v801 = vunpack.c.l.b16 %v414
    %v802 = vunpack.c.h.b16 %v414
    %v803 = vunpack.c.l.b16 %v415
    %v804 = vunpack.c.h.b16 %v415
    %v805 = vunpack.c.l.b16 %v416
    %v806 = vunpack.c.h.b16 %v416
    %v807 = vunpack.c.l.b16 %v417
    %v808 = vunpack.c.h.b16 %v417
    %v809 = vunpack.c.l.b16 %v418
    %v810 = vunpack.c.h.b16 %v418
    %v811 = vunpack.c.l.b16 %v419
    %v812 = vunpack.c.h.b16 %v419
    %v813 = vunpack.c.l.b16 %v420
    %v814 = vunpack.c.h.b16 %v420
    %v815 = vunpack.c.l.b16 %v421
    %v816 = vunpack.c.h.b16 %v421
    %v817 = vunpack.c.l.b16 %v422
    %v818 = vunpack.c.h.b16 %v422
    %v819 = vunpack.c.l.b16 %v423
    %v820 = vunpack.c.h.b16 %v423
    %v821 = vunpack.c.l.b16 %v424
    %v822 = vunpack.c.h.b16 %v424
    %v823 = vunpack.c.l.b16 %v425
    %v824 = vunpack.c.h.b16 %v425
    %v825 = vunpack.c.l.b16 %v426
    %v826 = vunpack.c.h.b16 %v426
    %v827 = vunpack.c.l.b16 %v427
    %v828 = vunpack.c.h.b16 %v427
    %v829 = vunpack.c.l.b16 %v428
    %v830 = vunpack.c.h.b16 %v428
    %v831 = vunpack.c.l.b16 %v429
    %v832 = vunpack.c.h.b16 %v429
    %v833 = vunpack.c.l.b16 %v430
    %v834 = vunpack.c.h.b16 %v430
    %v835 = vunpack.c.l.b16 %v431
    %v836 = vunpack.c.h.b16 %v431
    %v837 = vunpack.c.l.b16 %v432
    %v838 = vunpack.c.h.b16 %v432
    %v839 = vunpack.c.l.b16 %v433
    %v840 = vunpack.c.h.b16 %v433
    %v841 = vunpack.c.l.b16 %v434
    %v842 = vunpack.c.h.b16 %v434
    %v843 = vunpack.c.l.b16 %v435
    %v844 = vunpack.c.h.b16 %v435
    %v845 = vunpack.c.l.b16 %v436
    %v846 = vunpack.c.h.b16 %v436
    %v847 = vunpack.c.l.b16 %v437
    %v848 = vunpack.c.h.b16 %v437
    %v849 = vunpack.c.l.b16 %v438
    %v850 = vunpack.c.h.b16 %v438
    %v851 = vunpack.c.l.b16 %v439
    %v852 = vunpack.c.h.b16 %v439
    %v853 = vunpack.c.l.b16 %v440
    %v854 = vunpack.c.h.b16 %v440
    %v855 = vunpack.c.l.b16 %v441
    %v856 = vunpack.c.h.b16 %v441
    %v857 = vunpack.c.l.b16 %v442
    %v858 = vunpack.c.h.b16 %v442
    %v859 = vunpack.c.l.b16 %v443
    %v860 = vunpack.c.h.b16 %v443
    %v861 = vunpack.c.l.b16 %v444
    %v862 = vunpack.c.h.b16 %v444
    %v863 = vunpack.c.l.b16 %v445
    %v864 = vunpack.c.h.b16 %v445
    %v865 = vunpack.c.l.b16 %v446
    %v866 = vunpack.c.h.b16 %v446
    %v867 = vunpack.c.l.b16 %v447
    %v868 = vunpack.c.h.b16 %v447
    %v869 = vunpack.c.l.b16 %v448
    %v870 = vunpack.c.h.b16 %v448
    %v871 = vunpack.c.l.b16 %v449
    %v872 = vunpack.c.h.b16 %v449
    %v873 = vunpack.c.l.b16 %v450
    %v874 = vunpack.c.h.b16 %v450
    %v875 = vunpack.c.l.b16 %v451
    %v876 = vunpack.c.h.b16 %v451
    %v877 = vunpack.c.l.b16 %v452
    %v878 = vunpack.c.h.b16 %v452
    %v879 = vunpack.c.l.b16 %v453
    %v880 = vunpack.c.h.b16 %v453
    %v881 = vunpack.c.l.b16 %v454
    %v882 = vunpack.c.h.b16 %v454
    %v883 = vunpack.c.l.b16 %v455
    %v884 = vunpack.c.h.b16 %v455
    %v885 = vunpack.c.l.b16 %v456
    %v886 = vunpack.c.h.b16 %v456
    %v887 = vunpack.c.l.b16 %v457
    %v888 = vunpack.c.h.b16 %v457
    %v889 = vunpack.c.l.b16 %v458
    %v890 = vunpack.c.h.b16 %v458
    %v891 = vunpack.c.l.b16 %v459
    %v892 = vunpack.c.h.b16 %v459
    %v893 = vunpack.c.l.b16 %v460
    %v894 = vunpack.c.h.b16 %v460
    %v895 = vunpack.c.l.b16 %v461
    %v896 = vunpack.c.h.b16 %v461
    %v897 = vunpack.c.l.b16 %v462
    %v898 = vunpack.c.h.b16 %v462
    %v899 = vunpack.c.l.b16 %v463
    %v900 = vunpack.c.h.b16 %v463
    %v901 = vunpack.c.l.b16 %v464
    %v902 = vunpack.c.h.b16 %v464
    %v903 = vunpack.c.l.b16 %v465
    %v904 = vunpack.c.h.b16 %v465
    %v905 = vunpack.c.l.b16 %v466
    %v906 = vunpack.c.h.b16 %v466
    %v907 = vunpack.c.l.b16 %v467
    %v908 = vunpack.c.h.b16 %v467
    %v909 = vunpack.c.l.b16 %v468
    %v910 = vunpack.c.h.b16 %v468
    %v911 = vunpack.c.l.b16 %v469
    %v912 = vunpack.c.h.b16 %v469
    %v913 = vunpack.c.l.b16 %v470
    %v914 = vunpack.c.h.b16 %v470
    %v915 = vunpack.c.l.b16 %v471
    %v916 = vunpack.c.h.b16 %v471
    %v917 = vunpack.c.l.b16 %v472
    %v918 = vunpack.c.h.b16 %v472
    %v919 = vunpack.c.l.b16 %v473
    %v920 = vunpack.c.h.b16 %v473
    %v921 = vunpack.c.l.b16 %v474
    %v922 = vunpack.c.h.b16 %v474
    %v923 = vunpack.c.l.b16 %v475
    %v924 = vunpack.c.h.b16 %v475
    %v925 = vpack.c.b16 %v677, %v669
    %v926 = vpack.c.b16 %v678, %v670
    %v927 = vpack.c.b16 %v679, %v671
    %v928 = vpack.c.b16 %v680, %v672
    %v929 = vpack.c.b16 %v681, %v673
    %v930 = vpack.c.b16 %v682, %v674
    %v931 = vpack.c.b16 %v683, %v675
    %v932 = vpack.c.b16 %v684, %v676
    %v933 = vpack.c.b16 %v693, %v685
    %v934 = vpack.c.b16 %v694, %v686
    %v935 = vpack.c.b16 %v695, %v687
    %v936 = vpack.c.b16 %v696, %v688
    %v937 = vpack.c.b16 %v697, %v689
    %v938 = vpack.c.b16 %v698, %v690
    %v939 = vpack.c.b16 %v699, %v691
    %v940 = vpack.c.b16 %v700, %v692
    %v941 = vpack.c.b16 %v709, %v701
    %v942 = vpack.c.b16 %v710, %v702
    %v943 = vpack.c.b16 %v711, %v703
    %v944 = vpack.c.b16 %v712, %v704
    %v945 = vpack.c.b16 %v713, %v705
    %v946 = vpack.c.b16 %v714, %v706
    %v947 = vpack.c.b16 %v715, %v707
    %v948 = vpack.c.b16 %v716, %v708
    %v949 = vpack.c.b16 %v725, %v717
    %v950 = vpack.c.b16 %v726, %v718
    %v951 = vpack.c.b16 %v727, %v719
    %v952 = vpack.c.b16 %v728, %v720
    %v953 = vpack.c.b16 %v729, %v721
    %v954 = vpack.c.b16 %v730, %v722
    %v955 = vpack.c.b16 %v731, %v723
    %v956 = vpack.c.b16 %v732, %v724
    %v957 = vpack.c.b16 %v741, %v733
    %v958 = vpack.c.b16 %v742, %v734
    %v959 = vpack.c.b16 %v743, %v735
    %v960 = vpack.c.b16 %v744, %v736
    %v961 = vpack.c.b16 %v745, %v737
    %v962 = vpack.c.b16 %v746, %v738
    %v963 = vpack.c.b16 %v747, %v739
    %v964 = vpack.c.b16 %v748, %v740
    %v965 = vpack.c.b16 %v757, %v749
    %v966 = vpack.c.b16 %v758, %v750
    %v967 = vpack.c.b16 %v759, %v751
    %v968 = vpack.c.b16 %v760, %v752
    %v969 = vpack.c.b16 %v761, %v753
    %v970 = vpack.c.b16 %v762, %v754
    %v971 = vpack.c.b16 %v763, %v755
    %v972 = vpack.c.b16 %v764, %v756
    %v973 = vpack.c.b16 %v773, %v765
    %v974 = vpack.c.b16 %v774, %v766
    %v975 = vpack.c.b16 %v775, %v767
    %v976 = vpack.c.b16 %v776, %v768
    %v977 = vpack.c.b16 %v777, %v769
    %v978 = vpack.c.b16 %v778, %v770
    %v979 = vpack.c.b16 %v779, %v771
    %v980 = vpack.c.b16 %v780, %v772
    %v981 = vpack.c.b16 %v789, %v781
    %v982 = vpack.c.b16 %v790, %v782
    %v983 = vpack.c.b16 %v791, %v783
    %v984 = vpack.c.b16 %v792, %v784
    %v985 = vpack.c.b16 %v793, %v785
    %v986 = vpack.c.b16 %v794, %v786
    %v987 = vpack.c.b16 %v795, %v787
    %v988 = vpack.c.b16 %v796, %v788
    %v989 = vpack.c.b16 %v805, %v797
    %v990 = vpack.c.b16 %v806, %v798
    %v991 = vpack.c.b16 %v807, %v799
    %v992 = vpack.c.b16 %v808, %v800
    %v993 = vpack.c.b16 %v809, %v801
    %v994 = vpack.c.b16 %v810, %v802
    %v995 = vpack.c.b16 %v811, %v803
    %v996 = vpack.c.b16 %v812, %v804
    %v997 = vpack.c.b16 %v821, %v813
    %v998 = vpack.c.b16 %v822, %v814
    %v999 = vpack.c.b16 %v823, %v815
    %v1000 = vpack.c.b16 %v824, %v816
    %v1001 = vpack.c.b16 %v825, %v817
    %v1002 = vpack.c.b16 %v826, %v818
    %v1003 = vpack.c.b16 %v827, %v819
    %v1004 = vpack.c.b16 %v828, %v820
    %v1005 = vpack.c.b16 %v837, %v829
    %v1006 = vpack.c.b16 %v838, %v830
    %v1007 = vpack.c.b16 %v839, %v831
    %v1008 = vpack.c.b16 %v840, %v832
    %v1009 = vpack.c.b16 %v841, %v833
    %v1010 = vpack.c.b16 %v842, %v834
    %v1011 = vpack.c.b16 %v843, %v835
    %v1012 = vpack.c.b16 %v844, %v836
    %v1013 = vpack.c.b16 %v853, %v845
    %v1014 = vpack.c.b16 %v854, %v846
    %v1015 = vpack.c.b16 %v855, %v847
    %v1016 = vpack.c.b16 %v856, %v848
    %v1017 = vpack.c.b16 %v857, %v849
    %v1018 = vpack.c.b16 %v858, %v850
    %v1019 = vpack.c.b16 %v859, %v851
    %v1020 = vpack.c.b16 %v860, %v852
    %v1021 = vpack.c.b16 %v869, %v861
    %v1022 = vpack.c.b16 %v870, %v862
    %v1023 = vpack.c.b16 %v871, %v863
    %v1024 = vpack.c.b16 %v872, %v864
    %v1025 = vpack.c.b16 %v873, %v865
    %v1026 = vpack.c.b16 %v874, %v866
    %v1027 = vpack.c.b16 %v875, %v867
    %v1028 = vpack.c.b16 %v876, %v868
    %v1029 = vpack.c.b16 %v885, %v877
    %v1030 = vpack.c.b16 %v886, %v878
    %v1031 = vpack.c.b16 %v887, %v879
    %v1032 = vpack.c.b16 %v888, %v880
    %v1033 = vpack.c.b16 %v889, %v881
    %v1034 = vpack.c.b16 %v890, %v882
    %v1035 = vpack.c.b16 %v891, %v883
    %v1036 = vpack.c.b16 %v892, %v884
    %v1037 = vpack.c.b16 %v901, %v893
    %v1038 = vpack.c.b16 %v902, %v894
    %v1039 = vpack.c.b16 %v903, %v895
    %v1040 = vpack.c.b16 %v904, %v896
    %v1041 = vpack.c.b16 %v905, %v897
    %v1042 = vpack.c.b16 %v906, %v898
    %v1043 = vpack.c.b16 %v907, %v899
    %v1044 = vpack.c.b16 %v908, %v900
    %v1045 = vpack.c.b16 %v917, %v909
    %v1046 = vpack.c.b16 %v918, %v910
    %v1047 = vpack.c.b16 %v919, %v911
    %v1048 = vpack.c.b16 %v920, %v912
    %v1049 = vpack.c.b16 %v921, %v913
    %v1050 = vpack.c.b16 %v922, %v914
    %v1051 = vpack.c.b16 %v923, %v915
    %v1052 = vpack.c.b16 %v924, %v916
    %1181 = vmatprep.subr.bf16.mxu0 %v982
    %1182 = vmatpush1.bf16.msra.mxu0 %v981
    %1183 = vmatprep.subr.bf16.mxu0 %v974
    %1184 = vmatpush1.bf16.msra.mxu0 %v973
    %1185 = vmatprep.subr.bf16.mxu0 %v966
    %1186 = vmatpush1.bf16.msra.mxu0 %v965
    %1187 = vmatprep.subr.bf16.mxu0 %v958
    %1188 = vmatpush1.bf16.msra.mxu0 %v957
    %1189 = vmatprep.subr.bf16.mxu0 %v950
    %1190 = vmatpush1.bf16.msra.mxu0 %v949
    %1191 = vmatprep.subr.bf16.mxu0 %v942
    %1192 = vmatpush1.bf16.msra.mxu0 %v941
    %1193 = vmatprep.subr.bf16.mxu0 %v934
    %1194 = vmatpush1.bf16.msra.mxu0 %v933
    %1195 = vmatprep.subr.bf16.mxu0 %v926
    %1196 = vmatpush1.bf16.msra.mxu0 %v925
    %1197 = vmatprep.subr.bf16.mxu0 %v1046
    %1198 = vmatpush2.bf16.msra.mxu0 %v1045
    %1199 = vmatprep.subr.bf16.mxu0 %v1038
    %1200 = vmatpush2.bf16.msra.mxu0 %v1037
    %1201 = vmatprep.subr.bf16.mxu0 %v1030
    %1202 = vmatpush2.bf16.msra.mxu0 %v1029
    %1203 = vmatprep.subr.bf16.mxu0 %v1022
    %1204 = vmatpush2.bf16.msra.mxu0 %v1021
    %1205 = vmatprep.subr.bf16.mxu0 %v1014
    %1206 = vmatpush2.bf16.msra.mxu0 %v1013
    %1207 = vmatprep.subr.bf16.mxu0 %v1006
    %1208 = vmatpush2.bf16.msra.mxu0 %v1005
    %1209 = vmatprep.subr.bf16.mxu0 %v998
    %1210 = vmatpush2.bf16.msra.mxu0 %v997
    %1211 = vmatprep.subr.bf16.mxu0 %v990
    %1212 = vmatpush2.bf16.msra.mxu0 %v989
    %1213 = vmatprep.mubr.bf16.mxu0 0
    %1214 = vmatmul.mubr.bf16.gmra.mxu0 %v540
    %v1215 = vpop.f32.mrf.mxu0
    %v1216 = vadd.f32 0.0, %v1215
    %v1217 = vpop.f32.mrf.mxu0
    %v1218 = vadd.f32 0.0, %v1217
    %v1219 = vpop.f32.mrf.mxu0
    %v1220 = vpop.f32.mrf.mxu0
    %1221 = vdwg.mxu0
    %1222 = vmatprep.subr.bf16.mxu0 %v984
    %1223 = vmatpush1.bf16.msra.mxu0 %v983
    %1224 = vmatprep.subr.bf16.mxu0 %v976
    %1225 = vmatpush1.bf16.msra.mxu0 %v975
    %1226 = vmatprep.subr.bf16.mxu0 %v968
    %1227 = vmatpush1.bf16.msra.mxu0 %v967
    %1228 = vmatprep.subr.bf16.mxu0 %v960
    %1229 = vmatpush1.bf16.msra.mxu0 %v959
    %1230 = vmatprep.subr.bf16.mxu0 %v952
    %1231 = vmatpush1.bf16.msra.mxu0 %v951
    %1232 = vmatprep.subr.bf16.mxu0 %v944
    %1233 = vmatpush1.bf16.msra.mxu0 %v943
    %1234 = vmatprep.subr.bf16.mxu0 %v936
    %1235 = vmatpush1.bf16.msra.mxu0 %v935
    %1236 = vmatprep.subr.bf16.mxu0 %v928
    %1237 = vmatpush1.bf16.msra.mxu0 %v927
    %1238 = vmatprep.subr.bf16.mxu0 %v1048
    %1239 = vmatpush2.bf16.msra.mxu0 %v1047
    %1240 = vmatprep.subr.bf16.mxu0 %v1040
    %1241 = vmatpush2.bf16.msra.mxu0 %v1039
    %1242 = vmatprep.subr.bf16.mxu0 %v1032
    %1243 = vmatpush2.bf16.msra.mxu0 %v1031
    %1244 = vmatprep.subr.bf16.mxu0 %v1024
    %1245 = vmatpush2.bf16.msra.mxu0 %v1023
    %1246 = vmatprep.subr.bf16.mxu0 %v1016
    %1247 = vmatpush2.bf16.msra.mxu0 %v1015
    %1248 = vmatprep.subr.bf16.mxu0 %v1008
    %1249 = vmatpush2.bf16.msra.mxu0 %v1007
    %1250 = vmatprep.subr.bf16.mxu0 %v1000
    %1251 = vmatpush2.bf16.msra.mxu0 %v999
    %1252 = vmatprep.subr.bf16.mxu0 %v992
    %1253 = vmatpush2.bf16.msra.mxu0 %v991
    %1254 = vmatprep.mubr.bf16.mxu0 0
    %1255 = vmatmul.mubr.bf16.gmra.mxu0 %v540
    %v1256 = vpop.f32.mrf.mxu0
    %v1257 = vadd.f32 0.0, %v1256
    %v1258 = vpop.f32.mrf.mxu0
    %v1259 = vadd.f32 0.0, %v1258
    %v1260 = vpop.f32.mrf.mxu0
    %v1261 = vpop.f32.mrf.mxu0
    %1262 = vdwg.mxu0
    %1263 = vmatprep.subr.bf16.mxu0 %v986
    %1264 = vmatpush1.bf16.msra.mxu0 %v985
    %1265 = vmatprep.subr.bf16.mxu0 %v978
    %1266 = vmatpush1.bf16.msra.mxu0 %v977
    %1267 = vmatprep.subr.bf16.mxu0 %v970
    %1268 = vmatpush1.bf16.msra.mxu0 %v969
    %1269 = vmatprep.subr.bf16.mxu0 %v962
    %1270 = vmatpush1.bf16.msra.mxu0 %v961
    %1271 = vmatprep.subr.bf16.mxu0 %v954
    %1272 = vmatpush1.bf16.msra.mxu0 %v953
    %1273 = vmatprep.subr.bf16.mxu0 %v946
    %1274 = vmatpush1.bf16.msra.mxu0 %v945
    %1275 = vmatprep.subr.bf16.mxu0 %v938
    %1276 = vmatpush1.bf16.msra.mxu0 %v937
    %1277 = vmatprep.subr.bf16.mxu0 %v930
    %1278 = vmatpush1.bf16.msra.mxu0 %v929
    %1279 = vmatprep.subr.bf16.mxu0 %v1050
    %1280 = vmatpush2.bf16.msra.mxu0 %v1049
    %1281 = vmatprep.subr.bf16.mxu0 %v1042
    %1282 = vmatpush2.bf16.msra.mxu0 %v1041
    %1283 = vmatprep.subr.bf16.mxu0 %v1034
    %1284 = vmatpush2.bf16.msra.mxu0 %v1033
    %1285 = vmatprep.subr.bf16.mxu0 %v1026
    %1286 = vmatpush2.bf16.msra.mxu0 %v1025
    %1287 = vmatprep.subr.bf16.mxu0 %v1018
    %1288 = vmatpush2.bf16.msra.mxu0 %v1017
    %1289 = vmatprep.subr.bf16.mxu0 %v1010
    %1290 = vmatpush2.bf16.msra.mxu0 %v1009
    %1291 = vmatprep.subr.bf16.mxu0 %v1002
    %1292 = vmatpush2.bf16.msra.mxu0 %v1001
    %1293 = vmatprep.subr.bf16.mxu0 %v994
    %1294 = vmatpush2.bf16.msra.mxu0 %v993
    %1295 = vmatprep.mubr.bf16.mxu0 0
    %1296 = vmatmul.mubr.bf16.gmra.mxu0 %v540
    %v1297 = vpop.f32.mrf.mxu0
    %v1298 = vadd.f32 0.0, %v1297
    %v1299 = vpop.f32.mrf.mxu0
    %v1300 = vadd.f32 0.0, %v1299
    %v1301 = vpop.f32.mrf.mxu0
    %v1302 = vpop.f32.mrf.mxu0
    %1303 = vdwg.mxu0
    %1304 = vmatprep.subr.bf16.mxu0 %v988
    %1305 = vmatpush1.bf16.msra.mxu0 %v987
    %1306 = vmatprep.subr.bf16.mxu0 %v980
    %1307 = vmatpush1.bf16.msra.mxu0 %v979
    %1308 = vmatprep.subr.bf16.mxu0 %v972
    %1309 = vmatpush1.bf16.msra.mxu0 %v971
    %1310 = vmatprep.subr.bf16.mxu0 %v964
    %1311 = vmatpush1.bf16.msra.mxu0 %v963
    %1312 = vmatprep.subr.bf16.mxu0 %v956
    %1313 = vmatpush1.bf16.msra.mxu0 %v955
    %1314 = vmatprep.subr.bf16.mxu0 %v948
    %1315 = vmatpush1.bf16.msra.mxu0 %v947
    %1316 = vmatprep.subr.bf16.mxu0 %v940
    %1317 = vmatpush1.bf16.msra.mxu0 %v939
    %1318 = vmatprep.subr.bf16.mxu0 %v932
    %1319 = vmatpush1.bf16.msra.mxu0 %v931
    %1320 = vmatprep.subr.bf16.mxu0 %v1052
    %1321 = vmatpush2.bf16.msra.mxu0 %v1051
    %1322 = vmatprep.subr.bf16.mxu0 %v1044
    %1323 = vmatpush2.bf16.msra.mxu0 %v1043
    %1324 = vmatprep.subr.bf16.mxu0 %v1036
    %1325 = vmatpush2.bf16.msra.mxu0 %v1035
    %1326 = vmatprep.subr.bf16.mxu0 %v1028
    %1327 = vmatpush2.bf16.msra.mxu0 %v1027
    %1328 = vmatprep.subr.bf16.mxu0 %v1020
    %1329 = vmatpush2.bf16.msra.mxu0 %v1019
    %1330 = vmatprep.subr.bf16.mxu0 %v1012
    %1331 = vmatpush2.bf16.msra.mxu0 %v1011
    %1332 = vmatprep.subr.bf16.mxu0 %v1004
    %1333 = vmatpush2.bf16.msra.mxu0 %v1003
    %1334 = vmatprep.subr.bf16.mxu0 %v996
    %1335 = vmatpush2.bf16.msra.mxu0 %v995
    %1336 = vmatprep.mubr.bf16.mxu0 0
    %1337 = vmatmul.mubr.bf16.gmra.mxu0 %v540
    %v1338 = vpop.f32.mrf.mxu0
    %v1339 = vadd.f32 0.0, %v1338
    %v1340 = vpop.f32.mrf.mxu0
    %v1341 = vadd.f32 0.0, %v1340
    %v1342 = vpop.f32.mrf.mxu0
    %v1343 = vpop.f32.mrf.mxu0
    %1344 = vdwg.mxu0
    %v1345 = vadd.f32 %v1298, %v497
    %v1346 = vadd.f32 %v1300, %v501
    %v1347 = vadd.f32 %v1339, %v505
    %v1348 = vadd.f32 %v1341, %v509
    %v1349 = vxor.u32 %v1345, 2147483648
    %v1350 = vmul.f32 %v1349, 1.442695
    %v1351 = vpow.pop %v1350
    %v1352 = vadd.f32 %v1351, 1.0
    %v1353 = vrcp.pop %v1352
    %v1354 = vmul.f32 1.0, %v1353
    %v1355 = vxor.u32 %v1346, 2147483648
    %v1356 = vmul.f32 %v1355, 1.442695
    %v1357 = vpow.pop %v1356
    %v1358 = vadd.f32 %v1357, 1.0
    %v1359 = vrcp.pop %v1358
    %v1360 = vmul.f32 1.0, %v1359
    %v1361 = vtanh.pop %v1347
    %v1362 = vxor.u32 %v1348, 2147483648
    %v1363 = vmul.f32 %v1362, 1.442695
    %v1364 = vpow.pop %v1363
    %v1365 = vadd.f32 %v1364, 1.0
    %v1366 = vrcp.pop %v1365
    %v1367 = vmul.f32 1.0, %v1366
    %v1368 = vmul.f32 %v1360, 0.0
    %v1369 = vmul.f32 %v1354, %v1361
    %v1370 = vadd.f32 %v1368, %v1369
    %v1371 = vtanh.pop %v1370
    %v1372 = vmul.f32 %v1367, %v1371
    %v1373 = vpack.c.bf16 %v1372, %v1372
    %v1374 = vld [vmem:[#allocation2 + $0x20] sm:$0xff]
    %v1375 = vld [vmem:[#allocation2 + $0x28] sm:$0xff]
    %v1376 = vld [vmem:[#allocation2 + $0x30] sm:$0xff]
    %v1377 = vld [vmem:[#allocation2 + $0x38] sm:$0xff]
    %v1378 = vadd.f32 %v1374, %v1216
    %v1379 = vadd.f32 %v1375, %v1218
    %v1380 = vadd.f32 %v1376, %v1257
    %v1381 = vadd.f32 %v1377, %v1259
    %v1382 = vxor.u32 %v1378, 2147483648
    %v1383 = vmul.f32 %v1382, 1.442695
    %v1384 = vpow.pop %v1383
    %v1385 = vadd.f32 %v1384, 1.0
    %v1386 = vrcp.pop %v1385
    %v1387 = vmul.f32 1.0, %v1386
    %v1388 = vxor.u32 %v1379, 2147483648
    %v1389 = vmul.f32 %v1388, 1.442695
    %v1390 = vpow.pop %v1389
    %v1391 = vadd.f32 %v1390, 1.0
    %v1392 = vrcp.pop %v1391
    %v1393 = vmul.f32 1.0, %v1392
    %v1394 = vtanh.pop %v1380
    %v1395 = vxor.u32 %v1381, 2147483648
    %v1396 = vmul.f32 %v1395, 1.442695
    %v1397 = vpow.pop %v1396
    %v1398 = vadd.f32 %v1397, 1.0
    %v1399 = vrcp.pop %v1398
    %v1400 = vmul.f32 1.0, %v1399
    %v1401 = vmul.f32 %v1393, %v537
    %v1402 = vmul.f32 %v1387, %v1394
    %v1403 = vadd.f32 %v1401, %v1402
    %v1404 = vtanh.pop %v1403
    %v1405 = vmul.f32 %v1400, %v1404
    %v1406 = vpack.c.bf16 %v1405, %v1405
    %1407 = vmatprep.subr.bf16.mxu0 %v982
    %1408 = vmatpush1.bf16.msra.mxu0 %v981
    %1409 = vmatprep.subr.bf16.mxu0 %v974
    %1410 = vmatpush1.bf16.msra.mxu0 %v973
    %1411 = vmatprep.subr.bf16.mxu0 %v966
    %1412 = vmatpush1.bf16.msra.mxu0 %v965
    %1413 = vmatprep.subr.bf16.mxu0 %v958
    %1414 = vmatpush1.bf16.msra.mxu0 %v957
    %1415 = vmatprep.subr.bf16.mxu0 %v950
    %1416 = vmatpush1.bf16.msra.mxu0 %v949
    %1417 = vmatprep.subr.bf16.mxu0 %v942
    %1418 = vmatpush1.bf16.msra.mxu0 %v941
    %1419 = vmatprep.subr.bf16.mxu0 %v934
    %1420 = vmatpush1.bf16.msra.mxu0 %v933
    %1421 = vmatprep.subr.bf16.mxu0 %v926
    %1422 = vmatpush1.bf16.msra.mxu0 %v925
    %1423 = vmatprep.subr.bf16.mxu0 %v1046
    %1424 = vmatpush2.bf16.msra.mxu0 %v1045
    %1425 = vmatprep.subr.bf16.mxu0 %v1038
    %1426 = vmatpush2.bf16.msra.mxu0 %v1037
    %1427 = vmatprep.subr.bf16.mxu0 %v1030
    %1428 = vmatpush2.bf16.msra.mxu0 %v1029
    %1429 = vmatprep.subr.bf16.mxu0 %v1022
    %1430 = vmatpush2.bf16.msra.mxu0 %v1021
    %1431 = vmatprep.subr.bf16.mxu0 %v1014
    %1432 = vmatpush2.bf16.msra.mxu0 %v1013
    %1433 = vmatprep.subr.bf16.mxu0 %v1006
    %1434 = vmatpush2.bf16.msra.mxu0 %v1005
    %1435 = vmatprep.subr.bf16.mxu0 %v998
    %1436 = vmatpush2.bf16.msra.mxu0 %v997
    %1437 = vmatprep.subr.bf16.mxu0 %v990
    %1438 = vmatpush2.bf16.msra.mxu0 %v989
    %1439 = vmatprep.mubr.bf16.mxu0 %v1373
    %1440 = vmatmul.mubr.bf16.gmra.mxu0 %v1406
    %v1441 = vpop.f32.mrf.mxu0
    %v1442 = vadd.f32 0.0, %v1441
    %v1443 = vpop.f32.mrf.mxu0
    %v1444 = vadd.f32 0.0, %v1443
    %v1445 = vpop.f32.mrf.mxu0
    %v1446 = vpop.f32.mrf.mxu0
    %1447 = vdwg.mxu0
    %1448 = vmatprep.subr.bf16.mxu0 %v984
    %1449 = vmatpush1.bf16.msra.mxu0 %v983
    %1450 = vmatprep.subr.bf16.mxu0 %v976
    %1451 = vmatpush1.bf16.msra.mxu0 %v975
    %1452 = vmatprep.subr.bf16.mxu0 %v968
    %1453 = vmatpush1.bf16.msra.mxu0 %v967
    %1454 = vmatprep.subr.bf16.mxu0 %v960
    %1455 = vmatpush1.bf16.msra.mxu0 %v959
    %1456 = vmatprep.subr.bf16.mxu0 %v952
    %1457 = vmatpush1.bf16.msra.mxu0 %v951
    %1458 = vmatprep.subr.bf16.mxu0 %v944
    %1459 = vmatpush1.bf16.msra.mxu0 %v943
    %1460 = vmatprep.subr.bf16.mxu0 %v936
    %1461 = vmatpush1.bf16.msra.mxu0 %v935
    %1462 = vmatprep.subr.bf16.mxu0 %v928
    %1463 = vmatpush1.bf16.msra.mxu0 %v927
    %1464 = vmatprep.subr.bf16.mxu0 %v1048
    %1465 = vmatpush2.bf16.msra.mxu0 %v1047
    %1466 = vmatprep.subr.bf16.mxu0 %v1040
    %1467 = vmatpush2.bf16.msra.mxu0 %v1039
    %1468 = vmatprep.subr.bf16.mxu0 %v1032
    %1469 = vmatpush2.bf16.msra.mxu0 %v1031
    %1470 = vmatprep.subr.bf16.mxu0 %v1024
    %1471 = vmatpush2.bf16.msra.mxu0 %v1023
    %1472 = vmatprep.subr.bf16.mxu0 %v1016
    %1473 = vmatpush2.bf16.msra.mxu0 %v1015
    %1474 = vmatprep.subr.bf16.mxu0 %v1008
    %1475 = vmatpush2.bf16.msra.mxu0 %v1007
    %1476 = vmatprep.subr.bf16.mxu0 %v1000
    %1477 = vmatpush2.bf16.msra.mxu0 %v999
    %1478 = vmatprep.subr.bf16.mxu0 %v992
    %1479 = vmatpush2.bf16.msra.mxu0 %v991
    %1480 = vmatprep.mubr.bf16.mxu0 %v1373
    %1481 = vmatmul.mubr.bf16.gmra.mxu0 %v1406
    %v1482 = vpop.f32.mrf.mxu0
    %v1483 = vadd.f32 0.0, %v1482
    %v1484 = vpop.f32.mrf.mxu0
    %v1485 = vadd.f32 0.0, %v1484
    %v1486 = vpop.f32.mrf.mxu0
    %v1487 = vpop.f32.mrf.mxu0
    %1488 = vdwg.mxu0
    %1489 = vmatprep.subr.bf16.mxu0 %v986
    %1490 = vmatpush1.bf16.msra.mxu0 %v985
    %1491 = vmatprep.subr.bf16.mxu0 %v978
    %1492 = vmatpush1.bf16.msra.mxu0 %v977
    %1493 = vmatprep.subr.bf16.mxu0 %v970
    %1494 = vmatpush1.bf16.msra.mxu0 %v969
    %1495 = vmatprep.subr.bf16.mxu0 %v962
    %1496 = vmatpush1.bf16.msra.mxu0 %v961
    %1497 = vmatprep.subr.bf16.mxu0 %v954
    %1498 = vmatpush1.bf16.msra.mxu0 %v953
    %1499 = vmatprep.subr.bf16.mxu0 %v946
    %1500 = vmatpush1.bf16.msra.mxu0 %v945
    %1501 = vmatprep.subr.bf16.mxu0 %v938
    %1502 = vmatpush1.bf16.msra.mxu0 %v937
    %1503 = vmatprep.subr.bf16.mxu0 %v930
    %1504 = vmatpush1.bf16.msra.mxu0 %v929
    %1505 = vmatprep.subr.bf16.mxu0 %v1050
    %1506 = vmatpush2.bf16.msra.mxu0 %v1049
    %1507 = vmatprep.subr.bf16.mxu0 %v1042
    %1508 = vmatpush2.bf16.msra.mxu0 %v1041
    %1509 = vmatprep.subr.bf16.mxu0 %v1034
    %1510 = vmatpush2.bf16.msra.mxu0 %v1033
    %1511 = vmatprep.subr.bf16.mxu0 %v1026
    %1512 = vmatpush2.bf16.msra.mxu0 %v1025
    %1513 = vmatprep.subr.bf16.mxu0 %v1018
    %1514 = vmatpush2.bf16.msra.mxu0 %v1017
    %1515 = vmatprep.subr.bf16.mxu0 %v1010
    %1516 = vmatpush2.bf16.msra.mxu0 %v1009
    %1517 = vmatprep.subr.bf16.mxu0 %v1002
    %1518 = vmatpush2.bf16.msra.mxu0 %v1001
    %1519 = vmatprep.subr.bf16.mxu0 %v994
    %1520 = vmatpush2.bf16.msra.mxu0 %v993
    %1521 = vmatprep.mubr.bf16.mxu0 %v1373
    %1522 = vmatmul.mubr.bf16.gmra.mxu0 %v1406
    %v1523 = vpop.f32.mrf.mxu0
    %v1524 = vadd.f32 0.0, %v1523
    %v1525 = vpop.f32.mrf.mxu0
    %v1526 = vadd.f32 0.0, %v1525
    %v1527 = vpop.f32.mrf.mxu0
    %v1528 = vpop.f32.mrf.mxu0
    %1529 = vdwg.mxu0
    %1530 = vmatprep.subr.bf16.mxu0 %v988
    %1531 = vmatpush1.bf16.msra.mxu0 %v987
    %1532 = vmatprep.subr.bf16.mxu0 %v980
    %1533 = vmatpush1.bf16.msra.mxu0 %v979
    %1534 = vmatprep.subr.bf16.mxu0 %v972
    %1535 = vmatpush1.bf16.msra.mxu0 %v971
    %1536 = vmatprep.subr.bf16.mxu0 %v964
    %1537 = vmatpush1.bf16.msra.mxu0 %v963
    %1538 = vmatprep.subr.bf16.mxu0 %v956
    %1539 = vmatpush1.bf16.msra.mxu0 %v955
    %1540 = vmatprep.subr.bf16.mxu0 %v948
    %1541 = vmatpush1.bf16.msra.mxu0 %v947
    %1542 = vmatprep.subr.bf16.mxu0 %v940
    %1543 = vmatpush1.bf16.msra.mxu0 %v939
    %1544 = vmatprep.subr.bf16.mxu0 %v932
    %1545 = vmatpush1.bf16.msra.mxu0 %v931
    %1546 = vmatprep.subr.bf16.mxu0 %v1052
    %1547 = vmatpush2.bf16.msra.mxu0 %v1051
    %1548 = vmatprep.subr.bf16.mxu0 %v1044
    %1549 = vmatpush2.bf16.msra.mxu0 %v1043
    %1550 = vmatprep.subr.bf16.mxu0 %v1036
    %1551 = vmatpush2.bf16.msra.mxu0 %v1035
    %1552 = vmatprep.subr.bf16.mxu0 %v1028
    %1553 = vmatpush2.bf16.msra.mxu0 %v1027
    %1554 = vmatprep.subr.bf16.mxu0 %v1020
    %1555 = vmatpush2.bf16.msra.mxu0 %v1019
    %1556 = vmatprep.subr.bf16.mxu0 %v1012
    %1557 = vmatpush2.bf16.msra.mxu0 %v1011
    %1558 = vmatprep.subr.bf16.mxu0 %v1004
    %1559 = vmatpush2.bf16.msra.mxu0 %v1003
    %1560 = vmatprep.subr.bf16.mxu0 %v996
    %1561 = vmatpush2.bf16.msra.mxu0 %v995
    %1562 = vmatprep.mubr.bf16.mxu0 %v1373
    %1563 = vmatmul.mubr.bf16.gmra.mxu0 %v1406
    %v1564 = vpop.f32.mrf.mxu0
    %v1565 = vadd.f32 0.0, %v1564
    %v1566 = vpop.f32.mrf.mxu0
    %v1567 = vadd.f32 0.0, %v1566
    %v1568 = vpop.f32.mrf.mxu0
    %v1569 = vpop.f32.mrf.mxu0
    %1570 = vdwg.mxu0
    %v1571 = vadd.f32 %v1524, %v497
    %v1572 = vadd.f32 %v1526, %v501
    %v1573 = vadd.f32 %v1565, %v505
    %v1574 = vadd.f32 %v1567, %v509
    %v1575 = vxor.u32 %v1571, 2147483648
    %v1576 = vmul.f32 %v1575, 1.442695
    %v1577 = vpow.pop %v1576
    %v1578 = vadd.f32 %v1577, 1.0
    %v1579 = vrcp.pop %v1578
    %v1580 = vmul.f32 1.0, %v1579
    %v1581 = vxor.u32 %v1572, 2147483648
    %v1582 = vmul.f32 %v1581, 1.442695
    %v1583 = vpow.pop %v1582
    %v1584 = vadd.f32 %v1583, 1.0
    %v1585 = vrcp.pop %v1584
    %v1586 = vmul.f32 1.0, %v1585
    %v1587 = vtanh.pop %v1573
    %v1588 = vxor.u32 %v1574, 2147483648
    %v1589 = vmul.f32 %v1588, 1.442695
    %v1590 = vpow.pop %v1589
    %v1591 = vadd.f32 %v1590, 1.0
    %v1592 = vrcp.pop %v1591
    %v1593 = vmul.f32 1.0, %v1592
    %v1594 = vmul.f32 %v1586, %v1370
    %v1595 = vmul.f32 %v1580, %v1587
    %v1596 = vadd.f32 %v1594, %v1595
    %v1597 = vtanh.pop %v1596
    %v1598 = vmul.f32 %v1593, %v1597
    %v1599 = vpack.c.bf16 %v1598, %v1598
    %v1600 = vld [vmem:[#allocation2 + $0x40] sm:$0xff]
    %v1601 = vld [vmem:[#allocation2 + $0x48] sm:$0xff]
    %v1602 = vld [vmem:[#allocation2 + $0x50] sm:$0xff]
    %v1603 = vld [vmem:[#allocation2 + $0x58] sm:$0xff]
    %v1604 = vadd.f32 %v1600, %v1442
    %v1605 = vadd.f32 %v1601, %v1444
    %v1606 = vadd.f32 %v1602, %v1483
    %v1607 = vadd.f32 %v1603, %v1485
    %v1608 = vxor.u32 %v1604, 2147483648
    %v1609 = vmul.f32 %v1608, 1.442695
    %v1610 = vpow.pop %v1609
    %v1611 = vadd.f32 %v1610, 1.0
    %v1612 = vrcp.pop %v1611
    %v1613 = vmul.f32 1.0, %v1612
    %v1614 = vxor.u32 %v1605, 2147483648
    %v1615 = vmul.f32 %v1614, 1.442695
    %v1616 = vpow.pop %v1615
    %v1617 = vadd.f32 %v1616, 1.0
    %v1618 = vrcp.pop %v1617
    %v1619 = vmul.f32 1.0, %v1618
    %v1620 = vtanh.pop %v1606
    %v1621 = vxor.u32 %v1607, 2147483648
    %v1622 = vmul.f32 %v1621, 1.442695
    %v1623 = vpow.pop %v1622
    %v1624 = vadd.f32 %v1623, 1.0
    %v1625 = vrcp.pop %v1624
    %v1626 = vmul.f32 1.0, %v1625
    %v1627 = vmul.f32 %v1619, %v1403
    %v1628 = vmul.f32 %v1613, %v1620
    %v1629 = vadd.f32 %v1627, %v1628
    %v1630 = vtanh.pop %v1629
    %v1631 = vmul.f32 %v1626, %v1630
    %v1632 = vpack.c.bf16 %v1631, %v1631
    %1633 = vmatprep.subr.bf16.mxu0 %v982
    %1634 = vmatpush1.bf16.msra.mxu0 %v981
    %1635 = vmatprep.subr.bf16.mxu0 %v974
    %1636 = vmatpush1.bf16.msra.mxu0 %v973
    %1637 = vmatprep.subr.bf16.mxu0 %v966
    %1638 = vmatpush1.bf16.msra.mxu0 %v965
    %1639 = vmatprep.subr.bf16.mxu0 %v958
    %1640 = vmatpush1.bf16.msra.mxu0 %v957
    %1641 = vmatprep.subr.bf16.mxu0 %v950
    %1642 = vmatpush1.bf16.msra.mxu0 %v949
    %1643 = vmatprep.subr.bf16.mxu0 %v942
    %1644 = vmatpush1.bf16.msra.mxu0 %v941
    %1645 = vmatprep.subr.bf16.mxu0 %v934
    %1646 = vmatpush1.bf16.msra.mxu0 %v933
    %1647 = vmatprep.subr.bf16.mxu0 %v926
    %1648 = vmatpush1.bf16.msra.mxu0 %v925
    %1649 = vmatprep.subr.bf16.mxu0 %v1046
    %1650 = vmatpush2.bf16.msra.mxu0 %v1045
    %1651 = vmatprep.subr.bf16.mxu0 %v1038
    %1652 = vmatpush2.bf16.msra.mxu0 %v1037
    %1653 = vmatprep.subr.bf16.mxu0 %v1030
    %1654 = vmatpush2.bf16.msra.mxu0 %v1029
    %1655 = vmatprep.subr.bf16.mxu0 %v1022
    %1656 = vmatpush2.bf16.msra.mxu0 %v1021
    %1657 = vmatprep.subr.bf16.mxu0 %v1014
    %1658 = vmatpush2.bf16.msra.mxu0 %v1013
    %1659 = vmatprep.subr.bf16.mxu0 %v1006
    %1660 = vmatpush2.bf16.msra.mxu0 %v1005
    %1661 = vmatprep.subr.bf16.mxu0 %v998
    %1662 = vmatpush2.bf16.msra.mxu0 %v997
    %1663 = vmatprep.subr.bf16.mxu0 %v990
    %1664 = vmatpush2.bf16.msra.mxu0 %v989
    %1665 = vmatprep.mubr.bf16.mxu0 %v1599
    %1666 = vmatmul.mubr.bf16.gmra.mxu0 %v1632
    %v1667 = vpop.f32.mrf.mxu0
    %v1668 = vadd.f32 0.0, %v1667
    %v1669 = vpop.f32.mrf.mxu0
    %v1670 = vadd.f32 0.0, %v1669
    %v1671 = vpop.f32.mrf.mxu0
    %v1672 = vpop.f32.mrf.mxu0
    %1673 = vdwg.mxu0
    %1674 = vmatprep.subr.bf16.mxu0 %v984
    %1675 = vmatpush1.bf16.msra.mxu0 %v983
    %1676 = vmatprep.subr.bf16.mxu0 %v976
    %1677 = vmatpush1.bf16.msra.mxu0 %v975
    %1678 = vmatprep.subr.bf16.mxu0 %v968
    %1679 = vmatpush1.bf16.msra.mxu0 %v967
    %1680 = vmatprep.subr.bf16.mxu0 %v960
    %1681 = vmatpush1.bf16.msra.mxu0 %v959
    %1682 = vmatprep.subr.bf16.mxu0 %v952
    %1683 = vmatpush1.bf16.msra.mxu0 %v951
    %1684 = vmatprep.subr.bf16.mxu0 %v944
    %1685 = vmatpush1.bf16.msra.mxu0 %v943
    %1686 = vmatprep.subr.bf16.mxu0 %v936
    %1687 = vmatpush1.bf16.msra.mxu0 %v935
    %1688 = vmatprep.subr.bf16.mxu0 %v928
    %1689 = vmatpush1.bf16.msra.mxu0 %v927
    %1690 = vmatprep.subr.bf16.mxu0 %v1048
    %1691 = vmatpush2.bf16.msra.mxu0 %v1047
    %1692 = vmatprep.subr.bf16.mxu0 %v1040
    %1693 = vmatpush2.bf16.msra.mxu0 %v1039
    %1694 = vmatprep.subr.bf16.mxu0 %v1032
    %1695 = vmatpush2.bf16.msra.mxu0 %v1031
    %1696 = vmatprep.subr.bf16.mxu0 %v1024
    %1697 = vmatpush2.bf16.msra.mxu0 %v1023
    %1698 = vmatprep.subr.bf16.mxu0 %v1016
    %1699 = vmatpush2.bf16.msra.mxu0 %v1015
    %1700 = vmatprep.subr.bf16.mxu0 %v1008
    %1701 = vmatpush2.bf16.msra.mxu0 %v1007
    %1702 = vmatprep.subr.bf16.mxu0 %v1000
    %1703 = vmatpush2.bf16.msra.mxu0 %v999
    %1704 = vmatprep.subr.bf16.mxu0 %v992
    %1705 = vmatpush2.bf16.msra.mxu0 %v991
    %1706 = vmatprep.mubr.bf16.mxu0 %v1599
    %1707 = vmatmul.mubr.bf16.gmra.mxu0 %v1632
    %v1708 = vpop.f32.mrf.mxu0
    %v1709 = vadd.f32 0.0, %v1708
    %v1710 = vpop.f32.mrf.mxu0
    %v1711 = vadd.f32 0.0, %v1710
    %v1712 = vpop.f32.mrf.mxu0
    %v1713 = vpop.f32.mrf.mxu0
    %1714 = vdwg.mxu0
    %1715 = vmatprep.subr.bf16.mxu0 %v986
    %1716 = vmatpush1.bf16.msra.mxu0 %v985
    %1717 = vmatprep.subr.bf16.mxu0 %v978
    %1718 = vmatpush1.bf16.msra.mxu0 %v977
    %1719 = vmatprep.subr.bf16.mxu0 %v970
    %1720 = vmatpush1.bf16.msra.mxu0 %v969
    %1721 = vmatprep.subr.bf16.mxu0 %v962
    %1722 = vmatpush1.bf16.msra.mxu0 %v961
    %1723 = vmatprep.subr.bf16.mxu0 %v954
    %1724 = vmatpush1.bf16.msra.mxu0 %v953
    %1725 = vmatprep.subr.bf16.mxu0 %v946
    %1726 = vmatpush1.bf16.msra.mxu0 %v945
    %1727 = vmatprep.subr.bf16.mxu0 %v938
    %1728 = vmatpush1.bf16.msra.mxu0 %v937
    %1729 = vmatprep.subr.bf16.mxu0 %v930
    %1730 = vmatpush1.bf16.msra.mxu0 %v929
    %1731 = vmatprep.subr.bf16.mxu0 %v1050
    %1732 = vmatpush2.bf16.msra.mxu0 %v1049
    %1733 = vmatprep.subr.bf16.mxu0 %v1042
    %1734 = vmatpush2.bf16.msra.mxu0 %v1041
    %1735 = vmatprep.subr.bf16.mxu0 %v1034
    %1736 = vmatpush2.bf16.msra.mxu0 %v1033
    %1737 = vmatprep.subr.bf16.mxu0 %v1026
    %1738 = vmatpush2.bf16.msra.mxu0 %v1025
    %1739 = vmatprep.subr.bf16.mxu0 %v1018
    %1740 = vmatpush2.bf16.msra.mxu0 %v1017
    %1741 = vmatprep.subr.bf16.mxu0 %v1010
    %1742 = vmatpush2.bf16.msra.mxu0 %v1009
    %1743 = vmatprep.subr.bf16.mxu0 %v1002
    %1744 = vmatpush2.bf16.msra.mxu0 %v1001
    %1745 = vmatprep.subr.bf16.mxu0 %v994
    %1746 = vmatpush2.bf16.msra.mxu0 %v993
    %1747 = vmatprep.mubr.bf16.mxu0 %v1599
    %1748 = vmatmul.mubr.bf16.gmra.mxu0 %v1632
    %v1749 = vpop.f32.mrf.mxu0
    %v1750 = vadd.f32 0.0, %v1749
    %v1751 = vpop.f32.mrf.mxu0
    %v1752 = vadd.f32 0.0, %v1751
    %v1753 = vpop.f32.mrf.mxu0
    %v1754 = vpop.f32.mrf.mxu0
    %1755 = vdwg.mxu0
    %1756 = vmatprep.subr.bf16.mxu0 %v988
    %1757 = vmatpush1.bf16.msra.mxu0 %v987
    %1758 = vmatprep.subr.bf16.mxu0 %v980
    %1759 = vmatpush1.bf16.msra.mxu0 %v979
    %1760 = vmatprep.subr.bf16.mxu0 %v972
    %1761 = vmatpush1.bf16.msra.mxu0 %v971
    %1762 = vmatprep.subr.bf16.mxu0 %v964
    %1763 = vmatpush1.bf16.msra.mxu0 %v963
    %1764 = vmatprep.subr.bf16.mxu0 %v956
    %1765 = vmatpush1.bf16.msra.mxu0 %v955
    %1766 = vmatprep.subr.bf16.mxu0 %v948
    %1767 = vmatpush1.bf16.msra.mxu0 %v947
    %1768 = vmatprep.subr.bf16.mxu0 %v940
    %1769 = vmatpush1.bf16.msra.mxu0 %v939
    %1770 = vmatprep.subr.bf16.mxu0 %v932
    %1771 = vmatpush1.bf16.msra.mxu0 %v931
    %1772 = vmatprep.subr.bf16.mxu0 %v1052
    %1773 = vmatpush2.bf16.msra.mxu0 %v1051
    %1774 = vmatprep.subr.bf16.mxu0 %v1044
    %1775 = vmatpush2.bf16.msra.mxu0 %v1043
    %1776 = vmatprep.subr.bf16.mxu0 %v1036
    %1777 = vmatpush2.bf16.msra.mxu0 %v1035
    %1778 = vmatprep.subr.bf16.mxu0 %v1028
    %1779 = vmatpush2.bf16.msra.mxu0 %v1027
    %1780 = vmatprep.subr.bf16.mxu0 %v1020
    %1781 = vmatpush2.bf16.msra.mxu0 %v1019
    %1782 = vmatprep.subr.bf16.mxu0 %v1012
    %1783 = vmatpush2.bf16.msra.mxu0 %v1011
    %1784 = vmatprep.subr.bf16.mxu0 %v1004
    %1785 = vmatpush2.bf16.msra.mxu0 %v1003
    %1786 = vmatprep.subr.bf16.mxu0 %v996
    %1787 = vmatpush2.bf16.msra.mxu0 %v995
    %1788 = vmatprep.mubr.bf16.mxu0 %v1599
    %1789 = vmatmul.mubr.bf16.gmra.mxu0 %v1632
    %v1790 = vpop.f32.mrf.mxu0
    %v1791 = vadd.f32 0.0, %v1790
    %v1792 = vpop.f32.mrf.mxu0
    %v1793 = vadd.f32 0.0, %v1792
    %v1794 = vpop.f32.mrf.mxu0
    %v1795 = vpop.f32.mrf.mxu0
    %1796 = vdwg.mxu0
    %v1797 = vadd.f32 %v1750, %v497
    %v1798 = vadd.f32 %v1752, %v501
    %v1799 = vadd.f32 %v1791, %v505
    %v1800 = vadd.f32 %v1793, %v509
    %v1801 = vxor.u32 %v1797, 2147483648
    %v1802 = vmul.f32 %v1801, 1.442695
    %v1803 = vpow.pop %v1802
    %v1804 = vadd.f32 %v1803, 1.0
    %v1805 = vrcp.pop %v1804
    %v1806 = vmul.f32 1.0, %v1805
    %v1807 = vxor.u32 %v1798, 2147483648
    %v1808 = vmul.f32 %v1807, 1.442695
    %v1809 = vpow.pop %v1808
    %v1810 = vadd.f32 %v1809, 1.0
    %v1811 = vrcp.pop %v1810
    %v1812 = vmul.f32 1.0, %v1811
    %v1813 = vtanh.pop %v1799
    %v1814 = vxor.u32 %v1800, 2147483648
    %v1815 = vmul.f32 %v1814, 1.442695
    %v1816 = vpow.pop %v1815
    %v1817 = vadd.f32 %v1816, 1.0
    %v1818 = vrcp.pop %v1817
    %v1819 = vmul.f32 1.0, %v1818
    %v1820 = vmul.f32 %v1812, %v1596
    %v1821 = vmul.f32 %v1806, %v1813
    %v1822 = vadd.f32 %v1820, %v1821
    %v1823 = vtanh.pop %v1822
    %v1824 = vmul.f32 %v1819, %v1823
    %v1825 = vpack.c.bf16 %v1824, %v1824
    %v1826 = vld [vmem:[#allocation2 + $0x60] sm:$0xff]
    %v1827 = vld [vmem:[#allocation2 + $0x68] sm:$0xff]
    %v1828 = vld [vmem:[#allocation2 + $0x70] sm:$0xff]
    %v1829 = vld [vmem:[#allocation2 + $0x78] sm:$0xff]
    %v1830 = vadd.f32 %v1826, %v1668
    %v1831 = vadd.f32 %v1827, %v1670
    %v1832 = vadd.f32 %v1828, %v1709
    %v1833 = vadd.f32 %v1829, %v1711
    %v1834 = vxor.u32 %v1830, 2147483648
    %v1835 = vmul.f32 %v1834, 1.442695
    %v1836 = vpow.pop %v1835
    %v1837 = vadd.f32 %v1836, 1.0
    %v1838 = vrcp.pop %v1837
    %v1839 = vmul.f32 1.0, %v1838
    %v1840 = vxor.u32 %v1831, 2147483648
    %v1841 = vmul.f32 %v1840, 1.442695
    %v1842 = vpow.pop %v1841
    %v1843 = vadd.f32 %v1842, 1.0
    %v1844 = vrcp.pop %v1843
    %v1845 = vmul.f32 1.0, %v1844
    %v1846 = vtanh.pop %v1832
    %v1847 = vxor.u32 %v1833, 2147483648
    %v1848 = vmul.f32 %v1847, 1.442695
    %v1849 = vpow.pop %v1848
    %v1850 = vadd.f32 %v1849, 1.0
    %v1851 = vrcp.pop %v1850
    %v1852 = vmul.f32 1.0, %v1851
    %v1853 = vmul.f32 %v1845, %v1629
    %v1854 = vmul.f32 %v1839, %v1846
    %v1855 = vadd.f32 %v1853, %v1854
    %v1856 = vtanh.pop %v1855
    %v1857 = vmul.f32 %v1852, %v1856
    %v1858 = vpack.c.bf16 %v1857, %v1857
    %1859 = vmatprep.subr.bf16.mxu0 %v982
    %1860 = vmatpush1.bf16.msra.mxu0 %v981
    %1861 = vmatprep.subr.bf16.mxu0 %v974
    %1862 = vmatpush1.bf16.msra.mxu0 %v973
    %1863 = vmatprep.subr.bf16.mxu0 %v966
    %1864 = vmatpush1.bf16.msra.mxu0 %v965
    %1865 = vmatprep.subr.bf16.mxu0 %v958
    %1866 = vmatpush1.bf16.msra.mxu0 %v957
    %1867 = vmatprep.subr.bf16.mxu0 %v950
    %1868 = vmatpush1.bf16.msra.mxu0 %v949
    %1869 = vmatprep.subr.bf16.mxu0 %v942
    %1870 = vmatpush1.bf16.msra.mxu0 %v941
    %1871 = vmatprep.subr.bf16.mxu0 %v934
    %1872 = vmatpush1.bf16.msra.mxu0 %v933
    %1873 = vmatprep.subr.bf16.mxu0 %v926
    %1874 = vmatpush1.bf16.msra.mxu0 %v925
    %1875 = vmatprep.subr.bf16.mxu0 %v1046
    %1876 = vmatpush2.bf16.msra.mxu0 %v1045
    %1877 = vmatprep.subr.bf16.mxu0 %v1038
    %1878 = vmatpush2.bf16.msra.mxu0 %v1037
    %1879 = vmatprep.subr.bf16.mxu0 %v1030
    %1880 = vmatpush2.bf16.msra.mxu0 %v1029
    %1881 = vmatprep.subr.bf16.mxu0 %v1022
    %1882 = vmatpush2.bf16.msra.mxu0 %v1021
    %1883 = vmatprep.subr.bf16.mxu0 %v1014
    %1884 = vmatpush2.bf16.msra.mxu0 %v1013
    %1885 = vmatprep.subr.bf16.mxu0 %v1006
    %1886 = vmatpush2.bf16.msra.mxu0 %v1005
    %1887 = vmatprep.subr.bf16.mxu0 %v998
    %1888 = vmatpush2.bf16.msra.mxu0 %v997
    %1889 = vmatprep.subr.bf16.mxu0 %v990
    %1890 = vmatpush2.bf16.msra.mxu0 %v989
    %1891 = vmatprep.mubr.bf16.mxu0 %v1825
    %1892 = vmatmul.mubr.bf16.gmra.mxu0 %v1858
    %v1893 = vpop.f32.mrf.mxu0
    %v1894 = vadd.f32 0.0, %v1893
    %v1895 = vpop.f32.mrf.mxu0
    %v1896 = vadd.f32 0.0, %v1895
    %v1897 = vpop.f32.mrf.mxu0
    %v1898 = vpop.f32.mrf.mxu0
    %1899 = vdwg.mxu0
    %1900 = vmatprep.subr.bf16.mxu0 %v984
    %1901 = vmatpush1.bf16.msra.mxu0 %v983
    %1902 = vmatprep.subr.bf16.mxu0 %v976
    %1903 = vmatpush1.bf16.msra.mxu0 %v975
    %1904 = vmatprep.subr.bf16.mxu0 %v968
    %1905 = vmatpush1.bf16.msra.mxu0 %v967
    %1906 = vmatprep.subr.bf16.mxu0 %v960
    %1907 = vmatpush1.bf16.msra.mxu0 %v959
    %1908 = vmatprep.subr.bf16.mxu0 %v952
    %1909 = vmatpush1.bf16.msra.mxu0 %v951
    %1910 = vmatprep.subr.bf16.mxu0 %v944
    %1911 = vmatpush1.bf16.msra.mxu0 %v943
    %1912 = vmatprep.subr.bf16.mxu0 %v936
    %1913 = vmatpush1.bf16.msra.mxu0 %v935
    %1914 = vmatprep.subr.bf16.mxu0 %v928
    %1915 = vmatpush1.bf16.msra.mxu0 %v927
    %1916 = vmatprep.subr.bf16.mxu0 %v1048
    %1917 = vmatpush2.bf16.msra.mxu0 %v1047
    %1918 = vmatprep.subr.bf16.mxu0 %v1040
    %1919 = vmatpush2.bf16.msra.mxu0 %v1039
    %1920 = vmatprep.subr.bf16.mxu0 %v1032
    %1921 = vmatpush2.bf16.msra.mxu0 %v1031
    %1922 = vmatprep.subr.bf16.mxu0 %v1024
    %1923 = vmatpush2.bf16.msra.mxu0 %v1023
    %1924 = vmatprep.subr.bf16.mxu0 %v1016
    %1925 = vmatpush2.bf16.msra.mxu0 %v1015
    %1926 = vmatprep.subr.bf16.mxu0 %v1008
    %1927 = vmatpush2.bf16.msra.mxu0 %v1007
    %1928 = vmatprep.subr.bf16.mxu0 %v1000
    %1929 = vmatpush2.bf16.msra.mxu0 %v999
    %1930 = vmatprep.subr.bf16.mxu0 %v992
    %1931 = vmatpush2.bf16.msra.mxu0 %v991
    %1932 = vmatprep.mubr.bf16.mxu0 %v1825
    %1933 = vmatmul.mubr.bf16.gmra.mxu0 %v1858
    %v1934 = vpop.f32.mrf.mxu0
    %v1935 = vadd.f32 0.0, %v1934
    %v1936 = vpop.f32.mrf.mxu0
    %v1937 = vadd.f32 0.0, %v1936
    %v1938 = vpop.f32.mrf.mxu0
    %v1939 = vpop.f32.mrf.mxu0
    %1940 = vdwg.mxu0
    %1941 = vmatprep.subr.bf16.mxu0 %v986
    %1942 = vmatpush1.bf16.msra.mxu0 %v985
    %1943 = vmatprep.subr.bf16.mxu0 %v978
    %1944 = vmatpush1.bf16.msra.mxu0 %v977
    %1945 = vmatprep.subr.bf16.mxu0 %v970
    %1946 = vmatpush1.bf16.msra.mxu0 %v969
    %1947 = vmatprep.subr.bf16.mxu0 %v962
    %1948 = vmatpush1.bf16.msra.mxu0 %v961
    %1949 = vmatprep.subr.bf16.mxu0 %v954
    %1950 = vmatpush1.bf16.msra.mxu0 %v953
    %1951 = vmatprep.subr.bf16.mxu0 %v946
    %1952 = vmatpush1.bf16.msra.mxu0 %v945
    %1953 = vmatprep.subr.bf16.mxu0 %v938
    %1954 = vmatpush1.bf16.msra.mxu0 %v937
    %1955 = vmatprep.subr.bf16.mxu0 %v930
    %1956 = vmatpush1.bf16.msra.mxu0 %v929
    %1957 = vmatprep.subr.bf16.mxu0 %v1050
    %1958 = vmatpush2.bf16.msra.mxu0 %v1049
    %1959 = vmatprep.subr.bf16.mxu0 %v1042
    %1960 = vmatpush2.bf16.msra.mxu0 %v1041
    %1961 = vmatprep.subr.bf16.mxu0 %v1034
    %1962 = vmatpush2.bf16.msra.mxu0 %v1033
    %1963 = vmatprep.subr.bf16.mxu0 %v1026
    %1964 = vmatpush2.bf16.msra.mxu0 %v1025
    %1965 = vmatprep.subr.bf16.mxu0 %v1018
    %1966 = vmatpush2.bf16.msra.mxu0 %v1017
    %1967 = vmatprep.subr.bf16.mxu0 %v1010
    %1968 = vmatpush2.bf16.msra.mxu0 %v1009
    %1969 = vmatprep.subr.bf16.mxu0 %v1002
    %1970 = vmatpush2.bf16.msra.mxu0 %v1001
    %1971 = vmatprep.subr.bf16.mxu0 %v994
    %1972 = vmatpush2.bf16.msra.mxu0 %v993
    %1973 = vmatprep.mubr.bf16.mxu0 %v1825
    %1974 = vmatmul.mubr.bf16.gmra.mxu0 %v1858
    %v1975 = vpop.f32.mrf.mxu0
    %v1976 = vadd.f32 0.0, %v1975
    %v1977 = vpop.f32.mrf.mxu0
    %v1978 = vadd.f32 0.0, %v1977
    %v1979 = vpop.f32.mrf.mxu0
    %v1980 = vpop.f32.mrf.mxu0
    %1981 = vdwg.mxu0
    %1982 = vmatprep.subr.bf16.mxu0 %v988
    %1983 = vmatpush1.bf16.msra.mxu0 %v987
    %1984 = vmatprep.subr.bf16.mxu0 %v980
    %1985 = vmatpush1.bf16.msra.mxu0 %v979
    %1986 = vmatprep.subr.bf16.mxu0 %v972
    %1987 = vmatpush1.bf16.msra.mxu0 %v971
    %1988 = vmatprep.subr.bf16.mxu0 %v964
    %1989 = vmatpush1.bf16.msra.mxu0 %v963
    %1990 = vmatprep.subr.bf16.mxu0 %v956
    %1991 = vmatpush1.bf16.msra.mxu0 %v955
    %1992 = vmatprep.subr.bf16.mxu0 %v948
    %1993 = vmatpush1.bf16.msra.mxu0 %v947
    %1994 = vmatprep.subr.bf16.mxu0 %v940
    %1995 = vmatpush1.bf16.msra.mxu0 %v939
    %1996 = vmatprep.subr.bf16.mxu0 %v932
    %1997 = vmatpush1.bf16.msra.mxu0 %v931
    %1998 = vmatprep.subr.bf16.mxu0 %v1052
    %1999 = vmatpush2.bf16.msra.mxu0 %v1051
    %2000 = vmatprep.subr.bf16.mxu0 %v1044
    %2001 = vmatpush2.bf16.msra.mxu0 %v1043
    %2002 = vmatprep.subr.bf16.mxu0 %v1036
    %2003 = vmatpush2.bf16.msra.mxu0 %v1035
    %2004 = vmatprep.subr.bf16.mxu0 %v1028
    %2005 = vmatpush2.bf16.msra.mxu0 %v1027
    %2006 = vmatprep.subr.bf16.mxu0 %v1020
    %2007 = vmatpush2.bf16.msra.mxu0 %v1019
    %2008 = vmatprep.subr.bf16.mxu0 %v1012
    %2009 = vmatpush2.bf16.msra.mxu0 %v1011
    %2010 = vmatprep.subr.bf16.mxu0 %v1004
    %2011 = vmatpush2.bf16.msra.mxu0 %v1003
    %2012 = vmatprep.subr.bf16.mxu0 %v996
    %2013 = vmatpush2.bf16.msra.mxu0 %v995
    %2014 = vmatprep.mubr.bf16.mxu0 %v1825
    %2015 = vmatmul.mubr.bf16.gmra.mxu0 %v1858
    %v2016 = vpop.f32.mrf.mxu0
    %v2017 = vadd.f32 0.0, %v2016
    %v2018 = vpop.f32.mrf.mxu0
    %v2019 = vadd.f32 0.0, %v2018
    %v2020 = vpop.f32.mrf.mxu0
    %v2021 = vpop.f32.mrf.mxu0
    %2022 = vdwg.mxu0
    %v2023 = vadd.f32 %v1976, %v497
    %v2024 = vadd.f32 %v1978, %v501
    %v2025 = vadd.f32 %v2017, %v505
    %v2026 = vadd.f32 %v2019, %v509
    %v2027 = vxor.u32 %v2023, 2147483648
    %v2028 = vmul.f32 %v2027, 1.442695
    %v2029 = vpow.pop %v2028
    %v2030 = vadd.f32 %v2029, 1.0
    %v2031 = vrcp.pop %v2030
    %v2032 = vmul.f32 1.0, %v2031
    %v2033 = vxor.u32 %v2024, 2147483648
    %v2034 = vmul.f32 %v2033, 1.442695
    %v2035 = vpow.pop %v2034
    %v2036 = vadd.f32 %v2035, 1.0
    %v2037 = vrcp.pop %v2036
    %v2038 = vmul.f32 1.0, %v2037
    %v2039 = vtanh.pop %v2025
    %v2040 = vxor.u32 %v2026, 2147483648
    %v2041 = vmul.f32 %v2040, 1.442695
    %v2042 = vpow.pop %v2041
    %v2043 = vadd.f32 %v2042, 1.0
    %v2044 = vrcp.pop %v2043
    %v2045 = vmul.f32 1.0, %v2044
    %v2046 = vmul.f32 %v2038, %v1822
    %v2047 = vmul.f32 %v2032, %v2039
    %v2048 = vadd.f32 %v2046, %v2047
    %v2049 = vtanh.pop %v2048
    %v2050 = vmul.f32 %v2045, %v2049
    %v2051 = vpack.c.bf16 %v2050, %v2050
    %v2052 = vld [vmem:[#allocation2 + $0x80] sm:$0xff]
    %v2053 = vld [vmem:[#allocation2 + $0x88] sm:$0xff]
    %v2054 = vld [vmem:[#allocation2 + $0x90] sm:$0xff]
    %v2055 = vld [vmem:[#allocation2 + $0x98] sm:$0xff]
    %v2056 = vadd.f32 %v2052, %v1894
    %v2057 = vadd.f32 %v2053, %v1896
    %v2058 = vadd.f32 %v2054, %v1935
    %v2059 = vadd.f32 %v2055, %v1937
    %v2060 = vxor.u32 %v2056, 2147483648
    %v2061 = vmul.f32 %v2060, 1.442695
    %v2062 = vpow.pop %v2061
    %v2063 = vadd.f32 %v2062, 1.0
    %v2064 = vrcp.pop %v2063
    %v2065 = vmul.f32 1.0, %v2064
    %v2066 = vxor.u32 %v2057, 2147483648
    %v2067 = vmul.f32 %v2066, 1.442695
    %v2068 = vpow.pop %v2067
    %v2069 = vadd.f32 %v2068, 1.0
    %v2070 = vrcp.pop %v2069
    %v2071 = vmul.f32 1.0, %v2070
    %v2072 = vtanh.pop %v2058
    %v2073 = vxor.u32 %v2059, 2147483648
    %v2074 = vmul.f32 %v2073, 1.442695
    %v2075 = vpow.pop %v2074
    %v2076 = vadd.f32 %v2075, 1.0
    %v2077 = vrcp.pop %v2076
    %v2078 = vmul.f32 1.0, %v2077
    %v2079 = vmul.f32 %v2071, %v1855
    %v2080 = vmul.f32 %v2065, %v2072
    %v2081 = vadd.f32 %v2079, %v2080
    %v2082 = vtanh.pop %v2081
    %v2083 = vmul.f32 %v2078, %v2082
    %v2084 = vpack.c.bf16 %v2083, %v2083
    %2085 = vmatprep.subr.bf16.mxu0 %v982
    %2086 = vmatpush1.bf16.msra.mxu0 %v981
    %2087 = vmatprep.subr.bf16.mxu0 %v974
    %2088 = vmatpush1.bf16.msra.mxu0 %v973
    %2089 = vmatprep.subr.bf16.mxu0 %v966
    %2090 = vmatpush1.bf16.msra.mxu0 %v965
    %2091 = vmatprep.subr.bf16.mxu0 %v958
    %2092 = vmatpush1.bf16.msra.mxu0 %v957
    %2093 = vmatprep.subr.bf16.mxu0 %v950
    %2094 = vmatpush1.bf16.msra.mxu0 %v949
    %2095 = vmatprep.subr.bf16.mxu0 %v942
    %2096 = vmatpush1.bf16.msra.mxu0 %v941
    %2097 = vmatprep.subr.bf16.mxu0 %v934
    %2098 = vmatpush1.bf16.msra.mxu0 %v933
    %2099 = vmatprep.subr.bf16.mxu0 %v926
    %2100 = vmatpush1.bf16.msra.mxu0 %v925
    %2101 = vmatprep.subr.bf16.mxu0 %v1046
    %2102 = vmatpush2.bf16.msra.mxu0 %v1045
    %2103 = vmatprep.subr.bf16.mxu0 %v1038
    %2104 = vmatpush2.bf16.msra.mxu0 %v1037
    %2105 = vmatprep.subr.bf16.mxu0 %v1030
    %2106 = vmatpush2.bf16.msra.mxu0 %v1029
    %2107 = vmatprep.subr.bf16.mxu0 %v1022
    %2108 = vmatpush2.bf16.msra.mxu0 %v1021
    %2109 = vmatprep.subr.bf16.mxu0 %v1014
    %2110 = vmatpush2.bf16.msra.mxu0 %v1013
    %2111 = vmatprep.subr.bf16.mxu0 %v1006
    %2112 = vmatpush2.bf16.msra.mxu0 %v1005
    %2113 = vmatprep.subr.bf16.mxu0 %v998
    %2114 = vmatpush2.bf16.msra.mxu0 %v997
    %2115 = vmatprep.subr.bf16.mxu0 %v990
    %2116 = vmatpush2.bf16.msra.mxu0 %v989
    %2117 = vmatprep.mubr.bf16.mxu0 %v2051
    %2118 = vmatmul.mubr.bf16.gmra.mxu0 %v2084
    %v2119 = vpop.f32.mrf.mxu0
    %v2120 = vadd.f32 0.0, %v2119
    %v2121 = vpop.f32.mrf.mxu0
    %v2122 = vadd.f32 0.0, %v2121
    %v2123 = vpop.f32.mrf.mxu0
    %v2124 = vpop.f32.mrf.mxu0
    %2125 = vdwg.mxu0
    %2126 = vmatprep.subr.bf16.mxu0 %v984
    %2127 = vmatpush1.bf16.msra.mxu0 %v983
    %2128 = vmatprep.subr.bf16.mxu0 %v976
    %2129 = vmatpush1.bf16.msra.mxu0 %v975
    %2130 = vmatprep.subr.bf16.mxu0 %v968
    %2131 = vmatpush1.bf16.msra.mxu0 %v967
    %2132 = vmatprep.subr.bf16.mxu0 %v960
    %2133 = vmatpush1.bf16.msra.mxu0 %v959
    %2134 = vmatprep.subr.bf16.mxu0 %v952
    %2135 = vmatpush1.bf16.msra.mxu0 %v951
    %2136 = vmatprep.subr.bf16.mxu0 %v944
    %2137 = vmatpush1.bf16.msra.mxu0 %v943
    %2138 = vmatprep.subr.bf16.mxu0 %v936
    %2139 = vmatpush1.bf16.msra.mxu0 %v935
    %2140 = vmatprep.subr.bf16.mxu0 %v928
    %2141 = vmatpush1.bf16.msra.mxu0 %v927
    %2142 = vmatprep.subr.bf16.mxu0 %v1048
    %2143 = vmatpush2.bf16.msra.mxu0 %v1047
    %2144 = vmatprep.subr.bf16.mxu0 %v1040
    %2145 = vmatpush2.bf16.msra.mxu0 %v1039
    %2146 = vmatprep.subr.bf16.mxu0 %v1032
    %2147 = vmatpush2.bf16.msra.mxu0 %v1031
    %2148 = vmatprep.subr.bf16.mxu0 %v1024
    %2149 = vmatpush2.bf16.msra.mxu0 %v1023
    %2150 = vmatprep.subr.bf16.mxu0 %v1016
    %2151 = vmatpush2.bf16.msra.mxu0 %v1015
    %2152 = vmatprep.subr.bf16.mxu0 %v1008
    %2153 = vmatpush2.bf16.msra.mxu0 %v1007
    %2154 = vmatprep.subr.bf16.mxu0 %v1000
    %2155 = vmatpush2.bf16.msra.mxu0 %v999
    %2156 = vmatprep.subr.bf16.mxu0 %v992
    %2157 = vmatpush2.bf16.msra.mxu0 %v991
    %2158 = vmatprep.mubr.bf16.mxu0 %v2051
    %2159 = vmatmul.mubr.bf16.gmra.mxu0 %v2084
    %v2160 = vpop.f32.mrf.mxu0
    %v2161 = vadd.f32 0.0, %v2160
    %v2162 = vpop.f32.mrf.mxu0
    %v2163 = vadd.f32 0.0, %v2162
    %v2164 = vpop.f32.mrf.mxu0
    %v2165 = vpop.f32.mrf.mxu0
    %2166 = vdwg.mxu0
    %2167 = vmatprep.subr.bf16.mxu0 %v986
    %2168 = vmatpush1.bf16.msra.mxu0 %v985
    %2169 = vmatprep.subr.bf16.mxu0 %v978
    %2170 = vmatpush1.bf16.msra.mxu0 %v977
    %2171 = vmatprep.subr.bf16.mxu0 %v970
    %2172 = vmatpush1.bf16.msra.mxu0 %v969
    %2173 = vmatprep.subr.bf16.mxu0 %v962
    %2174 = vmatpush1.bf16.msra.mxu0 %v961
    %2175 = vmatprep.subr.bf16.mxu0 %v954
    %2176 = vmatpush1.bf16.msra.mxu0 %v953
    %2177 = vmatprep.subr.bf16.mxu0 %v946
    %2178 = vmatpush1.bf16.msra.mxu0 %v945
    %2179 = vmatprep.subr.bf16.mxu0 %v938
    %2180 = vmatpush1.bf16.msra.mxu0 %v937
    %2181 = vmatprep.subr.bf16.mxu0 %v930
    %2182 = vmatpush1.bf16.msra.mxu0 %v929
    %2183 = vmatprep.subr.bf16.mxu0 %v1050
    %2184 = vmatpush2.bf16.msra.mxu0 %v1049
    %2185 = vmatprep.subr.bf16.mxu0 %v1042
    %2186 = vmatpush2.bf16.msra.mxu0 %v1041
    %2187 = vmatprep.subr.bf16.mxu0 %v1034
    %2188 = vmatpush2.bf16.msra.mxu0 %v1033
    %2189 = vmatprep.subr.bf16.mxu0 %v1026
    %2190 = vmatpush2.bf16.msra.mxu0 %v1025
    %2191 = vmatprep.subr.bf16.mxu0 %v1018
    %2192 = vmatpush2.bf16.msra.mxu0 %v1017
    %2193 = vmatprep.subr.bf16.mxu0 %v1010
    %2194 = vmatpush2.bf16.msra.mxu0 %v1009
    %2195 = vmatprep.subr.bf16.mxu0 %v1002
    %2196 = vmatpush2.bf16.msra.mxu0 %v1001
    %2197 = vmatprep.subr.bf16.mxu0 %v994
    %2198 = vmatpush2.bf16.msra.mxu0 %v993
    %2199 = vmatprep.mubr.bf16.mxu0 %v2051
    %2200 = vmatmul.mubr.bf16.gmra.mxu0 %v2084
    %v2201 = vpop.f32.mrf.mxu0
    %v2202 = vadd.f32 0.0, %v2201
    %v2203 = vpop.f32.mrf.mxu0
    %v2204 = vadd.f32 0.0, %v2203
    %v2205 = vpop.f32.mrf.mxu0
    %v2206 = vpop.f32.mrf.mxu0
    %2207 = vdwg.mxu0
    %2208 = vmatprep.subr.bf16.mxu0 %v988
    %2209 = vmatpush1.bf16.msra.mxu0 %v987
    %2210 = vmatprep.subr.bf16.mxu0 %v980
    %2211 = vmatpush1.bf16.msra.mxu0 %v979
    %2212 = vmatprep.subr.bf16.mxu0 %v972
    %2213 = vmatpush1.bf16.msra.mxu0 %v971
    %2214 = vmatprep.subr.bf16.mxu0 %v964
    %2215 = vmatpush1.bf16.msra.mxu0 %v963
    %2216 = vmatprep.subr.bf16.mxu0 %v956
    %2217 = vmatpush1.bf16.msra.mxu0 %v955
    %2218 = vmatprep.subr.bf16.mxu0 %v948
    %2219 = vmatpush1.bf16.msra.mxu0 %v947
    %2220 = vmatprep.subr.bf16.mxu0 %v940
    %2221 = vmatpush1.bf16.msra.mxu0 %v939
    %2222 = vmatprep.subr.bf16.mxu0 %v932
    %2223 = vmatpush1.bf16.msra.mxu0 %v931
    %2224 = vmatprep.subr.bf16.mxu0 %v1052
    %2225 = vmatpush2.bf16.msra.mxu0 %v1051
    %2226 = vmatprep.subr.bf16.mxu0 %v1044
    %2227 = vmatpush2.bf16.msra.mxu0 %v1043
    %2228 = vmatprep.subr.bf16.mxu0 %v1036
    %2229 = vmatpush2.bf16.msra.mxu0 %v1035
    %2230 = vmatprep.subr.bf16.mxu0 %v1028
    %2231 = vmatpush2.bf16.msra.mxu0 %v1027
    %2232 = vmatprep.subr.bf16.mxu0 %v1020
    %2233 = vmatpush2.bf16.msra.mxu0 %v1019
    %2234 = vmatprep.subr.bf16.mxu0 %v1012
    %2235 = vmatpush2.bf16.msra.mxu0 %v1011
    %2236 = vmatprep.subr.bf16.mxu0 %v1004
    %2237 = vmatpush2.bf16.msra.mxu0 %v1003
    %2238 = vmatprep.subr.bf16.mxu0 %v996
    %2239 = vmatpush2.bf16.msra.mxu0 %v995
    %2240 = vmatprep.mubr.bf16.mxu0 %v2051
    %2241 = vmatmul.mubr.bf16.gmra.mxu0 %v2084
    %v2242 = vpop.f32.mrf.mxu0
    %v2243 = vadd.f32 0.0, %v2242
    %v2244 = vpop.f32.mrf.mxu0
    %v2245 = vadd.f32 0.0, %v2244
    %v2246 = vpop.f32.mrf.mxu0
    %v2247 = vpop.f32.mrf.mxu0
    %2248 = vdwg.mxu0
    %v2249 = vadd.f32 %v2202, %v497
    %v2250 = vadd.f32 %v2204, %v501
    %v2251 = vadd.f32 %v2243, %v505
    %v2252 = vadd.f32 %v2245, %v509
    %v2253 = vxor.u32 %v2249, 2147483648
    %v2254 = vmul.f32 %v2253, 1.442695
    %v2255 = vpow.pop %v2254
    %v2256 = vadd.f32 %v2255, 1.0
    %v2257 = vrcp.pop %v2256
    %v2258 = vmul.f32 1.0, %v2257
    %v2259 = vxor.u32 %v2250, 2147483648
    %v2260 = vmul.f32 %v2259, 1.442695
    %v2261 = vpow.pop %v2260
    %v2262 = vadd.f32 %v2261, 1.0
    %v2263 = vrcp.pop %v2262
    %v2264 = vmul.f32 1.0, %v2263
    %v2265 = vtanh.pop %v2251
    %v2266 = vxor.u32 %v2252, 2147483648
    %v2267 = vmul.f32 %v2266, 1.442695
    %v2268 = vpow.pop %v2267
    %v2269 = vadd.f32 %v2268, 1.0
    %v2270 = vrcp.pop %v2269
    %v2271 = vmul.f32 1.0, %v2270
    %v2272 = vmul.f32 %v2264, %v2048
    %v2273 = vmul.f32 %v2258, %v2265
    %v2274 = vadd.f32 %v2272, %v2273
    %v2275 = vtanh.pop %v2274
    %v2276 = vmul.f32 %v2271, %v2275
    %v2277 = vpack.c.bf16 %v2276, %v2276
    %v2278 = vld [vmem:[#allocation2 + $0xa0] sm:$0xff]
    %v2279 = vld [vmem:[#allocation2 + $0xa8] sm:$0xff]
    %v2280 = vld [vmem:[#allocation2 + $0xb0] sm:$0xff]
    %v2281 = vld [vmem:[#allocation2 + $0xb8] sm:$0xff]
    %v2282 = vadd.f32 %v2278, %v2120
    %v2283 = vadd.f32 %v2279, %v2122
    %v2284 = vadd.f32 %v2280, %v2161
    %v2285 = vadd.f32 %v2281, %v2163
    %v2286 = vxor.u32 %v2282, 2147483648
    %v2287 = vmul.f32 %v2286, 1.442695
    %v2288 = vpow.pop %v2287
    %v2289 = vadd.f32 %v2288, 1.0
    %v2290 = vrcp.pop %v2289
    %v2291 = vmul.f32 1.0, %v2290
    %v2292 = vxor.u32 %v2283, 2147483648
    %v2293 = vmul.f32 %v2292, 1.442695
    %v2294 = vpow.pop %v2293
    %v2295 = vadd.f32 %v2294, 1.0
    %v2296 = vrcp.pop %v2295
    %v2297 = vmul.f32 1.0, %v2296
    %v2298 = vtanh.pop %v2284
    %v2299 = vxor.u32 %v2285, 2147483648
    %v2300 = vmul.f32 %v2299, 1.442695
    %v2301 = vpow.pop %v2300
    %v2302 = vadd.f32 %v2301, 1.0
    %v2303 = vrcp.pop %v2302
    %v2304 = vmul.f32 1.0, %v2303
    %v2305 = vmul.f32 %v2297, %v2081
    %v2306 = vmul.f32 %v2291, %v2298
    %v2307 = vadd.f32 %v2305, %v2306
    %v2308 = vtanh.pop %v2307
    %v2309 = vmul.f32 %v2304, %v2308
    %v2310 = vpack.c.bf16 %v2309, %v2309
    %2311 = vmatprep.subr.bf16.mxu0 %v982
    %2312 = vmatpush1.bf16.msra.mxu0 %v981
    %2313 = vmatprep.subr.bf16.mxu0 %v974
    %2314 = vmatpush1.bf16.msra.mxu0 %v973
    %2315 = vmatprep.subr.bf16.mxu0 %v966
    %2316 = vmatpush1.bf16.msra.mxu0 %v965
    %2317 = vmatprep.subr.bf16.mxu0 %v958
    %2318 = vmatpush1.bf16.msra.mxu0 %v957
    %2319 = vmatprep.subr.bf16.mxu0 %v950
    %2320 = vmatpush1.bf16.msra.mxu0 %v949
    %2321 = vmatprep.subr.bf16.mxu0 %v942
    %2322 = vmatpush1.bf16.msra.mxu0 %v941
    %2323 = vmatprep.subr.bf16.mxu0 %v934
    %2324 = vmatpush1.bf16.msra.mxu0 %v933
    %2325 = vmatprep.subr.bf16.mxu0 %v926
    %2326 = vmatpush1.bf16.msra.mxu0 %v925
    %2327 = vmatprep.subr.bf16.mxu0 %v1046
    %2328 = vmatpush2.bf16.msra.mxu0 %v1045
    %2329 = vmatprep.subr.bf16.mxu0 %v1038
    %2330 = vmatpush2.bf16.msra.mxu0 %v1037
    %2331 = vmatprep.subr.bf16.mxu0 %v1030
    %2332 = vmatpush2.bf16.msra.mxu0 %v1029
    %2333 = vmatprep.subr.bf16.mxu0 %v1022
    %2334 = vmatpush2.bf16.msra.mxu0 %v1021
    %2335 = vmatprep.subr.bf16.mxu0 %v1014
    %2336 = vmatpush2.bf16.msra.mxu0 %v1013
    %2337 = vmatprep.subr.bf16.mxu0 %v1006
    %2338 = vmatpush2.bf16.msra.mxu0 %v1005
    %2339 = vmatprep.subr.bf16.mxu0 %v998
    %2340 = vmatpush2.bf16.msra.mxu0 %v997
    %2341 = vmatprep.subr.bf16.mxu0 %v990
    %2342 = vmatpush2.bf16.msra.mxu0 %v989
    %2343 = vmatprep.mubr.bf16.mxu0 %v2277
    %2344 = vmatmul.mubr.bf16.gmra.mxu0 %v2310
    %v2345 = vpop.f32.mrf.mxu0
    %v2346 = vadd.f32 0.0, %v2345
    %v2347 = vpop.f32.mrf.mxu0
    %v2348 = vadd.f32 0.0, %v2347
    %v2349 = vpop.f32.mrf.mxu0
    %v2350 = vpop.f32.mrf.mxu0
    %2351 = vdwg.mxu0
    %2352 = vmatprep.subr.bf16.mxu0 %v984
    %2353 = vmatpush1.bf16.msra.mxu0 %v983
    %2354 = vmatprep.subr.bf16.mxu0 %v976
    %2355 = vmatpush1.bf16.msra.mxu0 %v975
    %2356 = vmatprep.subr.bf16.mxu0 %v968
    %2357 = vmatpush1.bf16.msra.mxu0 %v967
    %2358 = vmatprep.subr.bf16.mxu0 %v960
    %2359 = vmatpush1.bf16.msra.mxu0 %v959
    %2360 = vmatprep.subr.bf16.mxu0 %v952
    %2361 = vmatpush1.bf16.msra.mxu0 %v951
    %2362 = vmatprep.subr.bf16.mxu0 %v944
    %2363 = vmatpush1.bf16.msra.mxu0 %v943
    %2364 = vmatprep.subr.bf16.mxu0 %v936
    %2365 = vmatpush1.bf16.msra.mxu0 %v935
    %2366 = vmatprep.subr.bf16.mxu0 %v928
    %2367 = vmatpush1.bf16.msra.mxu0 %v927
    %2368 = vmatprep.subr.bf16.mxu0 %v1048
    %2369 = vmatpush2.bf16.msra.mxu0 %v1047
    %2370 = vmatprep.subr.bf16.mxu0 %v1040
    %2371 = vmatpush2.bf16.msra.mxu0 %v1039
    %2372 = vmatprep.subr.bf16.mxu0 %v1032
    %2373 = vmatpush2.bf16.msra.mxu0 %v1031
    %2374 = vmatprep.subr.bf16.mxu0 %v1024
    %2375 = vmatpush2.bf16.msra.mxu0 %v1023
    %2376 = vmatprep.subr.bf16.mxu0 %v1016
    %2377 = vmatpush2.bf16.msra.mxu0 %v1015
    %2378 = vmatprep.subr.bf16.mxu0 %v1008
    %2379 = vmatpush2.bf16.msra.mxu0 %v1007
    %2380 = vmatprep.subr.bf16.mxu0 %v1000
    %2381 = vmatpush2.bf16.msra.mxu0 %v999
    %2382 = vmatprep.subr.bf16.mxu0 %v992
    %2383 = vmatpush2.bf16.msra.mxu0 %v991
    %2384 = vmatprep.mubr.bf16.mxu0 %v2277
    %2385 = vmatmul.mubr.bf16.gmra.mxu0 %v2310
    %v2386 = vpop.f32.mrf.mxu0
    %v2387 = vadd.f32 0.0, %v2386
    %v2388 = vpop.f32.mrf.mxu0
    %v2389 = vadd.f32 0.0, %v2388
    %v2390 = vpop.f32.mrf.mxu0
    %v2391 = vpop.f32.mrf.mxu0
    %2392 = vdwg.mxu0
    %2393 = vmatprep.subr.bf16.mxu0 %v986
    %2394 = vmatpush1.bf16.msra.mxu0 %v985
    %2395 = vmatprep.subr.bf16.mxu0 %v978
    %2396 = vmatpush1.bf16.msra.mxu0 %v977
    %2397 = vmatprep.subr.bf16.mxu0 %v970
    %2398 = vmatpush1.bf16.msra.mxu0 %v969
    %2399 = vmatprep.subr.bf16.mxu0 %v962
    %2400 = vmatpush1.bf16.msra.mxu0 %v961
    %2401 = vmatprep.subr.bf16.mxu0 %v954
    %2402 = vmatpush1.bf16.msra.mxu0 %v953
    %2403 = vmatprep.subr.bf16.mxu0 %v946
    %2404 = vmatpush1.bf16.msra.mxu0 %v945
    %2405 = vmatprep.subr.bf16.mxu0 %v938
    %2406 = vmatpush1.bf16.msra.mxu0 %v937
    %2407 = vmatprep.subr.bf16.mxu0 %v930
    %2408 = vmatpush1.bf16.msra.mxu0 %v929
    %2409 = vmatprep.subr.bf16.mxu0 %v1050
    %2410 = vmatpush2.bf16.msra.mxu0 %v1049
    %2411 = vmatprep.subr.bf16.mxu0 %v1042
    %2412 = vmatpush2.bf16.msra.mxu0 %v1041
    %2413 = vmatprep.subr.bf16.mxu0 %v1034
    %2414 = vmatpush2.bf16.msra.mxu0 %v1033
    %2415 = vmatprep.subr.bf16.mxu0 %v1026
    %2416 = vmatpush2.bf16.msra.mxu0 %v1025
    %2417 = vmatprep.subr.bf16.mxu0 %v1018
    %2418 = vmatpush2.bf16.msra.mxu0 %v1017
    %2419 = vmatprep.subr.bf16.mxu0 %v1010
    %2420 = vmatpush2.bf16.msra.mxu0 %v1009
    %2421 = vmatprep.subr.bf16.mxu0 %v1002
    %2422 = vmatpush2.bf16.msra.mxu0 %v1001
    %2423 = vmatprep.subr.bf16.mxu0 %v994
    %2424 = vmatpush2.bf16.msra.mxu0 %v993
    %2425 = vmatprep.mubr.bf16.mxu0 %v2277
    %2426 = vmatmul.mubr.bf16.gmra.mxu0 %v2310
    %v2427 = vpop.f32.mrf.mxu0
    %v2428 = vadd.f32 0.0, %v2427
    %v2429 = vpop.f32.mrf.mxu0
    %v2430 = vadd.f32 0.0, %v2429
    %v2431 = vpop.f32.mrf.mxu0
    %v2432 = vpop.f32.mrf.mxu0
    %2433 = vdwg.mxu0
    %2434 = vmatprep.subr.bf16.mxu0 %v988
    %2435 = vmatpush1.bf16.msra.mxu0 %v987
    %2436 = vmatprep.subr.bf16.mxu0 %v980
    %2437 = vmatpush1.bf16.msra.mxu0 %v979
    %2438 = vmatprep.subr.bf16.mxu0 %v972
    %2439 = vmatpush1.bf16.msra.mxu0 %v971
    %2440 = vmatprep.subr.bf16.mxu0 %v964
    %2441 = vmatpush1.bf16.msra.mxu0 %v963
    %2442 = vmatprep.subr.bf16.mxu0 %v956
    %2443 = vmatpush1.bf16.msra.mxu0 %v955
    %2444 = vmatprep.subr.bf16.mxu0 %v948
    %2445 = vmatpush1.bf16.msra.mxu0 %v947
    %2446 = vmatprep.subr.bf16.mxu0 %v940
    %2447 = vmatpush1.bf16.msra.mxu0 %v939
    %2448 = vmatprep.subr.bf16.mxu0 %v932
    %2449 = vmatpush1.bf16.msra.mxu0 %v931
    %2450 = vmatprep.subr.bf16.mxu0 %v1052
    %2451 = vmatpush2.bf16.msra.mxu0 %v1051
    %2452 = vmatprep.subr.bf16.mxu0 %v1044
    %2453 = vmatpush2.bf16.msra.mxu0 %v1043
    %2454 = vmatprep.subr.bf16.mxu0 %v1036
    %2455 = vmatpush2.bf16.msra.mxu0 %v1035
    %2456 = vmatprep.subr.bf16.mxu0 %v1028
    %2457 = vmatpush2.bf16.msra.mxu0 %v1027
    %2458 = vmatprep.subr.bf16.mxu0 %v1020
    %2459 = vmatpush2.bf16.msra.mxu0 %v1019
    %2460 = vmatprep.subr.bf16.mxu0 %v1012
    %2461 = vmatpush2.bf16.msra.mxu0 %v1011
    %2462 = vmatprep.subr.bf16.mxu0 %v1004
    %2463 = vmatpush2.bf16.msra.mxu0 %v1003
    %2464 = vmatprep.subr.bf16.mxu0 %v996
    %2465 = vmatpush2.bf16.msra.mxu0 %v995
    %2466 = vmatprep.mubr.bf16.mxu0 %v2277
    %2467 = vmatmul.mubr.bf16.gmra.mxu0 %v2310
    %v2468 = vpop.f32.mrf.mxu0
    %v2469 = vadd.f32 0.0, %v2468
    %v2470 = vpop.f32.mrf.mxu0
    %v2471 = vadd.f32 0.0, %v2470
    %v2472 = vpop.f32.mrf.mxu0
    %v2473 = vpop.f32.mrf.mxu0
    %2474 = vdwg.mxu0
    %v2475 = vadd.f32 %v2428, %v497
    %v2476 = vadd.f32 %v2430, %v501
    %v2477 = vadd.f32 %v2469, %v505
    %v2478 = vadd.f32 %v2471, %v509
    %v2479 = vxor.u32 %v2475, 2147483648
    %v2480 = vmul.f32 %v2479, 1.442695
    %v2481 = vpow.pop %v2480
    %v2482 = vadd.f32 %v2481, 1.0
    %v2483 = vrcp.pop %v2482
    %v2484 = vmul.f32 1.0, %v2483
    %v2485 = vxor.u32 %v2476, 2147483648
    %v2486 = vmul.f32 %v2485, 1.442695
    %v2487 = vpow.pop %v2486
    %v2488 = vadd.f32 %v2487, 1.0
    %v2489 = vrcp.pop %v2488
    %v2490 = vmul.f32 1.0, %v2489
    %v2491 = vtanh.pop %v2477
    %v2492 = vxor.u32 %v2478, 2147483648
    %v2493 = vmul.f32 %v2492, 1.442695
    %v2494 = vpow.pop %v2493
    %v2495 = vadd.f32 %v2494, 1.0
    %v2496 = vrcp.pop %v2495
    %v2497 = vmul.f32 1.0, %v2496
    %v2498 = vmul.f32 %v2490, %v2274
    %v2499 = vmul.f32 %v2484, %v2491
    %v2500 = vadd.f32 %v2498, %v2499
    %v2501 = vtanh.pop %v2500
    %v2502 = vmul.f32 %v2497, %v2501
    %v2503 = vpack.c.bf16 %v2502, %v2502
    %v2504 = vld [vmem:[#allocation2 + $0xc0] sm:$0xff]
    %v2505 = vld [vmem:[#allocation2 + $0xc8] sm:$0xff]
    %v2506 = vld [vmem:[#allocation2 + $0xd0] sm:$0xff]
    %v2507 = vld [vmem:[#allocation2 + $0xd8] sm:$0xff]
    %v2508 = vadd.f32 %v2504, %v2346
    %v2509 = vadd.f32 %v2505, %v2348
    %v2510 = vadd.f32 %v2506, %v2387
    %v2511 = vadd.f32 %v2507, %v2389
    %v2512 = vxor.u32 %v2508, 2147483648
    %v2513 = vmul.f32 %v2512, 1.442695
    %v2514 = vpow.pop %v2513
    %v2515 = vadd.f32 %v2514, 1.0
    %v2516 = vrcp.pop %v2515
    %v2517 = vmul.f32 1.0, %v2516
    %v2518 = vxor.u32 %v2509, 2147483648
    %v2519 = vmul.f32 %v2518, 1.442695
    %v2520 = vpow.pop %v2519
    %v2521 = vadd.f32 %v2520, 1.0
    %v2522 = vrcp.pop %v2521
    %v2523 = vmul.f32 1.0, %v2522
    %v2524 = vtanh.pop %v2510
    %v2525 = vxor.u32 %v2511, 2147483648
    %v2526 = vmul.f32 %v2525, 1.442695
    %v2527 = vpow.pop %v2526
    %v2528 = vadd.f32 %v2527, 1.0
    %v2529 = vrcp.pop %v2528
    %v2530 = vmul.f32 1.0, %v2529
    %v2531 = vmul.f32 %v2523, %v2307
    %v2532 = vmul.f32 %v2517, %v2524
    %v2533 = vadd.f32 %v2531, %v2532
    %v2534 = vtanh.pop %v2533
    %v2535 = vmul.f32 %v2530, %v2534
    %v2536 = vpack.c.bf16 %v2535, %v2535
    %2537 = vmatprep.subr.bf16.mxu0 %v982
    %2538 = vmatpush1.bf16.msra.mxu0 %v981
    %2539 = vmatprep.subr.bf16.mxu0 %v974
    %2540 = vmatpush1.bf16.msra.mxu0 %v973
    %2541 = vmatprep.subr.bf16.mxu0 %v966
    %2542 = vmatpush1.bf16.msra.mxu0 %v965
    %2543 = vmatprep.subr.bf16.mxu0 %v958
    %2544 = vmatpush1.bf16.msra.mxu0 %v957
    %2545 = vmatprep.subr.bf16.mxu0 %v950
    %2546 = vmatpush1.bf16.msra.mxu0 %v949
    %2547 = vmatprep.subr.bf16.mxu0 %v942
    %2548 = vmatpush1.bf16.msra.mxu0 %v941
    %2549 = vmatprep.subr.bf16.mxu0 %v934
    %2550 = vmatpush1.bf16.msra.mxu0 %v933
    %2551 = vmatprep.subr.bf16.mxu0 %v926
    %2552 = vmatpush1.bf16.msra.mxu0 %v925
    %2553 = vmatprep.subr.bf16.mxu0 %v1046
    %2554 = vmatpush2.bf16.msra.mxu0 %v1045
    %2555 = vmatprep.subr.bf16.mxu0 %v1038
    %2556 = vmatpush2.bf16.msra.mxu0 %v1037
    %2557 = vmatprep.subr.bf16.mxu0 %v1030
    %2558 = vmatpush2.bf16.msra.mxu0 %v1029
    %2559 = vmatprep.subr.bf16.mxu0 %v1022
    %2560 = vmatpush2.bf16.msra.mxu0 %v1021
    %2561 = vmatprep.subr.bf16.mxu0 %v1014
    %2562 = vmatpush2.bf16.msra.mxu0 %v1013
    %2563 = vmatprep.subr.bf16.mxu0 %v1006
    %2564 = vmatpush2.bf16.msra.mxu0 %v1005
    %2565 = vmatprep.subr.bf16.mxu0 %v998
    %2566 = vmatpush2.bf16.msra.mxu0 %v997
    %2567 = vmatprep.subr.bf16.mxu0 %v990
    %2568 = vmatpush2.bf16.msra.mxu0 %v989
    %2569 = vmatprep.mubr.bf16.mxu0 %v2503
    %2570 = vmatmul.mubr.bf16.gmra.mxu0 %v2536
    %v2571 = vpop.f32.mrf.mxu0
    %v2572 = vadd.f32 0.0, %v2571
    %v2573 = vpop.f32.mrf.mxu0
    %v2574 = vadd.f32 0.0, %v2573
    %v2575 = vpop.f32.mrf.mxu0
    %v2576 = vpop.f32.mrf.mxu0
    %2577 = vdwg.mxu0
    %2578 = vmatprep.subr.bf16.mxu0 %v984
    %2579 = vmatpush1.bf16.msra.mxu0 %v983
    %2580 = vmatprep.subr.bf16.mxu0 %v976
    %2581 = vmatpush1.bf16.msra.mxu0 %v975
    %2582 = vmatprep.subr.bf16.mxu0 %v968
    %2583 = vmatpush1.bf16.msra.mxu0 %v967
    %2584 = vmatprep.subr.bf16.mxu0 %v960
    %2585 = vmatpush1.bf16.msra.mxu0 %v959
    %2586 = vmatprep.subr.bf16.mxu0 %v952
    %2587 = vmatpush1.bf16.msra.mxu0 %v951
    %2588 = vmatprep.subr.bf16.mxu0 %v944
    %2589 = vmatpush1.bf16.msra.mxu0 %v943
    %2590 = vmatprep.subr.bf16.mxu0 %v936
    %2591 = vmatpush1.bf16.msra.mxu0 %v935
    %2592 = vmatprep.subr.bf16.mxu0 %v928
    %2593 = vmatpush1.bf16.msra.mxu0 %v927
    %2594 = vmatprep.subr.bf16.mxu0 %v1048
    %2595 = vmatpush2.bf16.msra.mxu0 %v1047
    %2596 = vmatprep.subr.bf16.mxu0 %v1040
    %2597 = vmatpush2.bf16.msra.mxu0 %v1039
    %2598 = vmatprep.subr.bf16.mxu0 %v1032
    %2599 = vmatpush2.bf16.msra.mxu0 %v1031
    %2600 = vmatprep.subr.bf16.mxu0 %v1024
    %2601 = vmatpush2.bf16.msra.mxu0 %v1023
    %2602 = vmatprep.subr.bf16.mxu0 %v1016
    %2603 = vmatpush2.bf16.msra.mxu0 %v1015
    %2604 = vmatprep.subr.bf16.mxu0 %v1008
    %2605 = vmatpush2.bf16.msra.mxu0 %v1007
    %2606 = vmatprep.subr.bf16.mxu0 %v1000
    %2607 = vmatpush2.bf16.msra.mxu0 %v999
    %2608 = vmatprep.subr.bf16.mxu0 %v992
    %2609 = vmatpush2.bf16.msra.mxu0 %v991
    %2610 = vmatprep.mubr.bf16.mxu0 %v2503
    %2611 = vmatmul.mubr.bf16.gmra.mxu0 %v2536
    %v2612 = vpop.f32.mrf.mxu0
    %v2613 = vadd.f32 0.0, %v2612
    %v2614 = vpop.f32.mrf.mxu0
    %v2615 = vadd.f32 0.0, %v2614
    %v2616 = vpop.f32.mrf.mxu0
    %v2617 = vpop.f32.mrf.mxu0
    %2618 = vdwg.mxu0
    %2619 = vmatprep.subr.bf16.mxu0 %v986
    %2620 = vmatpush1.bf16.msra.mxu0 %v985
    %2621 = vmatprep.subr.bf16.mxu0 %v978
    %2622 = vmatpush1.bf16.msra.mxu0 %v977
    %2623 = vmatprep.subr.bf16.mxu0 %v970
    %2624 = vmatpush1.bf16.msra.mxu0 %v969
    %2625 = vmatprep.subr.bf16.mxu0 %v962
    %2626 = vmatpush1.bf16.msra.mxu0 %v961
    %2627 = vmatprep.subr.bf16.mxu0 %v954
    %2628 = vmatpush1.bf16.msra.mxu0 %v953
    %2629 = vmatprep.subr.bf16.mxu0 %v946
    %2630 = vmatpush1.bf16.msra.mxu0 %v945
    %2631 = vmatprep.subr.bf16.mxu0 %v938
    %2632 = vmatpush1.bf16.msra.mxu0 %v937
    %2633 = vmatprep.subr.bf16.mxu0 %v930
    %2634 = vmatpush1.bf16.msra.mxu0 %v929
    %2635 = vmatprep.subr.bf16.mxu0 %v1050
    %2636 = vmatpush2.bf16.msra.mxu0 %v1049
    %2637 = vmatprep.subr.bf16.mxu0 %v1042
    %2638 = vmatpush2.bf16.msra.mxu0 %v1041
    %2639 = vmatprep.subr.bf16.mxu0 %v1034
    %2640 = vmatpush2.bf16.msra.mxu0 %v1033
    %2641 = vmatprep.subr.bf16.mxu0 %v1026
    %2642 = vmatpush2.bf16.msra.mxu0 %v1025
    %2643 = vmatprep.subr.bf16.mxu0 %v1018
    %2644 = vmatpush2.bf16.msra.mxu0 %v1017
    %2645 = vmatprep.subr.bf16.mxu0 %v1010
    %2646 = vmatpush2.bf16.msra.mxu0 %v1009
    %2647 = vmatprep.subr.bf16.mxu0 %v1002
    %2648 = vmatpush2.bf16.msra.mxu0 %v1001
    %2649 = vmatprep.subr.bf16.mxu0 %v994
    %2650 = vmatpush2.bf16.msra.mxu0 %v993
    %2651 = vmatprep.mubr.bf16.mxu0 %v2503
    %2652 = vmatmul.mubr.bf16.gmra.mxu0 %v2536
    %v2653 = vpop.f32.mrf.mxu0
    %v2654 = vadd.f32 0.0, %v2653
    %v2655 = vpop.f32.mrf.mxu0
    %v2656 = vadd.f32 0.0, %v2655
    %v2657 = vpop.f32.mrf.mxu0
    %v2658 = vpop.f32.mrf.mxu0
    %2659 = vdwg.mxu0
    %2660 = vmatprep.subr.bf16.mxu0 %v988
    %2661 = vmatpush1.bf16.msra.mxu0 %v987
    %2662 = vmatprep.subr.bf16.mxu0 %v980
    %2663 = vmatpush1.bf16.msra.mxu0 %v979
    %2664 = vmatprep.subr.bf16.mxu0 %v972
    %2665 = vmatpush1.bf16.msra.mxu0 %v971
    %2666 = vmatprep.subr.bf16.mxu0 %v964
    %2667 = vmatpush1.bf16.msra.mxu0 %v963
    %2668 = vmatprep.subr.bf16.mxu0 %v956
    %2669 = vmatpush1.bf16.msra.mxu0 %v955
    %2670 = vmatprep.subr.bf16.mxu0 %v948
    %2671 = vmatpush1.bf16.msra.mxu0 %v947
    %2672 = vmatprep.subr.bf16.mxu0 %v940
    %2673 = vmatpush1.bf16.msra.mxu0 %v939
    %2674 = vmatprep.subr.bf16.mxu0 %v932
    %2675 = vmatpush1.bf16.msra.mxu0 %v931
    %2676 = vmatprep.subr.bf16.mxu0 %v1052
    %2677 = vmatpush2.bf16.msra.mxu0 %v1051
    %2678 = vmatprep.subr.bf16.mxu0 %v1044
    %2679 = vmatpush2.bf16.msra.mxu0 %v1043
    %2680 = vmatprep.subr.bf16.mxu0 %v1036
    %2681 = vmatpush2.bf16.msra.mxu0 %v1035
    %2682 = vmatprep.subr.bf16.mxu0 %v1028
    %2683 = vmatpush2.bf16.msra.mxu0 %v1027
    %2684 = vmatprep.subr.bf16.mxu0 %v1020
    %2685 = vmatpush2.bf16.msra.mxu0 %v1019
    %2686 = vmatprep.subr.bf16.mxu0 %v1012
    %2687 = vmatpush2.bf16.msra.mxu0 %v1011
    %2688 = vmatprep.subr.bf16.mxu0 %v1004
    %2689 = vmatpush2.bf16.msra.mxu0 %v1003
    %2690 = vmatprep.subr.bf16.mxu0 %v996
    %2691 = vmatpush2.bf16.msra.mxu0 %v995
    %2692 = vmatprep.mubr.bf16.mxu0 %v2503
    %2693 = vmatmul.mubr.bf16.gmra.mxu0 %v2536
    %v2694 = vpop.f32.mrf.mxu0
    %v2695 = vadd.f32 0.0, %v2694
    %v2696 = vpop.f32.mrf.mxu0
    %v2697 = vadd.f32 0.0, %v2696
    %v2698 = vpop.f32.mrf.mxu0
    %v2699 = vpop.f32.mrf.mxu0
    %2700 = vdwg.mxu0
    %v2701 = vadd.f32 %v2654, %v497
    %v2702 = vadd.f32 %v2656, %v501
    %v2703 = vadd.f32 %v2695, %v505
    %v2704 = vadd.f32 %v2697, %v509
    %v2705 = vxor.u32 %v2701, 2147483648
    %v2706 = vmul.f32 %v2705, 1.442695
    %v2707 = vpow.pop %v2706
    %v2708 = vadd.f32 %v2707, 1.0
    %v2709 = vrcp.pop %v2708
    %v2710 = vmul.f32 1.0, %v2709
    %v2711 = vxor.u32 %v2702, 2147483648
    %v2712 = vmul.f32 %v2711, 1.442695
    %v2713 = vpow.pop %v2712
    %v2714 = vadd.f32 %v2713, 1.0
    %v2715 = vrcp.pop %v2714
    %v2716 = vmul.f32 1.0, %v2715
    %v2717 = vtanh.pop %v2703
    %v2718 = vxor.u32 %v2704, 2147483648
    %v2719 = vmul.f32 %v2718, 1.442695
    %v2720 = vpow.pop %v2719
    %v2721 = vadd.f32 %v2720, 1.0
    %v2722 = vrcp.pop %v2721
    %v2723 = vmul.f32 1.0, %v2722
    %v2724 = vmul.f32 %v2716, %v2500
    %v2725 = vmul.f32 %v2710, %v2717
    %v2726 = vadd.f32 %v2724, %v2725
    %v2727 = vtanh.pop %v2726
    %v2728 = vmul.f32 %v2723, %v2727
    %v2729 = vpack.c.bf16 %v2728, %v2728
    %v2730 = vld [vmem:[#allocation2 + $0xe0] sm:$0xff]
    %v2731 = vld [vmem:[#allocation2 + $0xe8] sm:$0xff]
    %v2732 = vld [vmem:[#allocation2 + $0xf0] sm:$0xff]
    %v2733 = vld [vmem:[#allocation2 + $0xf8] sm:$0xff]
    %v2734 = vadd.f32 %v2730, %v2572
    %v2735 = vadd.f32 %v2731, %v2574
    %v2736 = vadd.f32 %v2732, %v2613
    %v2737 = vadd.f32 %v2733, %v2615
    %v2738 = vxor.u32 %v2734, 2147483648
    %v2739 = vmul.f32 %v2738, 1.442695
    %v2740 = vpow.pop %v2739
    %v2741 = vadd.f32 %v2740, 1.0
    %v2742 = vrcp.pop %v2741
    %v2743 = vmul.f32 1.0, %v2742
    %v2744 = vxor.u32 %v2735, 2147483648
    %v2745 = vmul.f32 %v2744, 1.442695
    %v2746 = vpow.pop %v2745
    %v2747 = vadd.f32 %v2746, 1.0
    %v2748 = vrcp.pop %v2747
    %v2749 = vmul.f32 1.0, %v2748
    %v2750 = vtanh.pop %v2736
    %v2751 = vxor.u32 %v2737, 2147483648
    %v2752 = vmul.f32 %v2751, 1.442695
    %v2753 = vpow.pop %v2752
    %v2754 = vadd.f32 %v2753, 1.0
    %v2755 = vrcp.pop %v2754
    %v2756 = vmul.f32 1.0, %v2755
    %v2757 = vmul.f32 %v2749, %v2533
    %v2758 = vmul.f32 %v2743, %v2750
    %v2759 = vadd.f32 %v2757, %v2758
    %v2760 = vtanh.pop %v2759
    %v2761 = vmul.f32 %v2756, %v2760
    %v2762 = vpack.c.bf16 %v2761, %v2761
    %2763 = vmatprep.subr.bf16.mxu0 %v986
    %2764 = vmatpush1.bf16.msra.mxu0 %v985
    %2765 = vmatprep.subr.bf16.mxu0 %v978
    %2766 = vmatpush1.bf16.msra.mxu0 %v977
    %2767 = vmatprep.subr.bf16.mxu0 %v970
    %2768 = vmatpush1.bf16.msra.mxu0 %v969
    %2769 = vmatprep.subr.bf16.mxu0 %v962
    %2770 = vmatpush1.bf16.msra.mxu0 %v961
    %2771 = vmatprep.subr.bf16.mxu0 %v954
    %2772 = vmatpush1.bf16.msra.mxu0 %v953
    %2773 = vmatprep.subr.bf16.mxu0 %v946
    %2774 = vmatpush1.bf16.msra.mxu0 %v945
    %2775 = vmatprep.subr.bf16.mxu0 %v938
    %2776 = vmatpush1.bf16.msra.mxu0 %v937
    %2777 = vmatprep.subr.bf16.mxu0 %v930
    %2778 = vmatpush1.bf16.msra.mxu0 %v929
    %2779 = vmatprep.subr.bf16.mxu0 %v1050
    %2780 = vmatpush2.bf16.msra.mxu0 %v1049
    %2781 = vmatprep.subr.bf16.mxu0 %v1042
    %2782 = vmatpush2.bf16.msra.mxu0 %v1041
    %2783 = vmatprep.subr.bf16.mxu0 %v1034
    %2784 = vmatpush2.bf16.msra.mxu0 %v1033
    %2785 = vmatprep.subr.bf16.mxu0 %v1026
    %2786 = vmatpush2.bf16.msra.mxu0 %v1025
    %2787 = vmatprep.subr.bf16.mxu0 %v1018
    %2788 = vmatpush2.bf16.msra.mxu0 %v1017
    %2789 = vmatprep.subr.bf16.mxu0 %v1010
    %2790 = vmatpush2.bf16.msra.mxu0 %v1009
    %2791 = vmatprep.subr.bf16.mxu0 %v1002
    %2792 = vmatpush2.bf16.msra.mxu0 %v1001
    %2793 = vmatprep.subr.bf16.mxu0 %v994
    %2794 = vmatpush2.bf16.msra.mxu0 %v993
    %2795 = vmatprep.mubr.bf16.mxu0 %v2729
    %2796 = vmatmul.mubr.bf16.gmra.mxu0 %v2762
    %v2797 = vpop.f32.mrf.mxu0
    %v2798 = vadd.f32 0.0, %v2797
    %v2799 = vpop.f32.mrf.mxu0
    %v2800 = vadd.f32 0.0, %v2799
    %v2801 = vpop.f32.mrf.mxu0
    %v2802 = vpop.f32.mrf.mxu0
    %2803 = vdwg.mxu0
    %2804 = vmatprep.subr.bf16.mxu0 %v988
    %2805 = vmatpush1.bf16.msra.mxu0 %v987
    %2806 = vmatprep.subr.bf16.mxu0 %v980
    %2807 = vmatpush1.bf16.msra.mxu0 %v979
    %2808 = vmatprep.subr.bf16.mxu0 %v972
    %2809 = vmatpush1.bf16.msra.mxu0 %v971
    %2810 = vmatprep.subr.bf16.mxu0 %v964
    %2811 = vmatpush1.bf16.msra.mxu0 %v963
    %2812 = vmatprep.subr.bf16.mxu0 %v956
    %2813 = vmatpush1.bf16.msra.mxu0 %v955
    %2814 = vmatprep.subr.bf16.mxu0 %v948
    %2815 = vmatpush1.bf16.msra.mxu0 %v947
    %2816 = vmatprep.subr.bf16.mxu0 %v940
    %2817 = vmatpush1.bf16.msra.mxu0 %v939
    %2818 = vmatprep.subr.bf16.mxu0 %v932
    %2819 = vmatpush1.bf16.msra.mxu0 %v931
    %2820 = vmatprep.subr.bf16.mxu0 %v1052
    %2821 = vmatpush2.bf16.msra.mxu0 %v1051
    %2822 = vmatprep.subr.bf16.mxu0 %v1044
    %2823 = vmatpush2.bf16.msra.mxu0 %v1043
    %2824 = vmatprep.subr.bf16.mxu0 %v1036
    %2825 = vmatpush2.bf16.msra.mxu0 %v1035
    %2826 = vmatprep.subr.bf16.mxu0 %v1028
    %2827 = vmatpush2.bf16.msra.mxu0 %v1027
    %2828 = vmatprep.subr.bf16.mxu0 %v1020
    %2829 = vmatpush2.bf16.msra.mxu0 %v1019
    %2830 = vmatprep.subr.bf16.mxu0 %v1012
    %2831 = vmatpush2.bf16.msra.mxu0 %v1011
    %2832 = vmatprep.subr.bf16.mxu0 %v1004
    %2833 = vmatpush2.bf16.msra.mxu0 %v1003
    %2834 = vmatprep.subr.bf16.mxu0 %v996
    %2835 = vmatpush2.bf16.msra.mxu0 %v995
    %2836 = vmatprep.mubr.bf16.mxu0 %v2729
    %2837 = vmatmul.mubr.bf16.gmra.mxu0 %v2762
    %v2838 = vpop.f32.mrf.mxu0
    %v2839 = vadd.f32 0.0, %v2838
    %v2840 = vpop.f32.mrf.mxu0
    %v2841 = vadd.f32 0.0, %v2840
    %v2842 = vpop.f32.mrf.mxu0
    %v2843 = vpop.f32.mrf.mxu0
    %2844 = vdwg.mxu0
    %v2845 = vadd.f32 %v2798, %v497
    %v2846 = vadd.f32 %v2800, %v501
    %v2847 = vadd.f32 %v2839, %v505
    %v2848 = vadd.f32 %v2841, %v509
    %v2849 = vxor.u32 %v2845, 2147483648
    %v2850 = vmul.f32 %v2849, 1.442695
    %v2851 = vpow.pop %v2850
    %v2852 = vadd.f32 %v2851, 1.0
    %v2853 = vrcp.pop %v2852
    %v2854 = vmul.f32 1.0, %v2853
    %v2855 = vxor.u32 %v2846, 2147483648
    %v2856 = vmul.f32 %v2855, 1.442695
    %v2857 = vpow.pop %v2856
    %v2858 = vadd.f32 %v2857, 1.0
    %v2859 = vrcp.pop %v2858
    %v2860 = vmul.f32 1.0, %v2859
    %v2861 = vtanh.pop %v2847
    %v2862 = vxor.u32 %v2848, 2147483648
    %v2863 = vmul.f32 %v2862, 1.442695
    %v2864 = vpow.pop %v2863
    %v2865 = vadd.f32 %v2864, 1.0
    %v2866 = vrcp.pop %v2865
    %v2867 = vmul.f32 1.0, %v2866
    %v2868 = vmul.f32 %v2860, %v2726
    %v2869 = vmul.f32 %v2854, %v2861
    %v2870 = vadd.f32 %v2868, %v2869
    %v2871 = vtanh.pop %v2870
    %v2872 = vmul.f32 %v2867, %v2871
    %v2873 = vpack.c.bf16 %v2872, %v2872
    %v2890 = vunpack.c.l.b16 %v476
    %v2891 = vunpack.c.l.b16 %v477
    %v2892 = vunpack.c.l.b16 %v478
    %v2893 = vunpack.c.l.b16 %v479
    %v2894 = vunpack.c.l.b16 %v480
    %v2895 = vunpack.c.l.b16 %v481
    %v2896 = vunpack.c.l.b16 %v482
    %v2897 = vunpack.c.l.b16 %v483
    %v2898 = vunpack.c.l.b16 %v484
    %v2899 = vunpack.c.l.b16 %v485
    %v2900 = vunpack.c.l.b16 %v486
    %v2901 = vunpack.c.l.b16 %v487
    %v2902 = vunpack.c.l.b16 %v488
    %v2903 = vunpack.c.l.b16 %v489
    %v2904 = vunpack.c.l.b16 %v490
    %v2905 = vunpack.c.l.b16 %v491
    %v2906 = vpack.c.b16 %v2891, %v2890
    %v2907 = vpack.c.b16 %v2893, %v2892
    %v2908 = vpack.c.b16 %v2895, %v2894
    %v2909 = vpack.c.b16 %v2897, %v2896
    %v2910 = vpack.c.b16 %v2899, %v2898
    %v2911 = vpack.c.b16 %v2901, %v2900
    %v2912 = vpack.c.b16 %v2903, %v2902
    %v2913 = vpack.c.b16 %v2905, %v2904
    %2922 = vmatprep.subr.bf16.mxu0 0
    %2923 = vmatpush1.bf16.msra.mxu0 %v2913
    %2924 = vmatprep.subr.bf16.mxu0 0
    %2925 = vmatpush1.bf16.msra.mxu0 %v2912
    %2926 = vmatprep.subr.bf16.mxu0 0
    %2927 = vmatpush1.bf16.msra.mxu0 %v2911
    %2928 = vmatprep.subr.bf16.mxu0 0
    %2929 = vmatpush1.bf16.msra.mxu0 %v2910
    %2930 = vmatprep.subr.bf16.mxu0 0
    %2931 = vmatpush1.bf16.msra.mxu0 %v2909
    %2932 = vmatprep.subr.bf16.mxu0 0
    %2933 = vmatpush1.bf16.msra.mxu0 %v2908
    %2934 = vmatprep.subr.bf16.mxu0 0
    %2935 = vmatpush1.bf16.msra.mxu0 %v2907
    %2936 = vmatprep.subr.bf16.mxu0 0
    %2937 = vmatpush1.bf16.msra.mxu0 %v2906
    %2938 = vmatprep.subr.bf16.mxu0 0
    %2939 = vmatpush2.bf16.msra.mxu0 0
    %2940 = vmatprep.subr.bf16.mxu0 0
    %2941 = vmatpush2.bf16.msra.mxu0 0
    %2942 = vmatprep.subr.bf16.mxu0 0
    %2943 = vmatpush2.bf16.msra.mxu0 0
    %2944 = vmatprep.subr.bf16.mxu0 0
    %2945 = vmatpush2.bf16.msra.mxu0 0
    %2946 = vmatprep.subr.bf16.mxu0 0
    %2947 = vmatpush2.bf16.msra.mxu0 0
    %2948 = vmatprep.subr.bf16.mxu0 0
    %2949 = vmatpush2.bf16.msra.mxu0 0
    %2950 = vmatprep.subr.bf16.mxu0 0
    %2951 = vmatpush2.bf16.msra.mxu0 0
    %2952 = vmatprep.subr.bf16.mxu0 0
    %2953 = vmatpush2.bf16.msra.mxu0 0
    %2954 = vmatprep.mubr.bf16.mxu0 0
    %2955 = vmatmul.mubr.bf16.gmra.mxu0 %v2873
    %v2956 = vpop.f32.mrf.mxu0
    %v2957 = vadd.f32 %v519, %v2956
    %v2958 = vpop.f32.mrf.mxu0
    %v2959 = vpop.f32.mrf.mxu0
    %v2960 = vpop.f32.mrf.mxu0
    %2961 = vdwg.mxu0
    %2962 = vst [vmem:[%s7] sm:$0xff] %v2957
    // Predicated region
    $region38: #{lstm_model_forward.1} parent=1 // pred_check
      _
    $region39: #{lstm_model_forward.1} parent=1 // pred_check_branch
      %2964 = sbr.rel (0) target = $region41
    $region40: #{lstm_model_forward.1} parent=1 // pred_region
      _
    $region41: #{lstm_model_forward.1} parent=1 // pred_fallthru
      _
    // Predicated region
    $region42: #{lstm_model_forward.1} parent=1 // pred_check
      _
    $region43: #{lstm_model_forward.1} parent=1 // pred_check_branch
      %2966 = sbr.rel (0) target = $region45
    $region44: #{lstm_model_forward.1} parent=1 // pred_region
      _
    $region45: #{lstm_model_forward.1} parent=1 // pred_fallthru
      _
    %2967 = vsyncpa [#allocation4], 1
    %2968 = vsyncpa [#allocation6], 1

</llo_original>
